<compile_context>
chip_gen: v5e
topology: v5e:2x2
jax: 0.10.0
libtpu: 0.0.40
codegen_flags: <defaults>
</compile_context>

<pallas_src>
import functools

import jax
import jax.numpy as jnp
from jax import lax
from jax.experimental import pallas as pl
from jax.experimental.pallas import tpu as pltpu


def _round_up(x, m):
    return (x + m - 1) // m * m


def _conv3x3_kernel(x_ref, w_ref, o_ref, xp_ref, p_ref, *, img_w, pad_l):
    """3x3 conv (pad=1, no bias) over TILE_F images of one batch element.

    x_ref : (num_im, TILE_F, HW)                 input block (channel-major)
    w_ref : (C_OUT, 9*num_im)                    packed weight (resident)
    o_ref : (TILE_F, C_OUT, HW)                  output block (final layout)
    xp_ref: (TILE_F, num_im, pad_l+HW+img_w+1)   image-major padded copy
    p_ref : (TILE_F, 9*num_im, HW)               im2col patches, K on sublanes
    """
    num_im, tile_f, hw = x_ref.shape
    halo = img_w + 1

    # 1) Zero only the halo strips the shifted taps actually read.
    #    (Not gated on program_id==0: with 'parallel' grid sharding a core may
    #    never execute step (0,0), and the zeroing is only ~2*(w+1) lanes.)
    z = jnp.zeros((tile_f, num_im, halo), xp_ref.dtype)
    xp_ref[:, :, pad_l - halo:pad_l] = z
    xp_ref[:, :, pad_l + hw:pad_l + hw + halo] = z

    # 2) Re-order the block image-major once.  The gathered reads x_ref[:,im,:]
    #    are the only remaining relayout (num_im*hw per image, on the cheap vld
    #    path); the centre stores are lane-aligned (pad_l % 128 == 0) and hit
    #    the scarce vst slot with clean, unmasked stores.
    for im in range(tile_f):
        xp_ref[im, :, pad_l:pad_l + hw] = x_ref[:, im, :]

    # 3) Build im2col patches with K = 9*num_im on the sublane axis, so each
    #    MXU operand below is the contiguous 2D tile p_ref[im] -- no gathers.
    #    A shift by dy*img_w + dx on the flattened pixel axis is exact except
    #    where x+dx leaves [0, img_w); y out-of-bounds taps land in the halo.
    col = lax.broadcasted_iota(jnp.int32, (1, 1, hw), 2) % img_w
    valid_left = col >= 1                 # tap reads (y, x-1)
    valid_right = col <= img_w - 2        # tap reads (y, x+1)
    for dy in (-1, 0, 1):
        for dx in (-1, 0, 1):
            t = (dy + 1) * 3 + (dx + 1)
            start = pad_l + dy * img_w + dx
            tap = xp_ref[:, :, start:start + hw]        # (tile_f, num_im, hw)
            if dx == -1:
                tap = jnp.where(valid_left, tap, 0.0)
            elif dx == 1:
                tap = jnp.where(valid_right, tap, 0.0)
            p_ref[:, t * num_im:(t + 1) * num_im, :] = tap

    # 4) One K = 9*num_im contraction per image, f32 accumulation on the MXU.
    #    Results are stored immediately so only one (C_OUT, HW) f32 result
    #    (16 vregs) is live at a time.  Output rows are (C_OUT, HW): HW in
    #    lanes -> unmasked, lane-dense stores.
    wk = w_ref[...]
    for im in range(tile_f):
        o_ref[im] = jnp.dot(wk, p_ref[im],
                            preferred_element_type=jnp.float32).astype(o_ref.dtype)


def _block_vmem_bytes(tile_f, num_im, hw, c_out, xp_lanes, itemsize):
    """VMEM footprint for one grid step: double-buffered in/out blocks,
    resident weight (x2 buffers) and both scratch buffers, with (8,128)
    layout padding."""
    in_blk = num_im * tile_f * hw * itemsize
    out_blk = tile_f * c_out * hw * itemsize
    xp = tile_f * _round_up(num_im, 8) * _round_up(xp_lanes, 128) * itemsize
    p = tile_f * _round_up(9 * num_im, 8) * _round_up(hw, 128) * itemsize
    wgt = c_out * _round_up(9 * num_im, 128) * itemsize
    return 2 * in_blk + 2 * out_blk + 2 * wgt + xp + p


def _pick_tile_f(f, b, num_im, hw, c_out, xp_lanes, itemsize, vmem_budget,
                 max_unroll=64):
    """Largest valid tile_f (divisor of f that is a multiple of 8, or f
    itself) whose full per-step VMEM footprint fits the budget."""
    cands = [d for d in range(1, f + 1)
             if f % d == 0 and (d == f or d % 8 == 0)]        # always contains f
    cost = lambda d: _block_vmem_bytes(d, num_im, hw, c_out, xp_lanes, itemsize)
    fits = [d for d in cands if d <= max_unroll and cost(d) <= vmem_budget]
    pick = max(fits) if fits else min(cands)
    # v7x megacore: 2 TensorCores shard 'parallel' grid axes -- guarantee at
    # least 2 grid steps when the batch axis alone cannot provide them.
    if b == 1:
        pool = fits if fits else cands
        multi = [d for d in pool if f // d >= 2]
        if multi:
            pick = max(multi)
    return pick


def pcaf_forward(cc_feat, conv2_weight):
    """cc_feat: (b, num_im, f, h, w);  conv2_weight: (c_out, num_im, 3, 3)."""
    b, num_im, f, h, w = cc_feat.shape
    c_out = conv2_weight.shape[0]
    hw = h * w
    itemsize = cc_feat.dtype.itemsize

    pad_l = _round_up(w + 1, 128)            # lane-aligned centre store
    xp_lanes = pad_l + hw + w + 1            # left halo + image + right halo

    try:
        vmem_cap = int(pltpu.get_tpu_info().vmem_capacity_bytes)
    except Exception:                        # pragma: no cover
        vmem_cap = 64 * 1024 * 1024          # v7x-safe fallback

    tile_f = _pick_tile_f(f, b, num_im, hw, c_out, xp_lanes, itemsize,
                          vmem_budget=int(0.4 * vmem_cap))
    nfb = f // tile_f

    # Free, contiguous reshape: pixels flattened into the lane dimension.
    x_in = cc_feat.reshape(b, num_im, f, hw)

    # Pre-pack weight (C_OUT, Cin, 3, 3) -> (C_OUT, 9*Cin) with
    # k = (ky*3 + kx)*Cin + ci, matching the kernel's tap ordering.  (Tiny op.)
    w_packed = jnp.transpose(conv2_weight, (0, 2, 3, 1)).reshape(c_out, 9 * num_im)

    kernel = functools.partial(_conv3x3_kernel, img_w=w, pad_l=pad_l)

    needed = _block_vmem_bytes(tile_f, num_im, hw, c_out, xp_lanes, itemsize)
    vmem_limit = int(min(int(0.9 * vmem_cap), max(2 * needed, 32 * 1024 * 1024)))

    flops = 2 * b * f * c_out * hw * 9 * num_im
    bytes_accessed = (b * num_im * f * hw + c_out * 9 * num_im
                      + b * f * c_out * hw) * itemsize

    out = pl.pallas_call(
        kernel,
        out_shape=jax.ShapeDtypeStruct((b, f, c_out, hw), cc_feat.dtype),
        grid=(b, nfb),
        in_specs=[
            pl.BlockSpec((pl.Squeezed(), num_im, tile_f, hw),
                         lambda ib, jf: (ib, 0, jf, 0)),
            pl.BlockSpec((c_out, 9 * num_im), lambda ib, jf: (0, 0)),
        ],
        out_specs=pl.BlockSpec((pl.Squeezed(), tile_f, c_out, hw),
                               lambda ib, jf: (ib, jf, 0, 0)),
        scratch_shapes=[
            pltpu.VMEM((tile_f, num_im, xp_lanes), cc_feat.dtype),
            pltpu.VMEM((tile_f, 9 * num_im, hw), cc_feat.dtype),
        ],
        compiler_params=pltpu.CompilerParams(
            dimension_semantics=("parallel", "parallel"),
            vmem_limit_bytes=vmem_limit),
        cost_estimate=pl.CostEstimate(flops=flops, transcendentals=0,
                                      bytes_accessed=bytes_accessed),
    )(x_in, w_packed)

    # Free, contiguous reshape to the final PyTorch layout.
    return out.reshape(b, f, c_out, h, w)


def reference_forward(cc_feat, conv2_weight):
    """Pure-JAX reference (lax.conv) for correctness check."""
    b, num_im, f, h, w = cc_feat.shape
    c_out = conv2_weight.shape[0]
    x = jnp.transpose(cc_feat, (0, 2, 1, 3, 4)).reshape(b * f, num_im, h, w)
    y = lax.conv_general_dilated(
        x, conv2_weight, window_strides=(1, 1), padding=((1, 1), (1, 1)),
        dimension_numbers=("NCHW", "OIHW", "NCHW"))
    return y.reshape(b, f, c_out, h, w)


if __name__ == "__main__":
    # small shapes consistent with the module
    b, num_im, f, h, w = 2, 4, 8, 16, 16
    num_features = 64

    key = jax.random.PRNGKey(0)
    k_x, k_w = jax.random.split(key)
    cc_feat = jax.random.normal(k_x, (b, num_im, f, h, w), dtype=jnp.float32)

    # deterministic kaiming-like init for Conv2d(num_im, num_features, 3, bias=False)
    fan_in = num_im * 3 * 3
    conv2_weight = (jax.random.normal(k_w, (num_features, num_im, 3, 3),
                                      dtype=jnp.float32)
                    * jnp.sqrt(2.0 / fan_in))

    out = jax.block_until_ready(pcaf_forward(cc_feat, conv2_weight))
    ref = jax.block_until_ready(reference_forward(cc_feat, conv2_weight))

    assert out.shape == (b, f, num_features, h, w), out.shape
    assert jnp.allclose(out, ref, atol=1e-3, rtol=1e-3), "mismatch vs reference"

    print("KERNEL_OK")
</pallas_src>

<mosaic_0001>
module attributes {stable_mosaic.version = 11 : i64} {
  func.func @_conv3x3_kernel(%arg0: i32, %arg1: i32, %arg2: memref<1x4x8x256xf32, #tpu.memory_space<vmem>>, %arg3: memref<64x36xf32, #tpu.memory_space<vmem>>, %arg4: memref<1x8x64x256xf32, #tpu.memory_space<vmem>>, %arg5: memref<8x4x401xf32, #tpu.memory_space<vmem>>, %arg6: memref<8x36x256xf32, #tpu.memory_space<vmem>>) attributes {dimension_semantics = [#tpu.dimension_semantics<parallel>, #tpu.dimension_semantics<parallel>], iteration_bounds = array<i64: 2, 1>, scalar_prefetch = 0 : i64, scratch_operands = 2 : i64, tpu.core_type = #tpu.core_type<tc>, window_params = [{transform_indices = @transform_0, window_bounds = array<i64: 1, 4, 8, 256>}, {pipeline_mode = #tpu.pipeline_mode<synchronous>, transform_indices = @transform_1, window_bounds = array<i64: 64, 36>}, {transform_indices = @transform_2, window_bounds = array<i64: 1, 8, 64, 256>}]} {
    %cst = arith.constant 0.000000e+00 : f32
    %0 = vector.broadcast %cst : f32 to vector<8x4x17xf32>
    %c0 = arith.constant 0 : index
    %c0_0 = arith.constant 0 : index
    %c111 = arith.constant 111 : index
    %1 = vector.load %arg5[%c0, %c0_0, %c111] : memref<8x4x401xf32, #tpu.memory_space<vmem>>, vector<8x4x17xf32>
    tpu.vector_store %arg5[%c0, %c0_0, %c111], %0 {strides = array<i32>} : memref<8x4x401xf32, #tpu.memory_space<vmem>>, vector<8x4x17xf32>,
    %c0_1 = arith.constant 0 : index
    %c0_2 = arith.constant 0 : index
    %c384 = arith.constant 384 : index
    %2 = vector.load %arg5[%c0_1, %c0_2, %c384] : memref<8x4x401xf32, #tpu.memory_space<vmem>>, vector<8x4x17xf32>
    tpu.vector_store %arg5[%c0_1, %c0_2, %c384], %0 {strides = array<i32>} : memref<8x4x401xf32, #tpu.memory_space<vmem>>, vector<8x4x17xf32>,
    %c0_3 = arith.constant 0 : index
    %c0_4 = arith.constant 0 : index
    %c0_5 = arith.constant 0 : index
    %c0_6 = arith.constant 0 : index
    %3 = vector.load %arg2[%c0_3, %c0_4, %c0_5, %c0_6] : memref<1x4x8x256xf32, #tpu.memory_space<vmem>>, vector<1x4x1x256xf32>
    %4 = vector.shape_cast %3 : vector<1x4x1x256xf32> to vector<4x256xf32>
    %c0_7 = arith.constant 0 : index
    %c0_8 = arith.constant 0 : index
    %c128 = arith.constant 128 : index
    %5 = vector.load %arg5[%c0_7, %c0_8, %c128] : memref<8x4x401xf32, #tpu.memory_space<vmem>>, vector<1x4x256xf32>
    %6 = vector.shape_cast %5 : vector<1x4x256xf32> to vector<4x256xf32>
    %7 = vector.shape_cast %4 : vector<4x256xf32> to vector<1x4x256xf32>
    tpu.vector_store %arg5[%c0_7, %c0_8, %c128], %7 {strides = array<i32>} : memref<8x4x401xf32, #tpu.memory_space<vmem>>, vector<1x4x256xf32>,
    %c0_9 = arith.constant 0 : index
    %c0_10 = arith.constant 0 : index
    %c1 = arith.constant 1 : index
    %c0_11 = arith.constant 0 : index
    %8 = vector.load %arg2[%c0_9, %c0_10, %c1, %c0_11] : memref<1x4x8x256xf32, #tpu.memory_space<vmem>>, vector<1x4x1x256xf32>
    %9 = vector.shape_cast %8 : vector<1x4x1x256xf32> to vector<4x256xf32>
    %c1_12 = arith.constant 1 : index
    %c0_13 = arith.constant 0 : index
    %c128_14 = arith.constant 128 : index
    %10 = vector.load %arg5[%c1_12, %c0_13, %c128_14] : memref<8x4x401xf32, #tpu.memory_space<vmem>>, vector<1x4x256xf32>
    %11 = vector.shape_cast %10 : vector<1x4x256xf32> to vector<4x256xf32>
    %12 = vector.shape_cast %9 : vector<4x256xf32> to vector<1x4x256xf32>
    tpu.vector_store %arg5[%c1_12, %c0_13, %c128_14], %12 {strides = array<i32>} : memref<8x4x401xf32, #tpu.memory_space<vmem>>, vector<1x4x256xf32>,
    %c0_15 = arith.constant 0 : index
    %c0_16 = arith.constant 0 : index
    %c2 = arith.constant 2 : index
    %c0_17 = arith.constant 0 : index
    %13 = vector.load %arg2[%c0_15, %c0_16, %c2, %c0_17] : memref<1x4x8x256xf32, #tpu.memory_space<vmem>>, vector<1x4x1x256xf32>
    %14 = vector.shape_cast %13 : vector<1x4x1x256xf32> to vector<4x256xf32>
    %c2_18 = arith.constant 2 : index
    %c0_19 = arith.constant 0 : index
    %c128_20 = arith.constant 128 : index
    %15 = vector.load %arg5[%c2_18, %c0_19, %c128_20] : memref<8x4x401xf32, #tpu.memory_space<vmem>>, vector<1x4x256xf32>
    %16 = vector.shape_cast %15 : vector<1x4x256xf32> to vector<4x256xf32>
    %17 = vector.shape_cast %14 : vector<4x256xf32> to vector<1x4x256xf32>
    tpu.vector_store %arg5[%c2_18, %c0_19, %c128_20], %17 {strides = array<i32>} : memref<8x4x401xf32, #tpu.memory_space<vmem>>, vector<1x4x256xf32>,
    %c0_21 = arith.constant 0 : index
    %c0_22 = arith.constant 0 : index
    %c3 = arith.constant 3 : index
    %c0_23 = arith.constant 0 : index
    %18 = vector.load %arg2[%c0_21, %c0_22, %c3, %c0_23] : memref<1x4x8x256xf32, #tpu.memory_space<vmem>>, vector<1x4x1x256xf32>
    %19 = vector.shape_cast %18 : vector<1x4x1x256xf32> to vector<4x256xf32>
    %c3_24 = arith.constant 3 : index
    %c0_25 = arith.constant 0 : index
    %c128_26 = arith.constant 128 : index
    %20 = vector.load %arg5[%c3_24, %c0_25, %c128_26] : memref<8x4x401xf32, #tpu.memory_space<vmem>>, vector<1x4x256xf32>
    %21 = vector.shape_cast %20 : vector<1x4x256xf32> to vector<4x256xf32>
    %22 = vector.shape_cast %19 : vector<4x256xf32> to vector<1x4x256xf32>
    tpu.vector_store %arg5[%c3_24, %c0_25, %c128_26], %22 {strides = array<i32>} : memref<8x4x401xf32, #tpu.memory_space<vmem>>, vector<1x4x256xf32>,
    %c0_27 = arith.constant 0 : index
    %c0_28 = arith.constant 0 : index
    %c4 = arith.constant 4 : index
    %c0_29 = arith.constant 0 : index
    %23 = vector.load %arg2[%c0_27, %c0_28, %c4, %c0_29] : memref<1x4x8x256xf32, #tpu.memory_space<vmem>>, vector<1x4x1x256xf32>
    %24 = vector.shape_cast %23 : vector<1x4x1x256xf32> to vector<4x256xf32>
    %c4_30 = arith.constant 4 : index
    %c0_31 = arith.constant 0 : index
    %c128_32 = arith.constant 128 : index
    %25 = vector.load %arg5[%c4_30, %c0_31, %c128_32] : memref<8x4x401xf32, #tpu.memory_space<vmem>>, vector<1x4x256xf32>
    %26 = vector.shape_cast %25 : vector<1x4x256xf32> to vector<4x256xf32>
    %27 = vector.shape_cast %24 : vector<4x256xf32> to vector<1x4x256xf32>
    tpu.vector_store %arg5[%c4_30, %c0_31, %c128_32], %27 {strides = array<i32>} : memref<8x4x401xf32, #tpu.memory_space<vmem>>, vector<1x4x256xf32>,
    %c0_33 = arith.constant 0 : index
    %c0_34 = arith.constant 0 : index
    %c5 = arith.constant 5 : index
    %c0_35 = arith.constant 0 : index
    %28 = vector.load %arg2[%c0_33, %c0_34, %c5, %c0_35] : memref<1x4x8x256xf32, #tpu.memory_space<vmem>>, vector<1x4x1x256xf32>
    %29 = vector.shape_cast %28 : vector<1x4x1x256xf32> to vector<4x256xf32>
    %c5_36 = arith.constant 5 : index
    %c0_37 = arith.constant 0 : index
    %c128_38 = arith.constant 128 : index
    %30 = vector.load %arg5[%c5_36, %c0_37, %c128_38] : memref<8x4x401xf32, #tpu.memory_space<vmem>>, vector<1x4x256xf32>
    %31 = vector.shape_cast %30 : vector<1x4x256xf32> to vector<4x256xf32>
    %32 = vector.shape_cast %29 : vector<4x256xf32> to vector<1x4x256xf32>
    tpu.vector_store %arg5[%c5_36, %c0_37, %c128_38], %32 {strides = array<i32>} : memref<8x4x401xf32, #tpu.memory_space<vmem>>, vector<1x4x256xf32>,
    %c0_39 = arith.constant 0 : index
    %c0_40 = arith.constant 0 : index
    %c6 = arith.constant 6 : index
    %c0_41 = arith.constant 0 : index
    %33 = vector.load %arg2[%c0_39, %c0_40, %c6, %c0_41] : memref<1x4x8x256xf32, #tpu.memory_space<vmem>>, vector<1x4x1x256xf32>
    %34 = vector.shape_cast %33 : vector<1x4x1x256xf32> to vector<4x256xf32>
    %c6_42 = arith.constant 6 : index
    %c0_43 = arith.constant 0 : index
    %c128_44 = arith.constant 128 : index
    %35 = vector.load %arg5[%c6_42, %c0_43, %c128_44] : memref<8x4x401xf32, #tpu.memory_space<vmem>>, vector<1x4x256xf32>
    %36 = vector.shape_cast %35 : vector<1x4x256xf32> to vector<4x256xf32>
    %37 = vector.shape_cast %34 : vector<4x256xf32> to vector<1x4x256xf32>
    tpu.vector_store %arg5[%c6_42, %c0_43, %c128_44], %37 {strides = array<i32>} : memref<8x4x401xf32, #tpu.memory_space<vmem>>, vector<1x4x256xf32>,
    %c0_45 = arith.constant 0 : index
    %c0_46 = arith.constant 0 : index
    %c7 = arith.constant 7 : index
    %c0_47 = arith.constant 0 : index
    %38 = vector.load %arg2[%c0_45, %c0_46, %c7, %c0_47] : memref<1x4x8x256xf32, #tpu.memory_space<vmem>>, vector<1x4x1x256xf32>
    %39 = vector.shape_cast %38 : vector<1x4x1x256xf32> to vector<4x256xf32>
    %c7_48 = arith.constant 7 : index
    %c0_49 = arith.constant 0 : index
    %c128_50 = arith.constant 128 : index
    %40 = vector.load %arg5[%c7_48, %c0_49, %c128_50] : memref<8x4x401xf32, #tpu.memory_space<vmem>>, vector<1x4x256xf32>
    %41 = vector.shape_cast %40 : vector<1x4x256xf32> to vector<4x256xf32>
    %42 = vector.shape_cast %39 : vector<4x256xf32> to vector<1x4x256xf32>
    tpu.vector_store %arg5[%c7_48, %c0_49, %c128_50], %42 {strides = array<i32>} : memref<8x4x401xf32, #tpu.memory_space<vmem>>, vector<1x4x256xf32>,
    %43 = tpu.iota {dimensions = array<i32: 2>} : vector<1x1x256xi32>
    %c16_i32 = arith.constant 16 : i32
    %c0_i32 = arith.constant 0 : i32
    %44 = arith.cmpi eq, %c16_i32, %c0_i32 : i32
    %c1_i32 = arith.constant 1 : i32
    %45 = arith.select %44, %c1_i32, %c16_i32 : i32
    %46 = vector.broadcast %45 : i32 to vector<1x1x256xi32>
    %47 = arith.remsi %43, %46 : vector<1x1x256xi32>
    %c0_i32_51 = arith.constant 0 : i32
    %48 = vector.broadcast %c0_i32_51 : i32 to vector<1x1x256xi32>
    %49 = arith.cmpi ne, %47, %48 : vector<1x1x256xi32>
    %c0_i32_52 = arith.constant 0 : i32
    %50 = vector.broadcast %c0_i32_52 : i32 to vector<1x1x256xi32>
    %51 = arith.cmpi slt, %47, %50 : vector<1x1x256xi32>
    %c0_i32_53 = arith.constant 0 : i32
    %52 = arith.cmpi slt, %45, %c0_i32_53 : i32
    %53 = vector.broadcast %52 : i1 to vector<1x1x256xi1>
    %54 = vector.broadcast %53 : vector<1x1x256xi1> to vector<1x1x256xi1>
    %55 = arith.xori %51, %54 : vector<1x1x256xi1>
    %56 = arith.andi %55, %49 : vector<1x1x256xi1>
    %57 = vector.broadcast %45 : i32 to vector<1x1x256xi32>
    %58 = arith.addi %47, %57 : vector<1x1x256xi32>
    %59 = arith.select %56, %58, %47 : vector<1x1x256xi1>, vector<1x1x256xi32>
    %c1_i32_54 = arith.constant 1 : i32
    %60 = vector.broadcast %c1_i32_54 : i32 to vector<1x1x256xi32>
    %61 = arith.cmpi sge, %59, %60 : vector<1x1x256xi32>
    %c14_i32 = arith.constant 14 : i32
    %62 = vector.broadcast %c14_i32 : i32 to vector<1x1x256xi32>
    %63 = arith.cmpi sle, %59, %62 : vector<1x1x256xi32>
    %c0_55 = arith.constant 0 : index
    %c0_56 = arith.constant 0 : index
    %c111_57 = arith.constant 111 : index
    %64 = vector.load %arg5[%c0_55, %c0_56, %c111_57] : memref<8x4x401xf32, #tpu.memory_space<vmem>>, vector<8x4x256xf32>
    %cst_58 = arith.constant 0.000000e+00 : f32
    %65 = vector.shape_cast %61 : vector<1x1x256xi1> to vector<1x1x256xi1>
    %66 = vector.broadcast %65 : vector<1x1x256xi1> to vector<8x4x256xi1>
    %67 = vector.broadcast %cst_58 : f32 to vector<8x4x256xf32>
    %68 = arith.select %66, %64, %67 : vector<8x4x256xi1>, vector<8x4x256xf32>
    %c0_59 = arith.constant 0 : index
    %c0_60 = arith.constant 0 : index
    %c0_61 = arith.constant 0 : index
    %69 = vector.load %arg6[%c0_59, %c0_60, %c0_61] : memref<8x36x256xf32, #tpu.memory_space<vmem>>, vector<8x4x256xf32>
    tpu.vector_store %arg6[%c0_59, %c0_60, %c0_61], %68 {strides = array<i32>} : memref<8x36x256xf32, #tpu.memory_space<vmem>>, vector<8x4x256xf32>,
    %c0_62 = arith.constant 0 : index
    %c0_63 = arith.constant 0 : index
    %c112 = arith.constant 112 : index
    %70 = vector.load %arg5[%c0_62, %c0_63, %c112] : memref<8x4x401xf32, #tpu.memory_space<vmem>>, vector<8x4x256xf32>
    %c0_64 = arith.constant 0 : index
    %c4_65 = arith.constant 4 : index
    %c0_66 = arith.constant 0 : index
    %71 = vector.load %arg6[%c0_64, %c4_65, %c0_66] : memref<8x36x256xf32, #tpu.memory_space<vmem>>, vector<8x4x256xf32>
    tpu.vector_store %arg6[%c0_64, %c4_65, %c0_66], %70 {strides = array<i32>} : memref<8x36x256xf32, #tpu.memory_space<vmem>>, vector<8x4x256xf32>,
    %c0_67 = arith.constant 0 : index
    %c0_68 = arith.constant 0 : index
    %c113 = arith.constant 113 : index
    %72 = vector.load %arg5[%c0_67, %c0_68, %c113] : memref<8x4x401xf32, #tpu.memory_space<vmem>>, vector<8x4x256xf32>
    %cst_69 = arith.constant 0.000000e+00 : f32
    %73 = vector.shape_cast %63 : vector<1x1x256xi1> to vector<1x1x256xi1>
    %74 = vector.broadcast %73 : vector<1x1x256xi1> to vector<8x4x256xi1>
    %75 = vector.broadcast %cst_69 : f32 to vector<8x4x256xf32>
    %76 = arith.select %74, %72, %75 : vector<8x4x256xi1>, vector<8x4x256xf32>
    %c0_70 = arith.constant 0 : index
    %c8 = arith.constant 8 : index
    %c0_71 = arith.constant 0 : index
    %77 = vector.load %arg6[%c0_70, %c8, %c0_71] : memref<8x36x256xf32, #tpu.memory_space<vmem>>, vector<8x4x256xf32>
    tpu.vector_store %arg6[%c0_70, %c8, %c0_71], %76 {strides = array<i32>} : memref<8x36x256xf32, #tpu.memory_space<vmem>>, vector<8x4x256xf32>,
    %c0_72 = arith.constant 0 : index
    %c0_73 = arith.constant 0 : index
    %c127 = arith.constant 127 : index
    %78 = vector.load %arg5[%c0_72, %c0_73, %c127] : memref<8x4x401xf32, #tpu.memory_space<vmem>>, vector<8x4x256xf32>
    %cst_74 = arith.constant 0.000000e+00 : f32
    %79 = vector.shape_cast %61 : vector<1x1x256xi1> to vector<1x1x256xi1>
    %80 = vector.broadcast %79 : vector<1x1x256xi1> to vector<8x4x256xi1>
    %81 = vector.broadcast %cst_74 : f32 to vector<8x4x256xf32>
    %82 = arith.select %80, %78, %81 : vector<8x4x256xi1>, vector<8x4x256xf32>
    %c0_75 = arith.constant 0 : index
    %c12 = arith.constant 12 : index
    %c0_76 = arith.constant 0 : index
    %83 = vector.load %arg6[%c0_75, %c12, %c0_76] : memref<8x36x256xf32, #tpu.memory_space<vmem>>, vector<8x4x256xf32>
    tpu.vector_store %arg6[%c0_75, %c12, %c0_76], %82 {strides = array<i32>} : memref<8x36x256xf32, #tpu.memory_space<vmem>>, vector<8x4x256xf32>,
    %c0_77 = arith.constant 0 : index
    %c0_78 = arith.constant 0 : index
    %c128_79 = arith.constant 128 : index
    %84 = vector.load %arg5[%c0_77, %c0_78, %c128_79] : memref<8x4x401xf32, #tpu.memory_space<vmem>>, vector<8x4x256xf32>
    %c0_80 = arith.constant 0 : index
    %c16 = arith.constant 16 : index
    %c0_81 = arith.constant 0 : index
    %85 = vector.load %arg6[%c0_80, %c16, %c0_81] : memref<8x36x256xf32, #tpu.memory_space<vmem>>, vector<8x4x256xf32>
    tpu.vector_store %arg6[%c0_80, %c16, %c0_81], %84 {strides = array<i32>} : memref<8x36x256xf32, #tpu.memory_space<vmem>>, vector<8x4x256xf32>,
    %c0_82 = arith.constant 0 : index
    %c0_83 = arith.constant 0 : index
    %c129 = arith.constant 129 : index
    %86 = vector.load %arg5[%c0_82, %c0_83, %c129] : memref<8x4x401xf32, #tpu.memory_space<vmem>>, vector<8x4x256xf32>
    %cst_84 = arith.constant 0.000000e+00 : f32
    %87 = vector.shape_cast %63 : vector<1x1x256xi1> to vector<1x1x256xi1>
    %88 = vector.broadcast %87 : vector<1x1x256xi1> to vector<8x4x256xi1>
    %89 = vector.broadcast %cst_84 : f32 to vector<8x4x256xf32>
    %90 = arith.select %88, %86, %89 : vector<8x4x256xi1>, vector<8x4x256xf32>
    %c0_85 = arith.constant 0 : index
    %c20 = arith.constant 20 : index
    %c0_86 = arith.constant 0 : index
    %91 = vector.load %arg6[%c0_85, %c20, %c0_86] : memref<8x36x256xf32, #tpu.memory_space<vmem>>, vector<8x4x256xf32>
    tpu.vector_store %arg6[%c0_85, %c20, %c0_86], %90 {strides = array<i32>} : memref<8x36x256xf32, #tpu.memory_space<vmem>>, vector<8x4x256xf32>,
    %c0_87 = arith.constant 0 : index
    %c0_88 = arith.constant 0 : index
    %c143 = arith.constant 143 : index
    %92 = vector.load %arg5[%c0_87, %c0_88, %c143] : memref<8x4x401xf32, #tpu.memory_space<vmem>>, vector<8x4x256xf32>
    %cst_89 = arith.constant 0.000000e+00 : f32
    %93 = vector.shape_cast %61 : vector<1x1x256xi1> to vector<1x1x256xi1>
    %94 = vector.broadcast %93 : vector<1x1x256xi1> to vector<8x4x256xi1>
    %95 = vector.broadcast %cst_89 : f32 to vector<8x4x256xf32>
    %96 = arith.select %94, %92, %95 : vector<8x4x256xi1>, vector<8x4x256xf32>
    %c0_90 = arith.constant 0 : index
    %c24 = arith.constant 24 : index
    %c0_91 = arith.constant 0 : index
    %97 = vector.load %arg6[%c0_90, %c24, %c0_91] : memref<8x36x256xf32, #tpu.memory_space<vmem>>, vector<8x4x256xf32>
    tpu.vector_store %arg6[%c0_90, %c24, %c0_91], %96 {strides = array<i32>} : memref<8x36x256xf32, #tpu.memory_space<vmem>>, vector<8x4x256xf32>,
    %c0_92 = arith.constant 0 : index
    %c0_93 = arith.constant 0 : index
    %c144 = arith.constant 144 : index
    %98 = vector.load %arg5[%c0_92, %c0_93, %c144] : memref<8x4x401xf32, #tpu.memory_space<vmem>>, vector<8x4x256xf32>
    %c0_94 = arith.constant 0 : index
    %c28 = arith.constant 28 : index
    %c0_95 = arith.constant 0 : index
    %99 = vector.load %arg6[%c0_94, %c28, %c0_95] : memref<8x36x256xf32, #tpu.memory_space<vmem>>, vector<8x4x256xf32>
    tpu.vector_store %arg6[%c0_94, %c28, %c0_95], %98 {strides = array<i32>} : memref<8x36x256xf32, #tpu.memory_space<vmem>>, vector<8x4x256xf32>,
    %c0_96 = arith.constant 0 : index
    %c0_97 = arith.constant 0 : index
    %c145 = arith.constant 145 : index
    %100 = vector.load %arg5[%c0_96, %c0_97, %c145] : memref<8x4x401xf32, #tpu.memory_space<vmem>>, vector<8x4x256xf32>
    %cst_98 = arith.constant 0.000000e+00 : f32
    %101 = vector.shape_cast %63 : vector<1x1x256xi1> to vector<1x1x256xi1>
    %102 = vector.broadcast %101 : vector<1x1x256xi1> to vector<8x4x256xi1>
    %103 = vector.broadcast %cst_98 : f32 to vector<8x4x256xf32>
    %104 = arith.select %102, %100, %103 : vector<8x4x256xi1>, vector<8x4x256xf32>
    %c0_99 = arith.constant 0 : index
    %c32 = arith.constant 32 : index
    %c0_100 = arith.constant 0 : index
    %105 = vector.load %arg6[%c0_99, %c32, %c0_100] : memref<8x36x256xf32, #tpu.memory_space<vmem>>, vector<8x4x256xf32>
    tpu.vector_store %arg6[%c0_99, %c32, %c0_100], %104 {strides = array<i32>} : memref<8x36x256xf32, #tpu.memory_space<vmem>>, vector<8x4x256xf32>,
    %c0_101 = arith.constant 0 : index
    %c0_102 = arith.constant 0 : index
    %106 = vector.load %arg3[%c0_101, %c0_102] : memref<64x36xf32, #tpu.memory_space<vmem>>, vector<64x36xf32>
    %c0_103 = arith.constant 0 : index
    %c0_104 = arith.constant 0 : index
    %c0_105 = arith.constant 0 : index
    %107 = vector.load %arg6[%c0_103, %c0_104, %c0_105] : memref<8x36x256xf32, #tpu.memory_space<vmem>>, vector<1x36x256xf32>
    %108 = vector.shape_cast %107 : vector<1x36x256xf32> to vector<36x256xf32>
    %cst_106 = arith.constant dense<0.000000e+00> : vector<64x256xf32>
    %109 = tpu.matmul %106, %108, %cst_106 {dimension_numbers = #tpu.dot_dimension_numbers<[1], [0], [0], [1], [0, 0, 1, 1], [], []>} : vector<64x36xf32>, vector<36x256xf32>, vector<64x256xf32> -> vector<64x256xf32>
    %c0_107 = arith.constant 0 : index
    %c0_108 = arith.constant 0 : index
    %c0_109 = arith.constant 0 : index
    %c0_110 = arith.constant 0 : index
    %110 = vector.load %arg4[%c0_107, %c0_108, %c0_109, %c0_110] : memref<1x8x64x256xf32, #tpu.memory_space<vmem>>, vector<1x1x64x256xf32>
    %111 = vector.shape_cast %110 : vector<1x1x64x256xf32> to vector<64x256xf32>
    %112 = vector.shape_cast %109 : vector<64x256xf32> to vector<1x1x64x256xf32>
    tpu.vector_store %arg4[%c0_107, %c0_108, %c0_109, %c0_110], %112 {strides = array<i32>} : memref<1x8x64x256xf32, #tpu.memory_space<vmem>>, vector<1x1x64x256xf32>,
    %c1_111 = arith.constant 1 : index
    %c0_112 = arith.constant 0 : index
    %c0_113 = arith.constant 0 : index
    %113 = vector.load %arg6[%c1_111, %c0_112, %c0_113] : memref<8x36x256xf32, #tpu.memory_space<vmem>>, vector<1x36x256xf32>
    %114 = vector.shape_cast %113 : vector<1x36x256xf32> to vector<36x256xf32>
    %cst_114 = arith.constant dense<0.000000e+00> : vector<64x256xf32>
    %115 = tpu.matmul %106, %114, %cst_114 {dimension_numbers = #tpu.dot_dimension_numbers<[1], [0], [0], [1], [0, 0, 1, 1], [], []>} : vector<64x36xf32>, vector<36x256xf32>, vector<64x256xf32> -> vector<64x256xf32>
    %c0_115 = arith.constant 0 : index
    %c1_116 = arith.constant 1 : index
    %c0_117 = arith.constant 0 : index
    %c0_118 = arith.constant 0 : index
    %116 = vector.load %arg4[%c0_115, %c1_116, %c0_117, %c0_118] : memref<1x8x64x256xf32, #tpu.memory_space<vmem>>, vector<1x1x64x256xf32>
    %117 = vector.shape_cast %116 : vector<1x1x64x256xf32> to vector<64x256xf32>
    %118 = vector.shape_cast %115 : vector<64x256xf32> to vector<1x1x64x256xf32>
    tpu.vector_store %arg4[%c0_115, %c1_116, %c0_117, %c0_118], %118 {strides = array<i32>} : memref<1x8x64x256xf32, #tpu.memory_space<vmem>>, vector<1x1x64x256xf32>,
    %c2_119 = arith.constant 2 : index
    %c0_120 = arith.constant 0 : index
    %c0_121 = arith.constant 0 : index
    %119 = vector.load %arg6[%c2_119, %c0_120, %c0_121] : memref<8x36x256xf32, #tpu.memory_space<vmem>>, vector<1x36x256xf32>
    %120 = vector.shape_cast %119 : vector<1x36x256xf32> to vector<36x256xf32>
    %cst_122 = arith.constant dense<0.000000e+00> : vector<64x256xf32>
    %121 = tpu.matmul %106, %120, %cst_122 {dimension_numbers = #tpu.dot_dimension_numbers<[1], [0], [0], [1], [0, 0, 1, 1], [], []>} : vector<64x36xf32>, vector<36x256xf32>, vector<64x256xf32> -> vector<64x256xf32>
    %c0_123 = arith.constant 0 : index
    %c2_124 = arith.constant 2 : index
    %c0_125 = arith.constant 0 : index
    %c0_126 = arith.constant 0 : index
    %122 = vector.load %arg4[%c0_123, %c2_124, %c0_125, %c0_126] : memref<1x8x64x256xf32, #tpu.memory_space<vmem>>, vector<1x1x64x256xf32>
    %123 = vector.shape_cast %122 : vector<1x1x64x256xf32> to vector<64x256xf32>
    %124 = vector.shape_cast %121 : vector<64x256xf32> to vector<1x1x64x256xf32>
    tpu.vector_store %arg4[%c0_123, %c2_124, %c0_125, %c0_126], %124 {strides = array<i32>} : memref<1x8x64x256xf32, #tpu.memory_space<vmem>>, vector<1x1x64x256xf32>,
    %c3_127 = arith.constant 3 : index
    %c0_128 = arith.constant 0 : index
    %c0_129 = arith.constant 0 : index
    %125 = vector.load %arg6[%c3_127, %c0_128, %c0_129] : memref<8x36x256xf32, #tpu.memory_space<vmem>>, vector<1x36x256xf32>
    %126 = vector.shape_cast %125 : vector<1x36x256xf32> to vector<36x256xf32>
    %cst_130 = arith.constant dense<0.000000e+00> : vector<64x256xf32>
    %127 = tpu.matmul %106, %126, %cst_130 {dimension_numbers = #tpu.dot_dimension_numbers<[1], [0], [0], [1], [0, 0, 1, 1], [], []>} : vector<64x36xf32>, vector<36x256xf32>, vector<64x256xf32> -> vector<64x256xf32>
    %c0_131 = arith.constant 0 : index
    %c3_132 = arith.constant 3 : index
    %c0_133 = arith.constant 0 : index
    %c0_134 = arith.constant 0 : index
    %128 = vector.load %arg4[%c0_131, %c3_132, %c0_133, %c0_134] : memref<1x8x64x256xf32, #tpu.memory_space<vmem>>, vector<1x1x64x256xf32>
    %129 = vector.shape_cast %128 : vector<1x1x64x256xf32> to vector<64x256xf32>
    %130 = vector.shape_cast %127 : vector<64x256xf32> to vector<1x1x64x256xf32>
    tpu.vector_store %arg4[%c0_131, %c3_132, %c0_133, %c0_134], %130 {strides = array<i32>} : memref<1x8x64x256xf32, #tpu.memory_space<vmem>>, vector<1x1x64x256xf32>,
    %c4_135 = arith.constant 4 : index
    %c0_136 = arith.constant 0 : index
    %c0_137 = arith.constant 0 : index
    %131 = vector.load %arg6[%c4_135, %c0_136, %c0_137] : memref<8x36x256xf32, #tpu.memory_space<vmem>>, vector<1x36x256xf32>
    %132 = vector.shape_cast %131 : vector<1x36x256xf32> to vector<36x256xf32>
    %cst_138 = arith.constant dense<0.000000e+00> : vector<64x256xf32>
    %133 = tpu.matmul %106, %132, %cst_138 {dimension_numbers = #tpu.dot_dimension_numbers<[1], [0], [0], [1], [0, 0, 1, 1], [], []>} : vector<64x36xf32>, vector<36x256xf32>, vector<64x256xf32> -> vector<64x256xf32>
    %c0_139 = arith.constant 0 : index
    %c4_140 = arith.constant 4 : index
    %c0_141 = arith.constant 0 : index
    %c0_142 = arith.constant 0 : index
    %134 = vector.load %arg4[%c0_139, %c4_140, %c0_141, %c0_142] : memref<1x8x64x256xf32, #tpu.memory_space<vmem>>, vector<1x1x64x256xf32>
    %135 = vector.shape_cast %134 : vector<1x1x64x256xf32> to vector<64x256xf32>
    %136 = vector.shape_cast %133 : vector<64x256xf32> to vector<1x1x64x256xf32>
    tpu.vector_store %arg4[%c0_139, %c4_140, %c0_141, %c0_142], %136 {strides = array<i32>} : memref<1x8x64x256xf32, #tpu.memory_space<vmem>>, vector<1x1x64x256xf32>,
    %c5_143 = arith.constant 5 : index
    %c0_144 = arith.constant 0 : index
    %c0_145 = arith.constant 0 : index
    %137 = vector.load %arg6[%c5_143, %c0_144, %c0_145] : memref<8x36x256xf32, #tpu.memory_space<vmem>>, vector<1x36x256xf32>
    %138 = vector.shape_cast %137 : vector<1x36x256xf32> to vector<36x256xf32>
    %cst_146 = arith.constant dense<0.000000e+00> : vector<64x256xf32>
    %139 = tpu.matmul %106, %138, %cst_146 {dimension_numbers = #tpu.dot_dimension_numbers<[1], [0], [0], [1], [0, 0, 1, 1], [], []>} : vector<64x36xf32>, vector<36x256xf32>, vector<64x256xf32> -> vector<64x256xf32>
    %c0_147 = arith.constant 0 : index
    %c5_148 = arith.constant 5 : index
    %c0_149 = arith.constant 0 : index
    %c0_150 = arith.constant 0 : index
    %140 = vector.load %arg4[%c0_147, %c5_148, %c0_149, %c0_150] : memref<1x8x64x256xf32, #tpu.memory_space<vmem>>, vector<1x1x64x256xf32>
    %141 = vector.shape_cast %140 : vector<1x1x64x256xf32> to vector<64x256xf32>
    %142 = vector.shape_cast %139 : vector<64x256xf32> to vector<1x1x64x256xf32>
    tpu.vector_store %arg4[%c0_147, %c5_148, %c0_149, %c0_150], %142 {strides = array<i32>} : memref<1x8x64x256xf32, #tpu.memory_space<vmem>>, vector<1x1x64x256xf32>,
    %c6_151 = arith.constant 6 : index
    %c0_152 = arith.constant 0 : index
    %c0_153 = arith.constant 0 : index
    %143 = vector.load %arg6[%c6_151, %c0_152, %c0_153] : memref<8x36x256xf32, #tpu.memory_space<vmem>>, vector<1x36x256xf32>
    %144 = vector.shape_cast %143 : vector<1x36x256xf32> to vector<36x256xf32>
    %cst_154 = arith.constant dense<0.000000e+00> : vector<64x256xf32>
    %145 = tpu.matmul %106, %144, %cst_154 {dimension_numbers = #tpu.dot_dimension_numbers<[1], [0], [0], [1], [0, 0, 1, 1], [], []>} : vector<64x36xf32>, vector<36x256xf32>, vector<64x256xf32> -> vector<64x256xf32>
    %c0_155 = arith.constant 0 : index
    %c6_156 = arith.constant 6 : index
    %c0_157 = arith.constant 0 : index
    %c0_158 = arith.constant 0 : index
    %146 = vector.load %arg4[%c0_155, %c6_156, %c0_157, %c0_158] : memref<1x8x64x256xf32, #tpu.memory_space<vmem>>, vector<1x1x64x256xf32>
    %147 = vector.shape_cast %146 : vector<1x1x64x256xf32> to vector<64x256xf32>
    %148 = vector.shape_cast %145 : vector<64x256xf32> to vector<1x1x64x256xf32>
    tpu.vector_store %arg4[%c0_155, %c6_156, %c0_157, %c0_158], %148 {strides = array<i32>} : memref<1x8x64x256xf32, #tpu.memory_space<vmem>>, vector<1x1x64x256xf32>,
    %c7_159 = arith.constant 7 : index
    %c0_160 = arith.constant 0 : index
    %c0_161 = arith.constant 0 : index
    %149 = vector.load %arg6[%c7_159, %c0_160, %c0_161] : memref<8x36x256xf32, #tpu.memory_space<vmem>>, vector<1x36x256xf32>
    %150 = vector.shape_cast %149 : vector<1x36x256xf32> to vector<36x256xf32>
    %cst_162 = arith.constant dense<0.000000e+00> : vector<64x256xf32>
    %151 = tpu.matmul %106, %150, %cst_162 {dimension_numbers = #tpu.dot_dimension_numbers<[1], [0], [0], [1], [0, 0, 1, 1], [], []>} : vector<64x36xf32>, vector<36x256xf32>, vector<64x256xf32> -> vector<64x256xf32>
    %c0_163 = arith.constant 0 : index
    %c7_164 = arith.constant 7 : index
    %c0_165 = arith.constant 0 : index
    %c0_166 = arith.constant 0 : index
    %152 = vector.load %arg4[%c0_163, %c7_164, %c0_165, %c0_166] : memref<1x8x64x256xf32, #tpu.memory_space<vmem>>, vector<1x1x64x256xf32>
    %153 = vector.shape_cast %152 : vector<1x1x64x256xf32> to vector<64x256xf32>
    %154 = vector.shape_cast %151 : vector<64x256xf32> to vector<1x1x64x256xf32>
    tpu.vector_store %arg4[%c0_163, %c7_164, %c0_165, %c0_166], %154 {strides = array<i32>} : memref<1x8x64x256xf32, #tpu.memory_space<vmem>>, vector<1x1x64x256xf32>,
    return
  }
  func.func @transform_0(%arg0: i32, %arg1: i32) -> (i32, i32, i32, i32) {
    %c0_i32 = arith.constant 0 : i32
    %c0_i32_0 = arith.constant 0 : i32
    %c0_i32_1 = arith.constant 0 : i32
    return %arg0, %c0_i32, %arg1, %c0_i32_0 : i32, i32, i32, i32
  }
  func.func @transform_1(%arg0: i32, %arg1: i32) -> (i32, i32) {
    %c0_i32 = arith.constant 0 : i32
    %c0_i32_0 = arith.constant 0 : i32
    %c0_i32_1 = arith.constant 0 : i32
    return %c0_i32, %c0_i32_0 : i32, i32
  }
  func.func @transform_2(%arg0: i32, %arg1: i32) -> (i32, i32, i32, i32) {
    %c0_i32 = arith.constant 0 : i32
    %c0_i32_0 = arith.constant 0 : i32
    %c0_i32_1 = arith.constant 0 : i32
    return %arg0, %arg1, %c0_i32, %c0_i32_0 : i32, i32, i32, i32
  }
}

</mosaic_0001>

<llo_original>
// kernel: tpu_custom_call.1
$region0: #{tpu_custom_call.1}
  #allocation0 [shape = 'u32[]', space=smem, size = 0x4, offset = 0x4, fixed_abs, tag = 'smem constant byte address 0x4 - core index']
  #allocation1 [shape = 'u32[72,128]{1,0:T(1,128)}', space=vmem, size = 0x9000, scoped, tag = 'internal scratch']
  #allocation2 [shape = 'f32[8,4,401]{2,1,0:T(4,128)}', space=vmem, size = 0x10000, scoped, tag = 'scratch operand']
  #allocation3 [shape = 'f32[8,36,256]{2,1,0:T(8,128)}', space=vmem, size = 0x50000, scoped, tag = 'scratch operand']
  %s0 = inlined_call_operand.hbm [shape: f32[2,4,8,256], index: 0, kind: input, shape index: {}]
  %s1 = inlined_call_operand.vmem [shape: f32[64,36], index: 1, kind: input, shape index: {}]
  %s2 = inlined_call_operand.hbm [shape: f32[2,8,64,256], index: 2, kind: output, shape index: {}]
  %s3 = sld [smem:[#allocation0]]
  $region45: #{tpu_custom_call.1} parent=0
    _
  %s5 = ssub.s32 1, %s3
  %s6 = scalar_select 0, %s5, %s3
  $region1: #{tpu_custom_call.1} parent=0
    #allocation4 [shape = 'u8[65536]{0}', space=vmem, size = 0x10000, scoped, tag = 'input window, operand 0']
    #allocation5 [shape = 's32[2]{0}', space=sflag, size = 0x8, scoped, tag = 'scoped memory for tpu_custom_call.1']
    #allocation6 [shape = 's32[2]{0}', space=sflag, size = 0x8, scoped, tag = 'scoped memory for tpu_custom_call.1']
    #allocation7 [shape = 'u8[1048576]{0}', space=vmem, size = 0x100000, scoped, tag = 'output window, operand 0']
    %7 = vsyncpa [#allocation5], 0
    %s8 = scalar_lea.sflag [#allocation5], 1
    %9 = vsyncpa %s8, 0
    %10 = vsyncpa [#allocation6], 0
    %s11 = scalar_lea.sflag [#allocation6], 1
    %12 = vsyncpa %s11, 0
    loop: start=0, step=1, limit=4
    $region2: #{tpu_custom_call.1} parent=1 // loop_pre_header
      _
    $region3: #{tpu_custom_call.1} parent=1 // loop_header
      %s14 = sphi 0, %s18
      %p15 = scmp.ge.s32.totalorder %s14, 4
      %s21 = sphi 0, %s33
      %s22 = sphi 0, %s29
      %s23 = sphi 0, %s21
      %s24 = sphi 0, %s22
      %s25 = sphi 0, %s23
      %s26 = sphi 0, %s24
      %s38 = sphi 0, %s40
      %s41 = sphi 0, %s38
      %s42 = sphi 0, %s41
      %s58 = sphi 0, %s42
      %s62 = sphi 0, %s62
      %s64 = sphi 0, %s62
      %s65 = sphi 0, %s64
      %s79 = sphi 0, %s65
      %s87 = sphi 0, %s89
      %s90 = sphi 0, %s87
      %s91 = sphi 0, %s90
      %s107 = sphi 0, %s91
    $region4: #{tpu_custom_call.1} parent=1 // loop_header_branch
      %17 = sbr.rel (%p15) target = $region8
    $region5: #{tpu_custom_call.1} parent=1 // loop_body
      %s19 = ssub.s32 %s14, 1
      %s20 = ssub.s32 %s14, 2
      %s27 = sadd.s32 1, %s22
      %p28 = scmp.ge.s32.totalorder %s27, 1
      %s29 = scalar_select %p28, 0, %s27
      %s30 = sadd.s32 1, %s21
      %s31 = scalar_select %p28, %s30, %s21
      %p32 = scmp.ge.s32.totalorder %s31, 2
      %s33 = scalar_select %p32, 0, %s31
      %s34 = ssub.s32 %s21, %s33
      %s35 = ssub.s32 %s22, %s29
      %s36 = sor.u32 %s34, %s35
      %p37 = scmp.eq.s32.totalorder %s36, 0
      %s39 = sadd.s32 %s38, 1
      %s40 = scalar_select %p37, %s38, %s39
      %p43 = pneg %p37
      %p44 = scmp.eq.s32.totalorder %s14, 1
      %p45 = por %p43, %p44
      %p46 = scmp.ne.s32.totalorder %s38, %s41
      %p47 = scmp.eq.s32.totalorder %s14, 0
      %p48 = por %p46, %p47
      %p49 = scmp.ne.s32.totalorder %s38, %s41
      %p50 = scmp.eq.s32.totalorder %s19, 1
      %p51 = por %p49, %p50
      %p52 = scmp.ne.s32.totalorder %s41, %s42
      %p53 = scmp.eq.s32.totalorder %s19, 0
      %p54 = por %p52, %p53
      %p55 = scmp.ne.s32.totalorder %s41, %s42
      %p56 = scmp.eq.s32.totalorder %s20, 1
      %p57 = por %p55, %p56
      %p59 = scmp.ne.s32.totalorder %s42, %s58
      %p60 = scmp.eq.s32.totalorder %s20, 0
      %p61 = por %p59, %p60
      %s63 = sadd.s32 %s62, 1
      %p66 = scmp.eq.s32.totalorder %s14, 1
      %p67 = scmp.ne.s32.totalorder %s62, %s64
      %p68 = scmp.eq.s32.totalorder %s14, 0
      %p69 = por %p67, %p68
      %p70 = scmp.ne.s32.totalorder %s62, %s64
      %p71 = scmp.eq.s32.totalorder %s19, 1
      %p72 = por %p70, %p71
      %p73 = scmp.ne.s32.totalorder %s64, %s65
      %p74 = scmp.eq.s32.totalorder %s19, 0
      %p75 = por %p73, %p74
      %p76 = scmp.ne.s32.totalorder %s64, %s65
      %p77 = scmp.eq.s32.totalorder %s20, 1
      %p78 = por %p76, %p77
      %p80 = scmp.ne.s32.totalorder %s65, %s79
      %p81 = scmp.eq.s32.totalorder %s20, 0
      %p82 = por %p80, %p81
      %s83 = ssub.s32 %s21, %s33
      %s84 = ssub.s32 %s22, %s29
      %s85 = sor.u32 %s83, %s84
      %p86 = scmp.eq.s32.totalorder %s85, 0
      %s88 = sadd.s32 %s87, 1
      %s89 = scalar_select %p86, %s87, %s88
      %p92 = pneg %p86
      %p93 = scmp.eq.s32.totalorder %s14, 1
      %p94 = por %p92, %p93
      %p95 = scmp.ne.s32.totalorder %s87, %s90
      %p96 = scmp.eq.s32.totalorder %s14, 0
      %p97 = por %p95, %p96
      %p98 = scmp.ne.s32.totalorder %s87, %s90
      %p99 = scmp.eq.s32.totalorder %s19, 1
      %p100 = por %p98, %p99
      %p101 = scmp.ne.s32.totalorder %s90, %s91
      %p102 = scmp.eq.s32.totalorder %s19, 0
      %p103 = por %p101, %p102
      %p104 = scmp.ne.s32.totalorder %s90, %s91
      %p105 = scmp.eq.s32.totalorder %s20, 1
      %p106 = por %p104, %p105
      %p108 = scmp.ne.s32.totalorder %s91, %s107
      %p109 = scmp.eq.s32.totalorder %s20, 0
      %p110 = por %p108, %p109
      %p111 = scmp.le.s32.totalorder 1, %s14
      %p112 = scmp.lt.s32.totalorder %s14, 3
      %p113 = pnand %p111, %p112
      %p114 = pneg %p113
      // Predicated region
      $region9: #{tpu_custom_call.1} parent=5 // pred_check
        _
      $region10: #{tpu_custom_call.1} parent=5 // pred_check_branch
        %116 = sbr.rel (%p113) target = $region12
      $region11: #{tpu_custom_call.1} parent=5 // pred_region
        %s117 = ssub.s32 %s14, 1
        // Predicated region
        $region13: #{tpu_custom_call.1} parent=11 // pred_check
          %p118 = pneg %p75
        $region14: #{tpu_custom_call.1} parent=11 // pred_check_branch
          %120 = sbr.rel (%p118) target = $region16
        $region15: #{tpu_custom_call.1} parent=11 // pred_region
          _
        $region16: #{tpu_custom_call.1} parent=11 // pred_fallthru
          _
      $region12: #{tpu_custom_call.1} parent=5 // pred_fallthru
        _
      %p121 = scmp.lt.s32.totalorder %s14, 2
      // Predicated region
      $region17: #{tpu_custom_call.1} parent=5 // pred_check
        %p122 = pneg %p121
      $region18: #{tpu_custom_call.1} parent=5 // pred_check_branch
        %124 = sbr.rel (%p122) target = $region20
      $region19: #{tpu_custom_call.1} parent=5 // pred_region
        // Predicated region
        $region21: #{tpu_custom_call.1} parent=19 // pred_check
          %p125 = pneg %p48
        $region22: #{tpu_custom_call.1} parent=19 // pred_check_branch
          %127 = sbr.rel (%p125) target = $region24
        $region23: #{tpu_custom_call.1} parent=19 // pred_region
          %s128 = sand.u32 %s38, 1
          %s129 = scalar_lea.sflag [#allocation5], %s128
          %s130 = sand.u32 %s38, 1
          %s131 = smul.addr %s130, 64
          %s132 = scalar_lea.vmem [#allocation4], %s131
          %134 = vsyncadd %s129, 0
          %s135 = smul.addr %s22, 2
          %s136 = smul.addr %s21, 8
          %s137 = sadd.s32 %s135, %s136
          %s138 = smul.addr %s137, 8
          %s139 = scalar_lea.hbm %s0, %s138
          %s140 = sshll.u32 %s139, 4
          %s141 = int_to_ptr.hbm [resolvable:$true] %s140
          %s142 = sshll.u32 %s132, 4
          %s143 = int_to_ptr.vmem [resolvable:$true] %s142
          %148 = dma.hbm_to_vmem [thread:$0]  %s141, 1024, %s143, %s129, 256, 256, 16
        $region24: #{tpu_custom_call.1} parent=19 // pred_fallthru
          _
      $region20: #{tpu_custom_call.1} parent=5 // pred_fallthru
        _
      %p149 = scmp.le.s32.totalorder 1, %s14
      %p150 = scmp.lt.s32.totalorder %s14, 3
      %p151 = pnand %p149, %p150
      %p152 = pneg %p151
      // Predicated region
      $region25: #{tpu_custom_call.1} parent=5 // pred_check
        _
      $region26: #{tpu_custom_call.1} parent=5 // pred_check_branch
        %154 = sbr.rel (%p151) target = $region28
      $region27: #{tpu_custom_call.1} parent=5 // pred_region
        %s155 = ssub.s32 %s14, 1
        %s156 = sand.u32 %s41, 1
        %s157 = scalar_lea.sflag [#allocation5], %s156
        %s158 = sand.u32 %s41, 1
        %s159 = smul.addr %s158, 64
        %s160 = scalar_lea.vmem [#allocation4], %s159
        // Predicated region
        $region29: #{tpu_custom_call.1} parent=27 // pred_check
          %p161 = pneg %p54
        $region30: #{tpu_custom_call.1} parent=27 // pred_check_branch
          %163 = sbr.rel (%p161) target = $region32
        $region31: #{tpu_custom_call.1} parent=27 // pred_region
          %165 = dma.done %s157, 1024
        $region32: #{tpu_custom_call.1} parent=27 // pred_fallthru
          _
        %s166 = sand.u32 %s41, 1
        %s167 = scalar_lea.sflag [#allocation5], %s166
        %s168 = sand.u32 %s41, 1
        %s169 = smul.addr %s168, 64
        %s170 = scalar_lea.vmem [#allocation4], %s169
        %p171 = pneg %p54
        %p172 = pneg %p51
        %p173 = pneg %p75
        %p174 = pneg %p72
        %p175 = pneg %p103
        %p176 = pneg %p100
        %s177 = sand.u32 %s90, 1
        %s178 = scalar_lea.sflag [#allocation6], %s177
        %s179 = sand.u32 %s90, 1
        %s180 = smul.addr %s179, 1024
        %s181 = scalar_lea.vmem [#allocation7], %s180
        %s182 = smul.u32 8, %s24
        %vm183 = vcmask 1044344
        %184 = vst.msk [vmem:[#allocation2] sm:$0xf] %vm183, 0.0
        %185 = vst.msk [vmem:[#allocation2 + $0x10] sm:$0xf] %vm183, 0.0
        %186 = vst.msk [vmem:[#allocation2 + $0x20] sm:$0xf] %vm183, 0.0
        %187 = vst.msk [vmem:[#allocation2 + $0x30] sm:$0xf] %vm183, 0.0
        %188 = vst.msk [vmem:[#allocation2 + $0x40] sm:$0xf] %vm183, 0.0
        %189 = vst.msk [vmem:[#allocation2 + $0x50] sm:$0xf] %vm183, 0.0
        %190 = vst.msk [vmem:[#allocation2 + $0x60] sm:$0xf] %vm183, 0.0
        %191 = vst.msk [vmem:[#allocation2 + $0x70] sm:$0xf] %vm183, 0.0
        %vm192 = vcmask 134144
        %193 = vst.msk [vmem:[#allocation2 + $0xc] sm:$0xf] %vm192, 0.0
        %194 = vst.msk [vmem:[#allocation2 + $0x1c] sm:$0xf] %vm192, 0.0
        %195 = vst.msk [vmem:[#allocation2 + $0x2c] sm:$0xf] %vm192, 0.0
        %196 = vst.msk [vmem:[#allocation2 + $0x3c] sm:$0xf] %vm192, 0.0
        %197 = vst.msk [vmem:[#allocation2 + $0x4c] sm:$0xf] %vm192, 0.0
        %198 = vst.msk [vmem:[#allocation2 + $0x5c] sm:$0xf] %vm192, 0.0
        %199 = vst.msk [vmem:[#allocation2 + $0x6c] sm:$0xf] %vm192, 0.0
        %200 = vst.msk [vmem:[#allocation2 + $0x7c] sm:$0xf] %vm192, 0.0
        %v201 = vld [vmem:[%s160] ss:$8 sm:$0x3]
        %s202 = scalar_lea.vmem %s160, 16 [#allocation4]
        %v203 = vld [vmem:[%s202] ss:$8 sm:$0x3]
        %s204 = scalar_lea.vmem %s160, 32 [#allocation4]
        %v205 = vld [vmem:[%s204] ss:$8 sm:$0x3]
        %s206 = scalar_lea.vmem %s160, 48 [#allocation4]
        %v207 = vld [vmem:[%s206] ss:$8 sm:$0x3]
        %212 = vst [vmem:[#allocation1] ss:$4 sm:$0xff] %v201
        %s213 = scalar_lea.vmem [#allocation1], 1
        %214 = vst [vmem:[%s213] ss:$4 sm:$0xff] %v203
        %s215 = scalar_lea.vmem [#allocation1], 2
        %216 = vst [vmem:[%s215] ss:$4 sm:$0xff] %v205
        %s217 = scalar_lea.vmem [#allocation1], 3
        %218 = vst [vmem:[%s217] ss:$4 sm:$0xff] %v207
        %v219 = vld [vmem:[#allocation1] sm:$0xff]
        %221 = vst [vmem:[#allocation2 + $0x4] sm:$0xff] %v219
        %s222 = scalar_lea.vmem %s160, 1 [#allocation4]
        %v223 = vld [vmem:[%s222] ss:$8 sm:$0x3]
        %s224 = scalar_lea.vmem %s160, 17 [#allocation4]
        %v225 = vld [vmem:[%s224] ss:$8 sm:$0x3]
        %s226 = scalar_lea.vmem %s160, 33 [#allocation4]
        %v227 = vld [vmem:[%s226] ss:$8 sm:$0x3]
        %s228 = scalar_lea.vmem %s160, 49 [#allocation4]
        %v229 = vld [vmem:[%s228] ss:$8 sm:$0x3]
        %234 = vst [vmem:[#allocation1] ss:$4 sm:$0xff] %v223
        %s235 = scalar_lea.vmem [#allocation1], 1
        %236 = vst [vmem:[%s235] ss:$4 sm:$0xff] %v225
        %s237 = scalar_lea.vmem [#allocation1], 2
        %238 = vst [vmem:[%s237] ss:$4 sm:$0xff] %v227
        %s239 = scalar_lea.vmem [#allocation1], 3
        %240 = vst [vmem:[%s239] ss:$4 sm:$0xff] %v229
        %v241 = vld [vmem:[#allocation1] sm:$0xff]
        %s243 = scalar_lea.vmem [#allocation2], 16
        %244 = vst [vmem:[%s243 + $0x4] sm:$0xff] %v241
        %s245 = scalar_lea.vmem %s160, 2 [#allocation4]
        %v246 = vld [vmem:[%s245] ss:$8 sm:$0x3]
        %s247 = scalar_lea.vmem %s160, 18 [#allocation4]
        %v248 = vld [vmem:[%s247] ss:$8 sm:$0x3]
        %s249 = scalar_lea.vmem %s160, 34 [#allocation4]
        %v250 = vld [vmem:[%s249] ss:$8 sm:$0x3]
        %s251 = scalar_lea.vmem %s160, 50 [#allocation4]
        %v252 = vld [vmem:[%s251] ss:$8 sm:$0x3]
        %257 = vst [vmem:[#allocation1] ss:$4 sm:$0xff] %v246
        %s258 = scalar_lea.vmem [#allocation1], 1
        %259 = vst [vmem:[%s258] ss:$4 sm:$0xff] %v248
        %s260 = scalar_lea.vmem [#allocation1], 2
        %261 = vst [vmem:[%s260] ss:$4 sm:$0xff] %v250
        %s262 = scalar_lea.vmem [#allocation1], 3
        %263 = vst [vmem:[%s262] ss:$4 sm:$0xff] %v252
        %v264 = vld [vmem:[#allocation1] sm:$0xff]
        %s266 = scalar_lea.vmem [#allocation2], 32
        %267 = vst [vmem:[%s266 + $0x4] sm:$0xff] %v264
        %s268 = scalar_lea.vmem %s160, 3 [#allocation4]
        %v269 = vld [vmem:[%s268] ss:$8 sm:$0x3]
        %s270 = scalar_lea.vmem %s160, 19 [#allocation4]
        %v271 = vld [vmem:[%s270] ss:$8 sm:$0x3]
        %s272 = scalar_lea.vmem %s160, 35 [#allocation4]
        %v273 = vld [vmem:[%s272] ss:$8 sm:$0x3]
        %s274 = scalar_lea.vmem %s160, 51 [#allocation4]
        %v275 = vld [vmem:[%s274] ss:$8 sm:$0x3]
        %280 = vst [vmem:[#allocation1] ss:$4 sm:$0xff] %v269
        %s281 = scalar_lea.vmem [#allocation1], 1
        %282 = vst [vmem:[%s281] ss:$4 sm:$0xff] %v271
        %s283 = scalar_lea.vmem [#allocation1], 2
        %284 = vst [vmem:[%s283] ss:$4 sm:$0xff] %v273
        %s285 = scalar_lea.vmem [#allocation1], 3
        %286 = vst [vmem:[%s285] ss:$4 sm:$0xff] %v275
        %v287 = vld [vmem:[#allocation1] sm:$0xff]
        %s289 = scalar_lea.vmem [#allocation2], 48
        %290 = vst [vmem:[%s289 + $0x4] sm:$0xff] %v287
        %s291 = scalar_lea.vmem %s160, 4 [#allocation4]
        %v292 = vld [vmem:[%s291] ss:$8 sm:$0x3]
        %s293 = scalar_lea.vmem %s160, 20 [#allocation4]
        %v294 = vld [vmem:[%s293] ss:$8 sm:$0x3]
        %s295 = scalar_lea.vmem %s160, 36 [#allocation4]
        %v296 = vld [vmem:[%s295] ss:$8 sm:$0x3]
        %s297 = scalar_lea.vmem %s160, 52 [#allocation4]
        %v298 = vld [vmem:[%s297] ss:$8 sm:$0x3]
        %303 = vst [vmem:[#allocation1] ss:$4 sm:$0xff] %v292
        %s304 = scalar_lea.vmem [#allocation1], 1
        %305 = vst [vmem:[%s304] ss:$4 sm:$0xff] %v294
        %s306 = scalar_lea.vmem [#allocation1], 2
        %307 = vst [vmem:[%s306] ss:$4 sm:$0xff] %v296
        %s308 = scalar_lea.vmem [#allocation1], 3
        %309 = vst [vmem:[%s308] ss:$4 sm:$0xff] %v298
        %v310 = vld [vmem:[#allocation1] sm:$0xff]
        %s312 = scalar_lea.vmem [#allocation2], 64
        %313 = vst [vmem:[%s312 + $0x4] sm:$0xff] %v310
        %s314 = scalar_lea.vmem %s160, 5 [#allocation4]
        %v315 = vld [vmem:[%s314] ss:$8 sm:$0x3]
        %s316 = scalar_lea.vmem %s160, 21 [#allocation4]
        %v317 = vld [vmem:[%s316] ss:$8 sm:$0x3]
        %s318 = scalar_lea.vmem %s160, 37 [#allocation4]
        %v319 = vld [vmem:[%s318] ss:$8 sm:$0x3]
        %s320 = scalar_lea.vmem %s160, 53 [#allocation4]
        %v321 = vld [vmem:[%s320] ss:$8 sm:$0x3]
        %326 = vst [vmem:[#allocation1] ss:$4 sm:$0xff] %v315
        %s327 = scalar_lea.vmem [#allocation1], 1
        %328 = vst [vmem:[%s327] ss:$4 sm:$0xff] %v317
        %s329 = scalar_lea.vmem [#allocation1], 2
        %330 = vst [vmem:[%s329] ss:$4 sm:$0xff] %v319
        %s331 = scalar_lea.vmem [#allocation1], 3
        %332 = vst [vmem:[%s331] ss:$4 sm:$0xff] %v321
        %v333 = vld [vmem:[#allocation1] sm:$0xff]
        %s335 = scalar_lea.vmem [#allocation2], 80
        %336 = vst [vmem:[%s335 + $0x4] sm:$0xff] %v333
        %s337 = scalar_lea.vmem %s160, 6 [#allocation4]
        %v338 = vld [vmem:[%s337] ss:$8 sm:$0x3]
        %s339 = scalar_lea.vmem %s160, 22 [#allocation4]
        %v340 = vld [vmem:[%s339] ss:$8 sm:$0x3]
        %s341 = scalar_lea.vmem %s160, 38 [#allocation4]
        %v342 = vld [vmem:[%s341] ss:$8 sm:$0x3]
        %s343 = scalar_lea.vmem %s160, 54 [#allocation4]
        %v344 = vld [vmem:[%s343] ss:$8 sm:$0x3]
        %349 = vst [vmem:[#allocation1] ss:$4 sm:$0xff] %v338
        %s350 = scalar_lea.vmem [#allocation1], 1
        %351 = vst [vmem:[%s350] ss:$4 sm:$0xff] %v340
        %s352 = scalar_lea.vmem [#allocation1], 2
        %353 = vst [vmem:[%s352] ss:$4 sm:$0xff] %v342
        %s354 = scalar_lea.vmem [#allocation1], 3
        %355 = vst [vmem:[%s354] ss:$4 sm:$0xff] %v344
        %v356 = vld [vmem:[#allocation1] sm:$0xff]
        %s358 = scalar_lea.vmem [#allocation2], 96
        %359 = vst [vmem:[%s358 + $0x4] sm:$0xff] %v356
        %s360 = scalar_lea.vmem %s160, 7 [#allocation4]
        %v361 = vld [vmem:[%s360] ss:$8 sm:$0x3]
        %s362 = scalar_lea.vmem %s160, 23 [#allocation4]
        %v363 = vld [vmem:[%s362] ss:$8 sm:$0x3]
        %s364 = scalar_lea.vmem %s160, 39 [#allocation4]
        %v365 = vld [vmem:[%s364] ss:$8 sm:$0x3]
        %s366 = scalar_lea.vmem %s160, 55 [#allocation4]
        %v367 = vld [vmem:[%s366] ss:$8 sm:$0x3]
        %372 = vst [vmem:[#allocation1] ss:$4 sm:$0xff] %v361
        %s373 = scalar_lea.vmem [#allocation1], 1
        %374 = vst [vmem:[%s373] ss:$4 sm:$0xff] %v363
        %s375 = scalar_lea.vmem [#allocation1], 2
        %376 = vst [vmem:[%s375] ss:$4 sm:$0xff] %v365
        %s377 = scalar_lea.vmem [#allocation1], 3
        %378 = vst [vmem:[%s377] ss:$4 sm:$0xff] %v367
        %v379 = vld [vmem:[#allocation1] sm:$0xff]
        %s381 = scalar_lea.vmem [#allocation2], 112
        %382 = vst [vmem:[%s381 + $0x4] sm:$0xff] %v379
        %v383 = vlaneseq
        %v384 = vand.u32 %v383, 127
        %v385 = vadd.s32 %v384, 128
        %vm386 = vcmp.lt.s32.totalorder %v384, 0
        %v387 = vsub.s32 0, %v384
        %v388 = vsel %vm386, %v387, %v384
        %v389 = vshrl.u32 %v388, 4
        %v390 = vand.u32 %v388, 15
        %v391 = vsub.s32 0, %v390
        %v392 = vsel %vm386, %v391, %v390
        %vm393 = vcmp.lt.s32.totalorder %v385, 0
        %v394 = vsub.s32 0, %v385
        %v395 = vsel %vm393, %v394, %v385
        %v396 = vshrl.u32 %v395, 4
        %v397 = vand.u32 %v395, 15
        %v398 = vsub.s32 0, %v397
        %v399 = vsel %vm393, %v398, %v397
        %vm400 = vcmp.ne.s32.totalorder %v392, 0
        %vm401 = vcmp.ne.s32.totalorder %v399, 0
        %vm402 = vcmp.lt.s32.totalorder %v392, 0
        %vm403 = vcmp.lt.s32.totalorder %v399, 0
        %vm404 = vmand %vm402, %vm400
        %vm405 = vmand %vm403, %vm401
        %v406 = vadd.s32 %v392, 16
        %v407 = vadd.s32 %v399, 16
        %v408 = vsel %vm404, %v406, %v392
        %v409 = vsel %vm405, %v407, %v399
        %vm410 = vcmp.ge.s32.totalorder %v408, 1
        %vm411 = vcmp.ge.s32.totalorder %v409, 1
        %vm412 = vcmp.le.s32.totalorder %v408, 14
        %vm413 = vcmp.le.s32.totalorder %v409, 14
        %v414 = vld [vmem:[#allocation2] sm:$0xff]
        %v415 = vld [vmem:[#allocation2 + $0x8] sm:$0xf]
        %v416 = vld [vmem:[#allocation2 + $0x10] sm:$0xff]
        %v417 = vld [vmem:[#allocation2 + $0x18] sm:$0xf]
        %v418 = vld [vmem:[#allocation2 + $0x20] sm:$0xff]
        %v419 = vld [vmem:[#allocation2 + $0x28] sm:$0xf]
        %v420 = vld [vmem:[#allocation2 + $0x30] sm:$0xff]
        %v421 = vld [vmem:[#allocation2 + $0x38] sm:$0xf]
        %v422 = vld [vmem:[#allocation2 + $0x40] sm:$0xff]
        %v423 = vld [vmem:[#allocation2 + $0x48] sm:$0xf]
        %v424 = vld [vmem:[#allocation2 + $0x50] sm:$0xff]
        %v425 = vld [vmem:[#allocation2 + $0x58] sm:$0xf]
        %v426 = vld [vmem:[#allocation2 + $0x60] sm:$0xff]
        %v427 = vld [vmem:[#allocation2 + $0x68] sm:$0xf]
        %v428 = vld [vmem:[#allocation2 + $0x70] sm:$0xff]
        %v429 = vld [vmem:[#allocation2 + $0x78] sm:$0xf]
        %v430 = vsel %vm410, 1, 0
        %v431 = vsel %vm411, 1, 0
        %vm432 = vcmp.eq.s32.totalorder %v430, 1
        %vm433 = vcmp.eq.s32.totalorder %v431, 1
        %450 = vst [vmem:[#allocation1] ss:$2 sm:$0xff] %v414
        %s451 = scalar_lea.vmem [#allocation1], 16
        %452 = vst [vmem:[%s451] ss:$2 sm:$0xff] %v415
        %v453 = vld.sshfl [vmem:[#allocation1] sm:$0xff pattern:$0x75316420]
        %v454 = vld.sshfl [vmem:[#allocation1 + $0x8] sm:$0xff pattern:$0x75316420]
        %v455 = vld.sshfl [vmem:[#allocation1 + $0x10] sm:$0xff pattern:$0x75316420]
        %s456 = scalar_lea.vmem [#allocation1], 32
        %457 = vst [vmem:[%s456] ss:$2 sm:$0xff] %v416
        %s458 = scalar_lea.vmem [#allocation1], 48
        %459 = vst [vmem:[%s458] ss:$2 sm:$0xff] %v417
        %v460 = vld.sshfl [vmem:[#allocation1 + $0x20] sm:$0xff pattern:$0x75316420]
        %v461 = vld.sshfl [vmem:[#allocation1 + $0x28] sm:$0xff pattern:$0x75316420]
        %v462 = vld.sshfl [vmem:[#allocation1 + $0x30] sm:$0xff pattern:$0x75316420]
        %463 = vst [vmem:[#allocation1] ss:$2 sm:$0xff] %v418
        %464 = vst [vmem:[%s451] ss:$2 sm:$0xff] %v419
        %v465 = vld.sshfl [vmem:[#allocation1] sm:$0xff pattern:$0x75316420]
        %v466 = vld.sshfl [vmem:[#allocation1 + $0x8] sm:$0xff pattern:$0x75316420]
        %v467 = vld.sshfl [vmem:[#allocation1 + $0x10] sm:$0xff pattern:$0x75316420]
        %468 = vst [vmem:[%s456] ss:$2 sm:$0xff] %v420
        %469 = vst [vmem:[%s458] ss:$2 sm:$0xff] %v421
        %v470 = vld.sshfl [vmem:[#allocation1 + $0x20] sm:$0xff pattern:$0x75316420]
        %v471 = vld.sshfl [vmem:[#allocation1 + $0x28] sm:$0xff pattern:$0x75316420]
        %v472 = vld.sshfl [vmem:[#allocation1 + $0x30] sm:$0xff pattern:$0x75316420]
        %473 = vst [vmem:[#allocation1] ss:$2 sm:$0xff] %v422
        %474 = vst [vmem:[%s451] ss:$2 sm:$0xff] %v423
        %v475 = vld.sshfl [vmem:[#allocation1] sm:$0xff pattern:$0x75316420]
        %v476 = vld.sshfl [vmem:[#allocation1 + $0x8] sm:$0xff pattern:$0x75316420]
        %v477 = vld.sshfl [vmem:[#allocation1 + $0x10] sm:$0xff pattern:$0x75316420]
        %478 = vst [vmem:[%s456] ss:$2 sm:$0xff] %v424
        %479 = vst [vmem:[%s458] ss:$2 sm:$0xff] %v425
        %v480 = vld.sshfl [vmem:[#allocation1 + $0x20] sm:$0xff pattern:$0x75316420]
        %v481 = vld.sshfl [vmem:[#allocation1 + $0x28] sm:$0xff pattern:$0x75316420]
        %v482 = vld.sshfl [vmem:[#allocation1 + $0x30] sm:$0xff pattern:$0x75316420]
        %483 = vst [vmem:[#allocation1] ss:$2 sm:$0xff] %v426
        %484 = vst [vmem:[%s451] ss:$2 sm:$0xff] %v427
        %v485 = vld.sshfl [vmem:[#allocation1] sm:$0xff pattern:$0x75316420]
        %v486 = vld.sshfl [vmem:[#allocation1 + $0x8] sm:$0xff pattern:$0x75316420]
        %v487 = vld.sshfl [vmem:[#allocation1 + $0x10] sm:$0xff pattern:$0x75316420]
        %488 = vst [vmem:[%s456] ss:$2 sm:$0xff] %v428
        %489 = vst [vmem:[%s458] ss:$2 sm:$0xff] %v429
        %v490 = vld.sshfl [vmem:[#allocation1 + $0x20] sm:$0xff pattern:$0x75316420]
        %v491 = vld.sshfl [vmem:[#allocation1 + $0x28] sm:$0xff pattern:$0x75316420]
        %v492 = vld.sshfl [vmem:[#allocation1 + $0x30] sm:$0xff pattern:$0x75316420]
        %493 = vrot.lane.b32.xlu0 %v453, 17
        %v494 = vpop.permute.xlu0 %493
        %495 = vrot.lane.b32.xlu0 %v454, 17
        %v496 = vpop.permute.xlu0 %495
        %497 = vrot.lane.b32.xlu0 %v455, 17
        %v498 = vpop.permute.xlu0 %497
        %499 = vrot.lane.b32.xlu0 %v460, 17
        %v500 = vpop.permute.xlu0 %499
        %501 = vrot.lane.b32.xlu0 %v461, 17
        %v502 = vpop.permute.xlu0 %501
        %503 = vrot.lane.b32.xlu0 %v462, 17
        %v504 = vpop.permute.xlu0 %503
        %505 = vrot.lane.b32.xlu0 %v465, 17
        %v506 = vpop.permute.xlu0 %505
        %507 = vrot.lane.b32.xlu0 %v466, 17
        %v508 = vpop.permute.xlu0 %507
        %509 = vrot.lane.b32.xlu0 %v467, 17
        %v510 = vpop.permute.xlu0 %509
        %511 = vrot.lane.b32.xlu0 %v470, 17
        %v512 = vpop.permute.xlu0 %511
        %513 = vrot.lane.b32.xlu0 %v471, 17
        %v514 = vpop.permute.xlu0 %513
        %515 = vrot.lane.b32.xlu0 %v472, 17
        %v516 = vpop.permute.xlu0 %515
        %517 = vrot.lane.b32.xlu0 %v475, 17
        %v518 = vpop.permute.xlu0 %517
        %519 = vrot.lane.b32.xlu0 %v476, 17
        %v520 = vpop.permute.xlu0 %519
        %521 = vrot.lane.b32.xlu0 %v477, 17
        %v522 = vpop.permute.xlu0 %521
        %523 = vrot.lane.b32.xlu0 %v480, 17
        %v524 = vpop.permute.xlu0 %523
        %525 = vrot.lane.b32.xlu0 %v481, 17
        %v526 = vpop.permute.xlu0 %525
        %527 = vrot.lane.b32.xlu0 %v482, 17
        %v528 = vpop.permute.xlu0 %527
        %529 = vrot.lane.b32.xlu0 %v485, 17
        %v530 = vpop.permute.xlu0 %529
        %531 = vrot.lane.b32.xlu0 %v486, 17
        %v532 = vpop.permute.xlu0 %531
        %533 = vrot.lane.b32.xlu0 %v487, 17
        %v534 = vpop.permute.xlu0 %533
        %535 = vrot.lane.b32.xlu0 %v490, 17
        %v536 = vpop.permute.xlu0 %535
        %537 = vrot.lane.b32.xlu0 %v491, 17
        %v538 = vpop.permute.xlu0 %537
        %539 = vrot.lane.b32.xlu0 %v492, 17
        %v540 = vpop.permute.xlu0 %539
        %vm541 = vcmask 138240
        %v542 = vsel %vm541, %v494, %v496
        %v543 = vsel %vm541, %v496, %v498
        %v544 = vsel %vm541, %v500, %v502
        %v545 = vsel %vm541, %v502, %v504
        %v546 = vsel %vm541, %v506, %v508
        %v547 = vsel %vm541, %v508, %v510
        %v548 = vsel %vm541, %v512, %v514
        %v549 = vsel %vm541, %v514, %v516
        %v550 = vsel %vm541, %v518, %v520
        %v551 = vsel %vm541, %v520, %v522
        %v552 = vsel %vm541, %v524, %v526
        %v553 = vsel %vm541, %v526, %v528
        %v554 = vsel %vm541, %v530, %v532
        %v555 = vsel %vm541, %v532, %v534
        %v556 = vsel %vm541, %v536, %v538
        %v557 = vsel %vm541, %v538, %v540
        %v574 = vsel %vm432, %v542, 0.0
        %v575 = vsel %vm433, %v543, 0.0
        %v576 = vsel %vm432, %v544, 0.0
        %v577 = vsel %vm433, %v545, 0.0
        %v578 = vsel %vm432, %v546, 0.0
        %v579 = vsel %vm433, %v547, 0.0
        %v580 = vsel %vm432, %v548, 0.0
        %v581 = vsel %vm433, %v549, 0.0
        %v582 = vsel %vm432, %v550, 0.0
        %v583 = vsel %vm433, %v551, 0.0
        %v584 = vsel %vm432, %v552, 0.0
        %v585 = vsel %vm433, %v553, 0.0
        %v586 = vsel %vm432, %v554, 0.0
        %v587 = vsel %vm433, %v555, 0.0
        %v588 = vsel %vm432, %v556, 0.0
        %v589 = vsel %vm433, %v557, 0.0
        %590 = vst [vmem:[#allocation3] sm:$0xf] %v574
        %591 = vst [vmem:[#allocation3 + $0x8] sm:$0xf] %v575
        %592 = vst [vmem:[#allocation3 + $0x50] sm:$0xf] %v576
        %593 = vst [vmem:[#allocation3 + $0x58] sm:$0xf] %v577
        %594 = vst [vmem:[#allocation3 + $0xa0] sm:$0xf] %v578
        %595 = vst [vmem:[#allocation3 + $0xa8] sm:$0xf] %v579
        %596 = vst [vmem:[#allocation3 + $0xf0] sm:$0xf] %v580
        %597 = vst [vmem:[#allocation3 + $0xf8] sm:$0xf] %v581
        %598 = vst [vmem:[#allocation3 + $0x140] sm:$0xf] %v582
        %599 = vst [vmem:[#allocation3 + $0x148] sm:$0xf] %v583
        %600 = vst [vmem:[#allocation3 + $0x190] sm:$0xf] %v584
        %601 = vst [vmem:[#allocation3 + $0x198] sm:$0xf] %v585
        %602 = vst [vmem:[#allocation3 + $0x1e0] sm:$0xf] %v586
        %603 = vst [vmem:[#allocation3 + $0x1e8] sm:$0xf] %v587
        %604 = vst [vmem:[#allocation3 + $0x230] sm:$0xf] %v588
        %605 = vst [vmem:[#allocation3 + $0x238] sm:$0xf] %v589
        %v606 = vld [vmem:[#allocation2] sm:$0xff]
        %v607 = vld [vmem:[#allocation2 + $0x8] sm:$0xf]
        %v608 = vld [vmem:[#allocation2 + $0x10] sm:$0xff]
        %v609 = vld [vmem:[#allocation2 + $0x18] sm:$0xf]
        %v610 = vld [vmem:[#allocation2 + $0x20] sm:$0xff]
        %v611 = vld [vmem:[#allocation2 + $0x28] sm:$0xf]
        %v612 = vld [vmem:[#allocation2 + $0x30] sm:$0xff]
        %v613 = vld [vmem:[#allocation2 + $0x38] sm:$0xf]
        %v614 = vld [vmem:[#allocation2 + $0x40] sm:$0xff]
        %v615 = vld [vmem:[#allocation2 + $0x48] sm:$0xf]
        %v616 = vld [vmem:[#allocation2 + $0x50] sm:$0xff]
        %v617 = vld [vmem:[#allocation2 + $0x58] sm:$0xf]
        %v618 = vld [vmem:[#allocation2 + $0x60] sm:$0xff]
        %v619 = vld [vmem:[#allocation2 + $0x68] sm:$0xf]
        %v620 = vld [vmem:[#allocation2 + $0x70] sm:$0xff]
        %v621 = vld [vmem:[#allocation2 + $0x78] sm:$0xf]
        %s638 = scalar_lea.vmem [#allocation1], 1
        %639 = vst [vmem:[%s638] ss:$2 sm:$0xff] %v606
        %s640 = scalar_lea.vmem [#allocation1], 17
        %641 = vst [vmem:[%s640] ss:$2 sm:$0xff] %v607
        %v642 = vld.sshfl [vmem:[#allocation1] sm:$0xff pattern:$0x75316420]
        %v643 = vld.sshfl [vmem:[#allocation1 + $0x8] sm:$0xff pattern:$0x75316420]
        %v644 = vld.sshfl [vmem:[#allocation1 + $0x10] sm:$0xff pattern:$0x75316420]
        %s645 = scalar_lea.vmem [#allocation1], 33
        %646 = vst [vmem:[%s645] ss:$2 sm:$0xff] %v608
        %s647 = scalar_lea.vmem [#allocation1], 49
        %648 = vst [vmem:[%s647] ss:$2 sm:$0xff] %v609
        %v649 = vld.sshfl [vmem:[#allocation1 + $0x20] sm:$0xff pattern:$0x75316420]
        %v650 = vld.sshfl [vmem:[#allocation1 + $0x28] sm:$0xff pattern:$0x75316420]
        %v651 = vld.sshfl [vmem:[#allocation1 + $0x30] sm:$0xff pattern:$0x75316420]
        %652 = vst [vmem:[%s638] ss:$2 sm:$0xff] %v610
        %653 = vst [vmem:[%s640] ss:$2 sm:$0xff] %v611
        %v654 = vld.sshfl [vmem:[#allocation1] sm:$0xff pattern:$0x75316420]
        %v655 = vld.sshfl [vmem:[#allocation1 + $0x8] sm:$0xff pattern:$0x75316420]
        %v656 = vld.sshfl [vmem:[#allocation1 + $0x10] sm:$0xff pattern:$0x75316420]
        %657 = vst [vmem:[%s645] ss:$2 sm:$0xff] %v612
        %658 = vst [vmem:[%s647] ss:$2 sm:$0xff] %v613
        %v659 = vld.sshfl [vmem:[#allocation1 + $0x20] sm:$0xff pattern:$0x75316420]
        %v660 = vld.sshfl [vmem:[#allocation1 + $0x28] sm:$0xff pattern:$0x75316420]
        %v661 = vld.sshfl [vmem:[#allocation1 + $0x30] sm:$0xff pattern:$0x75316420]
        %662 = vst [vmem:[%s638] ss:$2 sm:$0xff] %v614
        %663 = vst [vmem:[%s640] ss:$2 sm:$0xff] %v615
        %v664 = vld.sshfl [vmem:[#allocation1] sm:$0xff pattern:$0x75316420]
        %v665 = vld.sshfl [vmem:[#allocation1 + $0x8] sm:$0xff pattern:$0x75316420]
        %v666 = vld.sshfl [vmem:[#allocation1 + $0x10] sm:$0xff pattern:$0x75316420]
        %667 = vst [vmem:[%s645] ss:$2 sm:$0xff] %v616
        %668 = vst [vmem:[%s647] ss:$2 sm:$0xff] %v617
        %v669 = vld.sshfl [vmem:[#allocation1 + $0x20] sm:$0xff pattern:$0x75316420]
        %v670 = vld.sshfl [vmem:[#allocation1 + $0x28] sm:$0xff pattern:$0x75316420]
        %v671 = vld.sshfl [vmem:[#allocation1 + $0x30] sm:$0xff pattern:$0x75316420]
        %672 = vst [vmem:[%s638] ss:$2 sm:$0xff] %v618
        %673 = vst [vmem:[%s640] ss:$2 sm:$0xff] %v619
        %v674 = vld.sshfl [vmem:[#allocation1] sm:$0xff pattern:$0x75316420]
        %v675 = vld.sshfl [vmem:[#allocation1 + $0x8] sm:$0xff pattern:$0x75316420]
        %v676 = vld.sshfl [vmem:[#allocation1 + $0x10] sm:$0xff pattern:$0x75316420]
        %677 = vst [vmem:[%s645] ss:$2 sm:$0xff] %v620
        %678 = vst [vmem:[%s647] ss:$2 sm:$0xff] %v621
        %v679 = vld.sshfl [vmem:[#allocation1 + $0x20] sm:$0xff pattern:$0x75316420]
        %v680 = vld.sshfl [vmem:[#allocation1 + $0x28] sm:$0xff pattern:$0x75316420]
        %v681 = vld.sshfl [vmem:[#allocation1 + $0x30] sm:$0xff pattern:$0x75316420]
        %682 = vrot.lane.b32.xlu0 %v642, 16
        %v683 = vpop.permute.xlu0 %682
        %684 = vrot.lane.b32.xlu0 %v643, 16
        %v685 = vpop.permute.xlu0 %684
        %686 = vrot.lane.b32.xlu0 %v644, 16
        %v687 = vpop.permute.xlu0 %686
        %688 = vrot.lane.b32.xlu0 %v649, 16
        %v689 = vpop.permute.xlu0 %688
        %690 = vrot.lane.b32.xlu0 %v650, 16
        %v691 = vpop.permute.xlu0 %690
        %692 = vrot.lane.b32.xlu0 %v651, 16
        %v693 = vpop.permute.xlu0 %692
        %694 = vrot.lane.b32.xlu0 %v654, 16
        %v695 = vpop.permute.xlu0 %694
        %696 = vrot.lane.b32.xlu0 %v655, 16
        %v697 = vpop.permute.xlu0 %696
        %698 = vrot.lane.b32.xlu0 %v656, 16
        %v699 = vpop.permute.xlu0 %698
        %700 = vrot.lane.b32.xlu0 %v659, 16
        %v701 = vpop.permute.xlu0 %700
        %702 = vrot.lane.b32.xlu0 %v660, 16
        %v703 = vpop.permute.xlu0 %702
        %704 = vrot.lane.b32.xlu0 %v661, 16
        %v705 = vpop.permute.xlu0 %704
        %706 = vrot.lane.b32.xlu0 %v664, 16
        %v707 = vpop.permute.xlu0 %706
        %708 = vrot.lane.b32.xlu0 %v665, 16
        %v709 = vpop.permute.xlu0 %708
        %710 = vrot.lane.b32.xlu0 %v666, 16
        %v711 = vpop.permute.xlu0 %710
        %712 = vrot.lane.b32.xlu0 %v669, 16
        %v713 = vpop.permute.xlu0 %712
        %714 = vrot.lane.b32.xlu0 %v670, 16
        %v715 = vpop.permute.xlu0 %714
        %716 = vrot.lane.b32.xlu0 %v671, 16
        %v717 = vpop.permute.xlu0 %716
        %718 = vrot.lane.b32.xlu0 %v674, 16
        %v719 = vpop.permute.xlu0 %718
        %720 = vrot.lane.b32.xlu0 %v675, 16
        %v721 = vpop.permute.xlu0 %720
        %722 = vrot.lane.b32.xlu0 %v676, 16
        %v723 = vpop.permute.xlu0 %722
        %724 = vrot.lane.b32.xlu0 %v679, 16
        %v725 = vpop.permute.xlu0 %724
        %726 = vrot.lane.b32.xlu0 %v680, 16
        %v727 = vpop.permute.xlu0 %726
        %728 = vrot.lane.b32.xlu0 %v681, 16
        %v729 = vpop.permute.xlu0 %728
        %vm730 = vcmask 130048
        %v731 = vsel %vm730, %v683, %v685
        %v732 = vsel %vm730, %v685, %v687
        %v733 = vsel %vm730, %v689, %v691
        %v734 = vsel %vm730, %v691, %v693
        %v735 = vsel %vm730, %v695, %v697
        %v736 = vsel %vm730, %v697, %v699
        %v737 = vsel %vm730, %v701, %v703
        %v738 = vsel %vm730, %v703, %v705
        %v739 = vsel %vm730, %v707, %v709
        %v740 = vsel %vm730, %v709, %v711
        %v741 = vsel %vm730, %v713, %v715
        %v742 = vsel %vm730, %v715, %v717
        %v743 = vsel %vm730, %v719, %v721
        %v744 = vsel %vm730, %v721, %v723
        %v745 = vsel %vm730, %v725, %v727
        %v746 = vsel %vm730, %v727, %v729
        %763 = vst [vmem:[#allocation3] sm:$0xf0] %v731
        %764 = vst [vmem:[#allocation3 + $0x8] sm:$0xf0] %v732
        %765 = vst [vmem:[#allocation3 + $0x50] sm:$0xf0] %v733
        %766 = vst [vmem:[#allocation3 + $0x58] sm:$0xf0] %v734
        %767 = vst [vmem:[#allocation3 + $0xa0] sm:$0xf0] %v735
        %768 = vst [vmem:[#allocation3 + $0xa8] sm:$0xf0] %v736
        %769 = vst [vmem:[#allocation3 + $0xf0] sm:$0xf0] %v737
        %770 = vst [vmem:[#allocation3 + $0xf8] sm:$0xf0] %v738
        %771 = vst [vmem:[#allocation3 + $0x140] sm:$0xf0] %v739
        %772 = vst [vmem:[#allocation3 + $0x148] sm:$0xf0] %v740
        %773 = vst [vmem:[#allocation3 + $0x190] sm:$0xf0] %v741
        %774 = vst [vmem:[#allocation3 + $0x198] sm:$0xf0] %v742
        %775 = vst [vmem:[#allocation3 + $0x1e0] sm:$0xf0] %v743
        %776 = vst [vmem:[#allocation3 + $0x1e8] sm:$0xf0] %v744
        %777 = vst [vmem:[#allocation3 + $0x230] sm:$0xf0] %v745
        %778 = vst [vmem:[#allocation3 + $0x238] sm:$0xf0] %v746
        %v779 = vld [vmem:[#allocation2] sm:$0xff]
        %v780 = vld [vmem:[#allocation2 + $0x8] sm:$0xf]
        %v781 = vld [vmem:[#allocation2 + $0x10] sm:$0xff]
        %v782 = vld [vmem:[#allocation2 + $0x18] sm:$0xf]
        %v783 = vld [vmem:[#allocation2 + $0x20] sm:$0xff]
        %v784 = vld [vmem:[#allocation2 + $0x28] sm:$0xf]
        %v785 = vld [vmem:[#allocation2 + $0x30] sm:$0xff]
        %v786 = vld [vmem:[#allocation2 + $0x38] sm:$0xf]
        %v787 = vld [vmem:[#allocation2 + $0x40] sm:$0xff]
        %v788 = vld [vmem:[#allocation2 + $0x48] sm:$0xf]
        %v789 = vld [vmem:[#allocation2 + $0x50] sm:$0xff]
        %v790 = vld [vmem:[#allocation2 + $0x58] sm:$0xf]
        %v791 = vld [vmem:[#allocation2 + $0x60] sm:$0xff]
        %v792 = vld [vmem:[#allocation2 + $0x68] sm:$0xf]
        %v793 = vld [vmem:[#allocation2 + $0x70] sm:$0xff]
        %v794 = vld [vmem:[#allocation2 + $0x78] sm:$0xf]
        %v795 = vsel %vm412, 1, 0
        %v796 = vsel %vm413, 1, 0
        %vm797 = vcmp.eq.s32.totalorder %v795, 1
        %vm798 = vcmp.eq.s32.totalorder %v796, 1
        %815 = vst [vmem:[#allocation1] ss:$2 sm:$0xff] %v779
        %s816 = scalar_lea.vmem [#allocation1], 16
        %817 = vst [vmem:[%s816] ss:$2 sm:$0xff] %v780
        %v818 = vld.sshfl [vmem:[#allocation1] sm:$0xff pattern:$0x75316420]
        %v819 = vld.sshfl [vmem:[#allocation1 + $0x8] sm:$0xff pattern:$0x75316420]
        %v820 = vld.sshfl [vmem:[#allocation1 + $0x10] sm:$0xff pattern:$0x75316420]
        %s821 = scalar_lea.vmem [#allocation1], 32
        %822 = vst [vmem:[%s821] ss:$2 sm:$0xff] %v781
        %s823 = scalar_lea.vmem [#allocation1], 48
        %824 = vst [vmem:[%s823] ss:$2 sm:$0xff] %v782
        %v825 = vld.sshfl [vmem:[#allocation1 + $0x20] sm:$0xff pattern:$0x75316420]
        %v826 = vld.sshfl [vmem:[#allocation1 + $0x28] sm:$0xff pattern:$0x75316420]
        %v827 = vld.sshfl [vmem:[#allocation1 + $0x30] sm:$0xff pattern:$0x75316420]
        %828 = vst [vmem:[#allocation1] ss:$2 sm:$0xff] %v783
        %829 = vst [vmem:[%s816] ss:$2 sm:$0xff] %v784
        %v830 = vld.sshfl [vmem:[#allocation1] sm:$0xff pattern:$0x75316420]
        %v831 = vld.sshfl [vmem:[#allocation1 + $0x8] sm:$0xff pattern:$0x75316420]
        %v832 = vld.sshfl [vmem:[#allocation1 + $0x10] sm:$0xff pattern:$0x75316420]
        %833 = vst [vmem:[%s821] ss:$2 sm:$0xff] %v785
        %834 = vst [vmem:[%s823] ss:$2 sm:$0xff] %v786
        %v835 = vld.sshfl [vmem:[#allocation1 + $0x20] sm:$0xff pattern:$0x75316420]
        %v836 = vld.sshfl [vmem:[#allocation1 + $0x28] sm:$0xff pattern:$0x75316420]
        %v837 = vld.sshfl [vmem:[#allocation1 + $0x30] sm:$0xff pattern:$0x75316420]
        %838 = vst [vmem:[#allocation1] ss:$2 sm:$0xff] %v787
        %839 = vst [vmem:[%s816] ss:$2 sm:$0xff] %v788
        %v840 = vld.sshfl [vmem:[#allocation1] sm:$0xff pattern:$0x75316420]
        %v841 = vld.sshfl [vmem:[#allocation1 + $0x8] sm:$0xff pattern:$0x75316420]
        %v842 = vld.sshfl [vmem:[#allocation1 + $0x10] sm:$0xff pattern:$0x75316420]
        %843 = vst [vmem:[%s821] ss:$2 sm:$0xff] %v789
        %844 = vst [vmem:[%s823] ss:$2 sm:$0xff] %v790
        %v845 = vld.sshfl [vmem:[#allocation1 + $0x20] sm:$0xff pattern:$0x75316420]
        %v846 = vld.sshfl [vmem:[#allocation1 + $0x28] sm:$0xff pattern:$0x75316420]
        %v847 = vld.sshfl [vmem:[#allocation1 + $0x30] sm:$0xff pattern:$0x75316420]
        %848 = vst [vmem:[#allocation1] ss:$2 sm:$0xff] %v791
        %849 = vst [vmem:[%s816] ss:$2 sm:$0xff] %v792
        %v850 = vld.sshfl [vmem:[#allocation1] sm:$0xff pattern:$0x75316420]
        %v851 = vld.sshfl [vmem:[#allocation1 + $0x8] sm:$0xff pattern:$0x75316420]
        %v852 = vld.sshfl [vmem:[#allocation1 + $0x10] sm:$0xff pattern:$0x75316420]
        %853 = vst [vmem:[%s821] ss:$2 sm:$0xff] %v793
        %854 = vst [vmem:[%s823] ss:$2 sm:$0xff] %v794
        %v855 = vld.sshfl [vmem:[#allocation1 + $0x20] sm:$0xff pattern:$0x75316420]
        %v856 = vld.sshfl [vmem:[#allocation1 + $0x28] sm:$0xff pattern:$0x75316420]
        %v857 = vld.sshfl [vmem:[#allocation1 + $0x30] sm:$0xff pattern:$0x75316420]
        %858 = vrot.lane.b32.xlu0 %v818, 15
        %v859 = vpop.permute.xlu0 %858
        %860 = vrot.lane.b32.xlu0 %v819, 15
        %v861 = vpop.permute.xlu0 %860
        %862 = vrot.lane.b32.xlu0 %v820, 15
        %v863 = vpop.permute.xlu0 %862
        %864 = vrot.lane.b32.xlu0 %v825, 15
        %v865 = vpop.permute.xlu0 %864
        %866 = vrot.lane.b32.xlu0 %v826, 15
        %v867 = vpop.permute.xlu0 %866
        %868 = vrot.lane.b32.xlu0 %v827, 15
        %v869 = vpop.permute.xlu0 %868
        %870 = vrot.lane.b32.xlu0 %v830, 15
        %v871 = vpop.permute.xlu0 %870
        %872 = vrot.lane.b32.xlu0 %v831, 15
        %v873 = vpop.permute.xlu0 %872
        %874 = vrot.lane.b32.xlu0 %v832, 15
        %v875 = vpop.permute.xlu0 %874
        %876 = vrot.lane.b32.xlu0 %v835, 15
        %v877 = vpop.permute.xlu0 %876
        %878 = vrot.lane.b32.xlu0 %v836, 15
        %v879 = vpop.permute.xlu0 %878
        %880 = vrot.lane.b32.xlu0 %v837, 15
        %v881 = vpop.permute.xlu0 %880
        %882 = vrot.lane.b32.xlu0 %v840, 15
        %v883 = vpop.permute.xlu0 %882
        %884 = vrot.lane.b32.xlu0 %v841, 15
        %v885 = vpop.permute.xlu0 %884
        %886 = vrot.lane.b32.xlu0 %v842, 15
        %v887 = vpop.permute.xlu0 %886
        %888 = vrot.lane.b32.xlu0 %v845, 15
        %v889 = vpop.permute.xlu0 %888
        %890 = vrot.lane.b32.xlu0 %v846, 15
        %v891 = vpop.permute.xlu0 %890
        %892 = vrot.lane.b32.xlu0 %v847, 15
        %v893 = vpop.permute.xlu0 %892
        %894 = vrot.lane.b32.xlu0 %v850, 15
        %v895 = vpop.permute.xlu0 %894
        %896 = vrot.lane.b32.xlu0 %v851, 15
        %v897 = vpop.permute.xlu0 %896
        %898 = vrot.lane.b32.xlu0 %v852, 15
        %v899 = vpop.permute.xlu0 %898
        %900 = vrot.lane.b32.xlu0 %v855, 15
        %v901 = vpop.permute.xlu0 %900
        %902 = vrot.lane.b32.xlu0 %v856, 15
        %v903 = vpop.permute.xlu0 %902
        %904 = vrot.lane.b32.xlu0 %v857, 15
        %v905 = vpop.permute.xlu0 %904
        %vm906 = vcmask 121856
        %v907 = vsel %vm906, %v859, %v861
        %v908 = vsel %vm906, %v861, %v863
        %v909 = vsel %vm906, %v865, %v867
        %v910 = vsel %vm906, %v867, %v869
        %v911 = vsel %vm906, %v871, %v873
        %v912 = vsel %vm906, %v873, %v875
        %v913 = vsel %vm906, %v877, %v879
        %v914 = vsel %vm906, %v879, %v881
        %v915 = vsel %vm906, %v883, %v885
        %v916 = vsel %vm906, %v885, %v887
        %v917 = vsel %vm906, %v889, %v891
        %v918 = vsel %vm906, %v891, %v893
        %v919 = vsel %vm906, %v895, %v897
        %v920 = vsel %vm906, %v897, %v899
        %v921 = vsel %vm906, %v901, %v903
        %v922 = vsel %vm906, %v903, %v905
        %v939 = vsel %vm797, %v907, 0.0
        %v940 = vsel %vm798, %v908, 0.0
        %v941 = vsel %vm797, %v909, 0.0
        %v942 = vsel %vm798, %v910, 0.0
        %v943 = vsel %vm797, %v911, 0.0
        %v944 = vsel %vm798, %v912, 0.0
        %v945 = vsel %vm797, %v913, 0.0
        %v946 = vsel %vm798, %v914, 0.0
        %v947 = vsel %vm797, %v915, 0.0
        %v948 = vsel %vm798, %v916, 0.0
        %v949 = vsel %vm797, %v917, 0.0
        %v950 = vsel %vm798, %v918, 0.0
        %v951 = vsel %vm797, %v919, 0.0
        %v952 = vsel %vm798, %v920, 0.0
        %v953 = vsel %vm797, %v921, 0.0
        %v954 = vsel %vm798, %v922, 0.0
        %955 = vst [vmem:[#allocation3 + $0x10] sm:$0xf] %v939
        %956 = vst [vmem:[#allocation3 + $0x18] sm:$0xf] %v940
        %957 = vst [vmem:[#allocation3 + $0x60] sm:$0xf] %v941
        %958 = vst [vmem:[#allocation3 + $0x68] sm:$0xf] %v942
        %959 = vst [vmem:[#allocation3 + $0xb0] sm:$0xf] %v943
        %960 = vst [vmem:[#allocation3 + $0xb8] sm:$0xf] %v944
        %961 = vst [vmem:[#allocation3 + $0x100] sm:$0xf] %v945
        %962 = vst [vmem:[#allocation3 + $0x108] sm:$0xf] %v946
        %963 = vst [vmem:[#allocation3 + $0x150] sm:$0xf] %v947
        %964 = vst [vmem:[#allocation3 + $0x158] sm:$0xf] %v948
        %965 = vst [vmem:[#allocation3 + $0x1a0] sm:$0xf] %v949
        %966 = vst [vmem:[#allocation3 + $0x1a8] sm:$0xf] %v950
        %967 = vst [vmem:[#allocation3 + $0x1f0] sm:$0xf] %v951
        %968 = vst [vmem:[#allocation3 + $0x1f8] sm:$0xf] %v952
        %969 = vst [vmem:[#allocation3 + $0x240] sm:$0xf] %v953
        %970 = vst [vmem:[#allocation3 + $0x248] sm:$0xf] %v954
        %v971 = vld [vmem:[#allocation2] sm:$0xff]
        %v972 = vld [vmem:[#allocation2 + $0x8] sm:$0xf]
        %v973 = vld [vmem:[#allocation2 + $0x10] sm:$0xff]
        %v974 = vld [vmem:[#allocation2 + $0x18] sm:$0xf]
        %v975 = vld [vmem:[#allocation2 + $0x20] sm:$0xff]
        %v976 = vld [vmem:[#allocation2 + $0x28] sm:$0xf]
        %v977 = vld [vmem:[#allocation2 + $0x30] sm:$0xff]
        %v978 = vld [vmem:[#allocation2 + $0x38] sm:$0xf]
        %v979 = vld [vmem:[#allocation2 + $0x40] sm:$0xff]
        %v980 = vld [vmem:[#allocation2 + $0x48] sm:$0xf]
        %v981 = vld [vmem:[#allocation2 + $0x50] sm:$0xff]
        %v982 = vld [vmem:[#allocation2 + $0x58] sm:$0xf]
        %v983 = vld [vmem:[#allocation2 + $0x60] sm:$0xff]
        %v984 = vld [vmem:[#allocation2 + $0x68] sm:$0xf]
        %v985 = vld [vmem:[#allocation2 + $0x70] sm:$0xff]
        %v986 = vld [vmem:[#allocation2 + $0x78] sm:$0xf]
        %1003 = vst [vmem:[#allocation1] ss:$2 sm:$0xff] %v971
        %s1004 = scalar_lea.vmem [#allocation1], 16
        %1005 = vst [vmem:[%s1004] ss:$2 sm:$0xff] %v972
        %v1006 = vld.sshfl [vmem:[#allocation1] sm:$0xff pattern:$0x75316420]
        %v1007 = vld.sshfl [vmem:[#allocation1 + $0x8] sm:$0xff pattern:$0x75316420]
        %v1008 = vld.sshfl [vmem:[#allocation1 + $0x10] sm:$0xff pattern:$0x75316420]
        %s1009 = scalar_lea.vmem [#allocation1], 32
        %1010 = vst [vmem:[%s1009] ss:$2 sm:$0xff] %v973
        %s1011 = scalar_lea.vmem [#allocation1], 48
        %1012 = vst [vmem:[%s1011] ss:$2 sm:$0xff] %v974
        %v1013 = vld.sshfl [vmem:[#allocation1 + $0x20] sm:$0xff pattern:$0x75316420]
        %v1014 = vld.sshfl [vmem:[#allocation1 + $0x28] sm:$0xff pattern:$0x75316420]
        %v1015 = vld.sshfl [vmem:[#allocation1 + $0x30] sm:$0xff pattern:$0x75316420]
        %1016 = vst [vmem:[#allocation1] ss:$2 sm:$0xff] %v975
        %1017 = vst [vmem:[%s1004] ss:$2 sm:$0xff] %v976
        %v1018 = vld.sshfl [vmem:[#allocation1] sm:$0xff pattern:$0x75316420]
        %v1019 = vld.sshfl [vmem:[#allocation1 + $0x8] sm:$0xff pattern:$0x75316420]
        %v1020 = vld.sshfl [vmem:[#allocation1 + $0x10] sm:$0xff pattern:$0x75316420]
        %1021 = vst [vmem:[%s1009] ss:$2 sm:$0xff] %v977
        %1022 = vst [vmem:[%s1011] ss:$2 sm:$0xff] %v978
        %v1023 = vld.sshfl [vmem:[#allocation1 + $0x20] sm:$0xff pattern:$0x75316420]
        %v1024 = vld.sshfl [vmem:[#allocation1 + $0x28] sm:$0xff pattern:$0x75316420]
        %v1025 = vld.sshfl [vmem:[#allocation1 + $0x30] sm:$0xff pattern:$0x75316420]
        %1026 = vst [vmem:[#allocation1] ss:$2 sm:$0xff] %v979
        %1027 = vst [vmem:[%s1004] ss:$2 sm:$0xff] %v980
        %v1028 = vld.sshfl [vmem:[#allocation1] sm:$0xff pattern:$0x75316420]
        %v1029 = vld.sshfl [vmem:[#allocation1 + $0x8] sm:$0xff pattern:$0x75316420]
        %v1030 = vld.sshfl [vmem:[#allocation1 + $0x10] sm:$0xff pattern:$0x75316420]
        %1031 = vst [vmem:[%s1009] ss:$2 sm:$0xff] %v981
        %1032 = vst [vmem:[%s1011] ss:$2 sm:$0xff] %v982
        %v1033 = vld.sshfl [vmem:[#allocation1 + $0x20] sm:$0xff pattern:$0x75316420]
        %v1034 = vld.sshfl [vmem:[#allocation1 + $0x28] sm:$0xff pattern:$0x75316420]
        %v1035 = vld.sshfl [vmem:[#allocation1 + $0x30] sm:$0xff pattern:$0x75316420]
        %1036 = vst [vmem:[#allocation1] ss:$2 sm:$0xff] %v983
        %1037 = vst [vmem:[%s1004] ss:$2 sm:$0xff] %v984
        %v1038 = vld.sshfl [vmem:[#allocation1] sm:$0xff pattern:$0x75316420]
        %v1039 = vld.sshfl [vmem:[#allocation1 + $0x8] sm:$0xff pattern:$0x75316420]
        %v1040 = vld.sshfl [vmem:[#allocation1 + $0x10] sm:$0xff pattern:$0x75316420]
        %1041 = vst [vmem:[%s1009] ss:$2 sm:$0xff] %v985
        %1042 = vst [vmem:[%s1011] ss:$2 sm:$0xff] %v986
        %v1043 = vld.sshfl [vmem:[#allocation1 + $0x20] sm:$0xff pattern:$0x75316420]
        %v1044 = vld.sshfl [vmem:[#allocation1 + $0x28] sm:$0xff pattern:$0x75316420]
        %v1045 = vld.sshfl [vmem:[#allocation1 + $0x30] sm:$0xff pattern:$0x75316420]
        %1046 = vrot.lane.b32.xlu0 %v1006, 1
        %v1047 = vpop.permute.xlu0 %1046
        %1048 = vrot.lane.b32.xlu0 %v1007, 1
        %v1049 = vpop.permute.xlu0 %1048
        %1050 = vrot.lane.b32.xlu0 %v1008, 1
        %v1051 = vpop.permute.xlu0 %1050
        %1052 = vrot.lane.b32.xlu0 %v1013, 1
        %v1053 = vpop.permute.xlu0 %1052
        %1054 = vrot.lane.b32.xlu0 %v1014, 1
        %v1055 = vpop.permute.xlu0 %1054
        %1056 = vrot.lane.b32.xlu0 %v1015, 1
        %v1057 = vpop.permute.xlu0 %1056
        %1058 = vrot.lane.b32.xlu0 %v1018, 1
        %v1059 = vpop.permute.xlu0 %1058
        %1060 = vrot.lane.b32.xlu0 %v1019, 1
        %v1061 = vpop.permute.xlu0 %1060
        %1062 = vrot.lane.b32.xlu0 %v1020, 1
        %v1063 = vpop.permute.xlu0 %1062
        %1064 = vrot.lane.b32.xlu0 %v1023, 1
        %v1065 = vpop.permute.xlu0 %1064
        %1066 = vrot.lane.b32.xlu0 %v1024, 1
        %v1067 = vpop.permute.xlu0 %1066
        %1068 = vrot.lane.b32.xlu0 %v1025, 1
        %v1069 = vpop.permute.xlu0 %1068
        %1070 = vrot.lane.b32.xlu0 %v1028, 1
        %v1071 = vpop.permute.xlu0 %1070
        %1072 = vrot.lane.b32.xlu0 %v1029, 1
        %v1073 = vpop.permute.xlu0 %1072
        %1074 = vrot.lane.b32.xlu0 %v1030, 1
        %v1075 = vpop.permute.xlu0 %1074
        %1076 = vrot.lane.b32.xlu0 %v1033, 1
        %v1077 = vpop.permute.xlu0 %1076
        %1078 = vrot.lane.b32.xlu0 %v1034, 1
        %v1079 = vpop.permute.xlu0 %1078
        %1080 = vrot.lane.b32.xlu0 %v1035, 1
        %v1081 = vpop.permute.xlu0 %1080
        %1082 = vrot.lane.b32.xlu0 %v1038, 1
        %v1083 = vpop.permute.xlu0 %1082
        %1084 = vrot.lane.b32.xlu0 %v1039, 1
        %v1085 = vpop.permute.xlu0 %1084
        %1086 = vrot.lane.b32.xlu0 %v1040, 1
        %v1087 = vpop.permute.xlu0 %1086
        %1088 = vrot.lane.b32.xlu0 %v1043, 1
        %v1089 = vpop.permute.xlu0 %1088
        %1090 = vrot.lane.b32.xlu0 %v1044, 1
        %v1091 = vpop.permute.xlu0 %1090
        %1092 = vrot.lane.b32.xlu0 %v1045, 1
        %v1093 = vpop.permute.xlu0 %1092
        %vm1094 = vcmask 7168
        %v1095 = vsel %vm1094, %v1047, %v1049
        %v1096 = vsel %vm1094, %v1049, %v1051
        %v1097 = vsel %vm1094, %v1053, %v1055
        %v1098 = vsel %vm1094, %v1055, %v1057
        %v1099 = vsel %vm1094, %v1059, %v1061
        %v1100 = vsel %vm1094, %v1061, %v1063
        %v1101 = vsel %vm1094, %v1065, %v1067
        %v1102 = vsel %vm1094, %v1067, %v1069
        %v1103 = vsel %vm1094, %v1071, %v1073
        %v1104 = vsel %vm1094, %v1073, %v1075
        %v1105 = vsel %vm1094, %v1077, %v1079
        %v1106 = vsel %vm1094, %v1079, %v1081
        %v1107 = vsel %vm1094, %v1083, %v1085
        %v1108 = vsel %vm1094, %v1085, %v1087
        %v1109 = vsel %vm1094, %v1089, %v1091
        %v1110 = vsel %vm1094, %v1091, %v1093
        %v1127 = vsel %vm432, %v1095, 0.0
        %v1128 = vsel %vm433, %v1096, 0.0
        %v1129 = vsel %vm432, %v1097, 0.0
        %v1130 = vsel %vm433, %v1098, 0.0
        %v1131 = vsel %vm432, %v1099, 0.0
        %v1132 = vsel %vm433, %v1100, 0.0
        %v1133 = vsel %vm432, %v1101, 0.0
        %v1134 = vsel %vm433, %v1102, 0.0
        %v1135 = vsel %vm432, %v1103, 0.0
        %v1136 = vsel %vm433, %v1104, 0.0
        %v1137 = vsel %vm432, %v1105, 0.0
        %v1138 = vsel %vm433, %v1106, 0.0
        %v1139 = vsel %vm432, %v1107, 0.0
        %v1140 = vsel %vm433, %v1108, 0.0
        %v1141 = vsel %vm432, %v1109, 0.0
        %v1142 = vsel %vm433, %v1110, 0.0
        %v1159 = vrot.slane %v1127, 4
        %v1160 = vrot.slane %v1128, 4
        %v1161 = vrot.slane %v1129, 4
        %v1162 = vrot.slane %v1130, 4
        %v1163 = vrot.slane %v1131, 4
        %v1164 = vrot.slane %v1132, 4
        %v1165 = vrot.slane %v1133, 4
        %v1166 = vrot.slane %v1134, 4
        %v1167 = vrot.slane %v1135, 4
        %v1168 = vrot.slane %v1136, 4
        %v1169 = vrot.slane %v1137, 4
        %v1170 = vrot.slane %v1138, 4
        %v1171 = vrot.slane %v1139, 4
        %v1172 = vrot.slane %v1140, 4
        %v1173 = vrot.slane %v1141, 4
        %v1174 = vrot.slane %v1142, 4
        %1191 = vst [vmem:[#allocation3 + $0x10] sm:$0xf0] %v1159
        %1192 = vst [vmem:[#allocation3 + $0x18] sm:$0xf0] %v1160
        %1193 = vst [vmem:[#allocation3 + $0x60] sm:$0xf0] %v1161
        %1194 = vst [vmem:[#allocation3 + $0x68] sm:$0xf0] %v1162
        %1195 = vst [vmem:[#allocation3 + $0xb0] sm:$0xf0] %v1163
        %1196 = vst [vmem:[#allocation3 + $0xb8] sm:$0xf0] %v1164
        %1197 = vst [vmem:[#allocation3 + $0x100] sm:$0xf0] %v1165
        %1198 = vst [vmem:[#allocation3 + $0x108] sm:$0xf0] %v1166
        %1199 = vst [vmem:[#allocation3 + $0x150] sm:$0xf0] %v1167
        %1200 = vst [vmem:[#allocation3 + $0x158] sm:$0xf0] %v1168
        %1201 = vst [vmem:[#allocation3 + $0x1a0] sm:$0xf0] %v1169
        %1202 = vst [vmem:[#allocation3 + $0x1a8] sm:$0xf0] %v1170
        %1203 = vst [vmem:[#allocation3 + $0x1f0] sm:$0xf0] %v1171
        %1204 = vst [vmem:[#allocation3 + $0x1f8] sm:$0xf0] %v1172
        %1205 = vst [vmem:[#allocation3 + $0x240] sm:$0xf0] %v1173
        %1206 = vst [vmem:[#allocation3 + $0x248] sm:$0xf0] %v1174
        %v1207 = vld [vmem:[#allocation2 + $0x4] sm:$0xff]
        %v1208 = vld [vmem:[#allocation2 + $0x14] sm:$0xff]
        %v1209 = vld [vmem:[#allocation2 + $0x24] sm:$0xff]
        %v1210 = vld [vmem:[#allocation2 + $0x34] sm:$0xff]
        %v1211 = vld [vmem:[#allocation2 + $0x44] sm:$0xff]
        %v1212 = vld [vmem:[#allocation2 + $0x54] sm:$0xff]
        %v1213 = vld [vmem:[#allocation2 + $0x64] sm:$0xff]
        %v1214 = vld [vmem:[#allocation2 + $0x74] sm:$0xff]
        %1223 = vst [vmem:[#allocation1] ss:$2 sm:$0xff] %v1207
        %v1224 = vld.sshfl [vmem:[#allocation1] sm:$0xff pattern:$0x75316420]
        %v1225 = vld.sshfl [vmem:[#allocation1 + $0x8] sm:$0xff pattern:$0x75316420]
        %s1226 = scalar_lea.vmem [#allocation1], 16
        %1227 = vst [vmem:[%s1226] ss:$2 sm:$0xff] %v1208
        %v1228 = vld.sshfl [vmem:[#allocation1 + $0x10] sm:$0xff pattern:$0x75316420]
        %v1229 = vld.sshfl [vmem:[#allocation1 + $0x18] sm:$0xff pattern:$0x75316420]
        %s1230 = scalar_lea.vmem [#allocation1], 32
        %1231 = vst [vmem:[%s1230] ss:$2 sm:$0xff] %v1209
        %v1232 = vld.sshfl [vmem:[#allocation1 + $0x20] sm:$0xff pattern:$0x75316420]
        %v1233 = vld.sshfl [vmem:[#allocation1 + $0x28] sm:$0xff pattern:$0x75316420]
        %s1234 = scalar_lea.vmem [#allocation1], 48
        %1235 = vst [vmem:[%s1234] ss:$2 sm:$0xff] %v1210
        %v1236 = vld.sshfl [vmem:[#allocation1 + $0x30] sm:$0xff pattern:$0x75316420]
        %v1237 = vld.sshfl [vmem:[#allocation1 + $0x38] sm:$0xff pattern:$0x75316420]
        %1238 = vst [vmem:[#allocation1] ss:$2 sm:$0xff] %v1211
        %v1239 = vld.sshfl [vmem:[#allocation1] sm:$0xff pattern:$0x75316420]
        %v1240 = vld.sshfl [vmem:[#allocation1 + $0x8] sm:$0xff pattern:$0x75316420]
        %1241 = vst [vmem:[%s1226] ss:$2 sm:$0xff] %v1212
        %v1242 = vld.sshfl [vmem:[#allocation1 + $0x10] sm:$0xff pattern:$0x75316420]
        %v1243 = vld.sshfl [vmem:[#allocation1 + $0x18] sm:$0xff pattern:$0x75316420]
        %1244 = vst [vmem:[%s1230] ss:$2 sm:$0xff] %v1213
        %v1245 = vld.sshfl [vmem:[#allocation1 + $0x20] sm:$0xff pattern:$0x75316420]
        %v1246 = vld.sshfl [vmem:[#allocation1 + $0x28] sm:$0xff pattern:$0x75316420]
        %1247 = vst [vmem:[%s1234] ss:$2 sm:$0xff] %v1214
        %v1248 = vld.sshfl [vmem:[#allocation1 + $0x30] sm:$0xff pattern:$0x75316420]
        %v1249 = vld.sshfl [vmem:[#allocation1 + $0x38] sm:$0xff pattern:$0x75316420]
        %1266 = vst [vmem:[#allocation3 + $0x20] sm:$0xf] %v1224
        %1267 = vst [vmem:[#allocation3 + $0x28] sm:$0xf] %v1225
        %1268 = vst [vmem:[#allocation3 + $0x70] sm:$0xf] %v1228
        %1269 = vst [vmem:[#allocation3 + $0x78] sm:$0xf] %v1229
        %1270 = vst [vmem:[#allocation3 + $0xc0] sm:$0xf] %v1232
        %1271 = vst [vmem:[#allocation3 + $0xc8] sm:$0xf] %v1233
        %1272 = vst [vmem:[#allocation3 + $0x110] sm:$0xf] %v1236
        %1273 = vst [vmem:[#allocation3 + $0x118] sm:$0xf] %v1237
        %1274 = vst [vmem:[#allocation3 + $0x160] sm:$0xf] %v1239
        %1275 = vst [vmem:[#allocation3 + $0x168] sm:$0xf] %v1240
        %1276 = vst [vmem:[#allocation3 + $0x1b0] sm:$0xf] %v1242
        %1277 = vst [vmem:[#allocation3 + $0x1b8] sm:$0xf] %v1243
        %1278 = vst [vmem:[#allocation3 + $0x200] sm:$0xf] %v1245
        %1279 = vst [vmem:[#allocation3 + $0x208] sm:$0xf] %v1246
        %1280 = vst [vmem:[#allocation3 + $0x250] sm:$0xf] %v1248
        %1281 = vst [vmem:[#allocation3 + $0x258] sm:$0xf] %v1249
        %v1282 = vld [vmem:[#allocation2 + $0x4] sm:$0xff]
        %v1283 = vld [vmem:[#allocation2 + $0xc] sm:$0xf]
        %v1284 = vld [vmem:[#allocation2 + $0x14] sm:$0xff]
        %v1285 = vld [vmem:[#allocation2 + $0x1c] sm:$0xf]
        %v1286 = vld [vmem:[#allocation2 + $0x24] sm:$0xff]
        %v1287 = vld [vmem:[#allocation2 + $0x2c] sm:$0xf]
        %v1288 = vld [vmem:[#allocation2 + $0x34] sm:$0xff]
        %v1289 = vld [vmem:[#allocation2 + $0x3c] sm:$0xf]
        %v1290 = vld [vmem:[#allocation2 + $0x44] sm:$0xff]
        %v1291 = vld [vmem:[#allocation2 + $0x4c] sm:$0xf]
        %v1292 = vld [vmem:[#allocation2 + $0x54] sm:$0xff]
        %v1293 = vld [vmem:[#allocation2 + $0x5c] sm:$0xf]
        %v1294 = vld [vmem:[#allocation2 + $0x64] sm:$0xff]
        %v1295 = vld [vmem:[#allocation2 + $0x6c] sm:$0xf]
        %v1296 = vld [vmem:[#allocation2 + $0x74] sm:$0xff]
        %v1297 = vld [vmem:[#allocation2 + $0x7c] sm:$0xf]
        %1314 = vst [vmem:[#allocation1] ss:$2 sm:$0xff] %v1282
        %s1315 = scalar_lea.vmem [#allocation1], 16
        %1316 = vst [vmem:[%s1315] ss:$2 sm:$0xff] %v1283
        %v1317 = vld.sshfl [vmem:[#allocation1] sm:$0xff pattern:$0x75316420]
        %v1318 = vld.sshfl [vmem:[#allocation1 + $0x8] sm:$0xff pattern:$0x75316420]
        %v1319 = vld.sshfl [vmem:[#allocation1 + $0x10] sm:$0xff pattern:$0x75316420]
        %s1320 = scalar_lea.vmem [#allocation1], 32
        %1321 = vst [vmem:[%s1320] ss:$2 sm:$0xff] %v1284
        %s1322 = scalar_lea.vmem [#allocation1], 48
        %1323 = vst [vmem:[%s1322] ss:$2 sm:$0xff] %v1285
        %v1324 = vld.sshfl [vmem:[#allocation1 + $0x20] sm:$0xff pattern:$0x75316420]
        %v1325 = vld.sshfl [vmem:[#allocation1 + $0x28] sm:$0xff pattern:$0x75316420]
        %v1326 = vld.sshfl [vmem:[#allocation1 + $0x30] sm:$0xff pattern:$0x75316420]
        %1327 = vst [vmem:[#allocation1] ss:$2 sm:$0xff] %v1286
        %1328 = vst [vmem:[%s1315] ss:$2 sm:$0xff] %v1287
        %v1329 = vld.sshfl [vmem:[#allocation1] sm:$0xff pattern:$0x75316420]
        %v1330 = vld.sshfl [vmem:[#allocation1 + $0x8] sm:$0xff pattern:$0x75316420]
        %v1331 = vld.sshfl [vmem:[#allocation1 + $0x10] sm:$0xff pattern:$0x75316420]
        %1332 = vst [vmem:[%s1320] ss:$2 sm:$0xff] %v1288
        %1333 = vst [vmem:[%s1322] ss:$2 sm:$0xff] %v1289
        %v1334 = vld.sshfl [vmem:[#allocation1 + $0x20] sm:$0xff pattern:$0x75316420]
        %v1335 = vld.sshfl [vmem:[#allocation1 + $0x28] sm:$0xff pattern:$0x75316420]
        %v1336 = vld.sshfl [vmem:[#allocation1 + $0x30] sm:$0xff pattern:$0x75316420]
        %1337 = vst [vmem:[#allocation1] ss:$2 sm:$0xff] %v1290
        %1338 = vst [vmem:[%s1315] ss:$2 sm:$0xff] %v1291
        %v1339 = vld.sshfl [vmem:[#allocation1] sm:$0xff pattern:$0x75316420]
        %v1340 = vld.sshfl [vmem:[#allocation1 + $0x8] sm:$0xff pattern:$0x75316420]
        %v1341 = vld.sshfl [vmem:[#allocation1 + $0x10] sm:$0xff pattern:$0x75316420]
        %1342 = vst [vmem:[%s1320] ss:$2 sm:$0xff] %v1292
        %1343 = vst [vmem:[%s1322] ss:$2 sm:$0xff] %v1293
        %v1344 = vld.sshfl [vmem:[#allocation1 + $0x20] sm:$0xff pattern:$0x75316420]
        %v1345 = vld.sshfl [vmem:[#allocation1 + $0x28] sm:$0xff pattern:$0x75316420]
        %v1346 = vld.sshfl [vmem:[#allocation1 + $0x30] sm:$0xff pattern:$0x75316420]
        %1347 = vst [vmem:[#allocation1] ss:$2 sm:$0xff] %v1294
        %1348 = vst [vmem:[%s1315] ss:$2 sm:$0xff] %v1295
        %v1349 = vld.sshfl [vmem:[#allocation1] sm:$0xff pattern:$0x75316420]
        %v1350 = vld.sshfl [vmem:[#allocation1 + $0x8] sm:$0xff pattern:$0x75316420]
        %v1351 = vld.sshfl [vmem:[#allocation1 + $0x10] sm:$0xff pattern:$0x75316420]
        %1352 = vst [vmem:[%s1320] ss:$2 sm:$0xff] %v1296
        %1353 = vst [vmem:[%s1322] ss:$2 sm:$0xff] %v1297
        %v1354 = vld.sshfl [vmem:[#allocation1 + $0x20] sm:$0xff pattern:$0x75316420]
        %v1355 = vld.sshfl [vmem:[#allocation1 + $0x28] sm:$0xff pattern:$0x75316420]
        %v1356 = vld.sshfl [vmem:[#allocation1 + $0x30] sm:$0xff pattern:$0x75316420]
        %1357 = vrot.lane.b32.xlu0 %v1317, 127
        %v1358 = vpop.permute.xlu0 %1357
        %1359 = vrot.lane.b32.xlu0 %v1318, 127
        %v1360 = vpop.permute.xlu0 %1359
        %1361 = vrot.lane.b32.xlu0 %v1319, 127
        %v1362 = vpop.permute.xlu0 %1361
        %1363 = vrot.lane.b32.xlu0 %v1324, 127
        %v1364 = vpop.permute.xlu0 %1363
        %1365 = vrot.lane.b32.xlu0 %v1325, 127
        %v1366 = vpop.permute.xlu0 %1365
        %1367 = vrot.lane.b32.xlu0 %v1326, 127
        %v1368 = vpop.permute.xlu0 %1367
        %1369 = vrot.lane.b32.xlu0 %v1329, 127
        %v1370 = vpop.permute.xlu0 %1369
        %1371 = vrot.lane.b32.xlu0 %v1330, 127
        %v1372 = vpop.permute.xlu0 %1371
        %1373 = vrot.lane.b32.xlu0 %v1331, 127
        %v1374 = vpop.permute.xlu0 %1373
        %1375 = vrot.lane.b32.xlu0 %v1334, 127
        %v1376 = vpop.permute.xlu0 %1375
        %1377 = vrot.lane.b32.xlu0 %v1335, 127
        %v1378 = vpop.permute.xlu0 %1377
        %1379 = vrot.lane.b32.xlu0 %v1336, 127
        %v1380 = vpop.permute.xlu0 %1379
        %1381 = vrot.lane.b32.xlu0 %v1339, 127
        %v1382 = vpop.permute.xlu0 %1381
        %1383 = vrot.lane.b32.xlu0 %v1340, 127
        %v1384 = vpop.permute.xlu0 %1383
        %1385 = vrot.lane.b32.xlu0 %v1341, 127
        %v1386 = vpop.permute.xlu0 %1385
        %1387 = vrot.lane.b32.xlu0 %v1344, 127
        %v1388 = vpop.permute.xlu0 %1387
        %1389 = vrot.lane.b32.xlu0 %v1345, 127
        %v1390 = vpop.permute.xlu0 %1389
        %1391 = vrot.lane.b32.xlu0 %v1346, 127
        %v1392 = vpop.permute.xlu0 %1391
        %1393 = vrot.lane.b32.xlu0 %v1349, 127
        %v1394 = vpop.permute.xlu0 %1393
        %1395 = vrot.lane.b32.xlu0 %v1350, 127
        %v1396 = vpop.permute.xlu0 %1395
        %1397 = vrot.lane.b32.xlu0 %v1351, 127
        %v1398 = vpop.permute.xlu0 %1397
        %1399 = vrot.lane.b32.xlu0 %v1354, 127
        %v1400 = vpop.permute.xlu0 %1399
        %1401 = vrot.lane.b32.xlu0 %v1355, 127
        %v1402 = vpop.permute.xlu0 %1401
        %1403 = vrot.lane.b32.xlu0 %v1356, 127
        %v1404 = vpop.permute.xlu0 %1403
        %vm1405 = vcmask 1039360
        %v1406 = vsel %vm1405, %v1358, %v1360
        %v1407 = vsel %vm1405, %v1360, %v1362
        %v1408 = vsel %vm1405, %v1364, %v1366
        %v1409 = vsel %vm1405, %v1366, %v1368
        %v1410 = vsel %vm1405, %v1370, %v1372
        %v1411 = vsel %vm1405, %v1372, %v1374
        %v1412 = vsel %vm1405, %v1376, %v1378
        %v1413 = vsel %vm1405, %v1378, %v1380
        %v1414 = vsel %vm1405, %v1382, %v1384
        %v1415 = vsel %vm1405, %v1384, %v1386
        %v1416 = vsel %vm1405, %v1388, %v1390
        %v1417 = vsel %vm1405, %v1390, %v1392
        %v1418 = vsel %vm1405, %v1394, %v1396
        %v1419 = vsel %vm1405, %v1396, %v1398
        %v1420 = vsel %vm1405, %v1400, %v1402
        %v1421 = vsel %vm1405, %v1402, %v1404
        %v1438 = vsel %vm797, %v1406, 0.0
        %v1439 = vsel %vm798, %v1407, 0.0
        %v1440 = vsel %vm797, %v1408, 0.0
        %v1441 = vsel %vm798, %v1409, 0.0
        %v1442 = vsel %vm797, %v1410, 0.0
        %v1443 = vsel %vm798, %v1411, 0.0
        %v1444 = vsel %vm797, %v1412, 0.0
        %v1445 = vsel %vm798, %v1413, 0.0
        %v1446 = vsel %vm797, %v1414, 0.0
        %v1447 = vsel %vm798, %v1415, 0.0
        %v1448 = vsel %vm797, %v1416, 0.0
        %v1449 = vsel %vm798, %v1417, 0.0
        %v1450 = vsel %vm797, %v1418, 0.0
        %v1451 = vsel %vm798, %v1419, 0.0
        %v1452 = vsel %vm797, %v1420, 0.0
        %v1453 = vsel %vm798, %v1421, 0.0
        %v1470 = vrot.slane %v1438, 4
        %v1471 = vrot.slane %v1439, 4
        %v1472 = vrot.slane %v1440, 4
        %v1473 = vrot.slane %v1441, 4
        %v1474 = vrot.slane %v1442, 4
        %v1475 = vrot.slane %v1443, 4
        %v1476 = vrot.slane %v1444, 4
        %v1477 = vrot.slane %v1445, 4
        %v1478 = vrot.slane %v1446, 4
        %v1479 = vrot.slane %v1447, 4
        %v1480 = vrot.slane %v1448, 4
        %v1481 = vrot.slane %v1449, 4
        %v1482 = vrot.slane %v1450, 4
        %v1483 = vrot.slane %v1451, 4
        %v1484 = vrot.slane %v1452, 4
        %v1485 = vrot.slane %v1453, 4
        %1502 = vst [vmem:[#allocation3 + $0x20] sm:$0xf0] %v1470
        %1503 = vst [vmem:[#allocation3 + $0x28] sm:$0xf0] %v1471
        %1504 = vst [vmem:[#allocation3 + $0x70] sm:$0xf0] %v1472
        %1505 = vst [vmem:[#allocation3 + $0x78] sm:$0xf0] %v1473
        %1506 = vst [vmem:[#allocation3 + $0xc0] sm:$0xf0] %v1474
        %1507 = vst [vmem:[#allocation3 + $0xc8] sm:$0xf0] %v1475
        %1508 = vst [vmem:[#allocation3 + $0x110] sm:$0xf0] %v1476
        %1509 = vst [vmem:[#allocation3 + $0x118] sm:$0xf0] %v1477
        %1510 = vst [vmem:[#allocation3 + $0x160] sm:$0xf0] %v1478
        %1511 = vst [vmem:[#allocation3 + $0x168] sm:$0xf0] %v1479
        %1512 = vst [vmem:[#allocation3 + $0x1b0] sm:$0xf0] %v1480
        %1513 = vst [vmem:[#allocation3 + $0x1b8] sm:$0xf0] %v1481
        %1514 = vst [vmem:[#allocation3 + $0x200] sm:$0xf0] %v1482
        %1515 = vst [vmem:[#allocation3 + $0x208] sm:$0xf0] %v1483
        %1516 = vst [vmem:[#allocation3 + $0x250] sm:$0xf0] %v1484
        %1517 = vst [vmem:[#allocation3 + $0x258] sm:$0xf0] %v1485
        %v1518 = vld [vmem:[#allocation2 + $0x4] sm:$0xff]
        %v1519 = vld [vmem:[#allocation2 + $0xc] sm:$0xf]
        %v1520 = vld [vmem:[#allocation2 + $0x14] sm:$0xff]
        %v1521 = vld [vmem:[#allocation2 + $0x1c] sm:$0xf]
        %v1522 = vld [vmem:[#allocation2 + $0x24] sm:$0xff]
        %v1523 = vld [vmem:[#allocation2 + $0x2c] sm:$0xf]
        %v1524 = vld [vmem:[#allocation2 + $0x34] sm:$0xff]
        %v1525 = vld [vmem:[#allocation2 + $0x3c] sm:$0xf]
        %v1526 = vld [vmem:[#allocation2 + $0x44] sm:$0xff]
        %v1527 = vld [vmem:[#allocation2 + $0x4c] sm:$0xf]
        %v1528 = vld [vmem:[#allocation2 + $0x54] sm:$0xff]
        %v1529 = vld [vmem:[#allocation2 + $0x5c] sm:$0xf]
        %v1530 = vld [vmem:[#allocation2 + $0x64] sm:$0xff]
        %v1531 = vld [vmem:[#allocation2 + $0x6c] sm:$0xf]
        %v1532 = vld [vmem:[#allocation2 + $0x74] sm:$0xff]
        %v1533 = vld [vmem:[#allocation2 + $0x7c] sm:$0xf]
        %1550 = vst [vmem:[#allocation1] ss:$2 sm:$0xff] %v1518
        %s1551 = scalar_lea.vmem [#allocation1], 16
        %1552 = vst [vmem:[%s1551] ss:$2 sm:$0xff] %v1519
        %v1553 = vld.sshfl [vmem:[#allocation1] sm:$0xff pattern:$0x75316420]
        %v1554 = vld.sshfl [vmem:[#allocation1 + $0x8] sm:$0xff pattern:$0x75316420]
        %v1555 = vld.sshfl [vmem:[#allocation1 + $0x10] sm:$0xff pattern:$0x75316420]
        %s1556 = scalar_lea.vmem [#allocation1], 32
        %1557 = vst [vmem:[%s1556] ss:$2 sm:$0xff] %v1520
        %s1558 = scalar_lea.vmem [#allocation1], 48
        %1559 = vst [vmem:[%s1558] ss:$2 sm:$0xff] %v1521
        %v1560 = vld.sshfl [vmem:[#allocation1 + $0x20] sm:$0xff pattern:$0x75316420]
        %v1561 = vld.sshfl [vmem:[#allocation1 + $0x28] sm:$0xff pattern:$0x75316420]
        %v1562 = vld.sshfl [vmem:[#allocation1 + $0x30] sm:$0xff pattern:$0x75316420]
        %1563 = vst [vmem:[#allocation1] ss:$2 sm:$0xff] %v1522
        %1564 = vst [vmem:[%s1551] ss:$2 sm:$0xff] %v1523
        %v1565 = vld.sshfl [vmem:[#allocation1] sm:$0xff pattern:$0x75316420]
        %v1566 = vld.sshfl [vmem:[#allocation1 + $0x8] sm:$0xff pattern:$0x75316420]
        %v1567 = vld.sshfl [vmem:[#allocation1 + $0x10] sm:$0xff pattern:$0x75316420]
        %1568 = vst [vmem:[%s1556] ss:$2 sm:$0xff] %v1524
        %1569 = vst [vmem:[%s1558] ss:$2 sm:$0xff] %v1525
        %v1570 = vld.sshfl [vmem:[#allocation1 + $0x20] sm:$0xff pattern:$0x75316420]
        %v1571 = vld.sshfl [vmem:[#allocation1 + $0x28] sm:$0xff pattern:$0x75316420]
        %v1572 = vld.sshfl [vmem:[#allocation1 + $0x30] sm:$0xff pattern:$0x75316420]
        %1573 = vst [vmem:[#allocation1] ss:$2 sm:$0xff] %v1526
        %1574 = vst [vmem:[%s1551] ss:$2 sm:$0xff] %v1527
        %v1575 = vld.sshfl [vmem:[#allocation1] sm:$0xff pattern:$0x75316420]
        %v1576 = vld.sshfl [vmem:[#allocation1 + $0x8] sm:$0xff pattern:$0x75316420]
        %v1577 = vld.sshfl [vmem:[#allocation1 + $0x10] sm:$0xff pattern:$0x75316420]
        %1578 = vst [vmem:[%s1556] ss:$2 sm:$0xff] %v1528
        %1579 = vst [vmem:[%s1558] ss:$2 sm:$0xff] %v1529
        %v1580 = vld.sshfl [vmem:[#allocation1 + $0x20] sm:$0xff pattern:$0x75316420]
        %v1581 = vld.sshfl [vmem:[#allocation1 + $0x28] sm:$0xff pattern:$0x75316420]
        %v1582 = vld.sshfl [vmem:[#allocation1 + $0x30] sm:$0xff pattern:$0x75316420]
        %1583 = vst [vmem:[#allocation1] ss:$2 sm:$0xff] %v1530
        %1584 = vst [vmem:[%s1551] ss:$2 sm:$0xff] %v1531
        %v1585 = vld.sshfl [vmem:[#allocation1] sm:$0xff pattern:$0x75316420]
        %v1586 = vld.sshfl [vmem:[#allocation1 + $0x8] sm:$0xff pattern:$0x75316420]
        %v1587 = vld.sshfl [vmem:[#allocation1 + $0x10] sm:$0xff pattern:$0x75316420]
        %1588 = vst [vmem:[%s1556] ss:$2 sm:$0xff] %v1532
        %1589 = vst [vmem:[%s1558] ss:$2 sm:$0xff] %v1533
        %v1590 = vld.sshfl [vmem:[#allocation1 + $0x20] sm:$0xff pattern:$0x75316420]
        %v1591 = vld.sshfl [vmem:[#allocation1 + $0x28] sm:$0xff pattern:$0x75316420]
        %v1592 = vld.sshfl [vmem:[#allocation1 + $0x30] sm:$0xff pattern:$0x75316420]
        %1593 = vrot.lane.b32.xlu0 %v1553, 113
        %v1594 = vpop.permute.xlu0 %1593
        %1595 = vrot.lane.b32.xlu0 %v1554, 113
        %v1596 = vpop.permute.xlu0 %1595
        %1597 = vrot.lane.b32.xlu0 %v1555, 113
        %v1598 = vpop.permute.xlu0 %1597
        %1599 = vrot.lane.b32.xlu0 %v1560, 113
        %v1600 = vpop.permute.xlu0 %1599
        %1601 = vrot.lane.b32.xlu0 %v1561, 113
        %v1602 = vpop.permute.xlu0 %1601
        %1603 = vrot.lane.b32.xlu0 %v1562, 113
        %v1604 = vpop.permute.xlu0 %1603
        %1605 = vrot.lane.b32.xlu0 %v1565, 113
        %v1606 = vpop.permute.xlu0 %1605
        %1607 = vrot.lane.b32.xlu0 %v1566, 113
        %v1608 = vpop.permute.xlu0 %1607
        %1609 = vrot.lane.b32.xlu0 %v1567, 113
        %v1610 = vpop.permute.xlu0 %1609
        %1611 = vrot.lane.b32.xlu0 %v1570, 113
        %v1612 = vpop.permute.xlu0 %1611
        %1613 = vrot.lane.b32.xlu0 %v1571, 113
        %v1614 = vpop.permute.xlu0 %1613
        %1615 = vrot.lane.b32.xlu0 %v1572, 113
        %v1616 = vpop.permute.xlu0 %1615
        %1617 = vrot.lane.b32.xlu0 %v1575, 113
        %v1618 = vpop.permute.xlu0 %1617
        %1619 = vrot.lane.b32.xlu0 %v1576, 113
        %v1620 = vpop.permute.xlu0 %1619
        %1621 = vrot.lane.b32.xlu0 %v1577, 113
        %v1622 = vpop.permute.xlu0 %1621
        %1623 = vrot.lane.b32.xlu0 %v1580, 113
        %v1624 = vpop.permute.xlu0 %1623
        %1625 = vrot.lane.b32.xlu0 %v1581, 113
        %v1626 = vpop.permute.xlu0 %1625
        %1627 = vrot.lane.b32.xlu0 %v1582, 113
        %v1628 = vpop.permute.xlu0 %1627
        %1629 = vrot.lane.b32.xlu0 %v1585, 113
        %v1630 = vpop.permute.xlu0 %1629
        %1631 = vrot.lane.b32.xlu0 %v1586, 113
        %v1632 = vpop.permute.xlu0 %1631
        %1633 = vrot.lane.b32.xlu0 %v1587, 113
        %v1634 = vpop.permute.xlu0 %1633
        %1635 = vrot.lane.b32.xlu0 %v1590, 113
        %v1636 = vpop.permute.xlu0 %1635
        %1637 = vrot.lane.b32.xlu0 %v1591, 113
        %v1638 = vpop.permute.xlu0 %1637
        %1639 = vrot.lane.b32.xlu0 %v1592, 113
        %v1640 = vpop.permute.xlu0 %1639
        %vm1641 = vcmask 924672
        %v1642 = vsel %vm1641, %v1594, %v1596
        %v1643 = vsel %vm1641, %v1596, %v1598
        %v1644 = vsel %vm1641, %v1600, %v1602
        %v1645 = vsel %vm1641, %v1602, %v1604
        %v1646 = vsel %vm1641, %v1606, %v1608
        %v1647 = vsel %vm1641, %v1608, %v1610
        %v1648 = vsel %vm1641, %v1612, %v1614
        %v1649 = vsel %vm1641, %v1614, %v1616
        %v1650 = vsel %vm1641, %v1618, %v1620
        %v1651 = vsel %vm1641, %v1620, %v1622
        %v1652 = vsel %vm1641, %v1624, %v1626
        %v1653 = vsel %vm1641, %v1626, %v1628
        %v1654 = vsel %vm1641, %v1630, %v1632
        %v1655 = vsel %vm1641, %v1632, %v1634
        %v1656 = vsel %vm1641, %v1636, %v1638
        %v1657 = vsel %vm1641, %v1638, %v1640
        %v1674 = vsel %vm432, %v1642, 0.0
        %v1675 = vsel %vm433, %v1643, 0.0
        %v1676 = vsel %vm432, %v1644, 0.0
        %v1677 = vsel %vm433, %v1645, 0.0
        %v1678 = vsel %vm432, %v1646, 0.0
        %v1679 = vsel %vm433, %v1647, 0.0
        %v1680 = vsel %vm432, %v1648, 0.0
        %v1681 = vsel %vm433, %v1649, 0.0
        %v1682 = vsel %vm432, %v1650, 0.0
        %v1683 = vsel %vm433, %v1651, 0.0
        %v1684 = vsel %vm432, %v1652, 0.0
        %v1685 = vsel %vm433, %v1653, 0.0
        %v1686 = vsel %vm432, %v1654, 0.0
        %v1687 = vsel %vm433, %v1655, 0.0
        %v1688 = vsel %vm432, %v1656, 0.0
        %v1689 = vsel %vm433, %v1657, 0.0
        %1690 = vst [vmem:[#allocation3 + $0x30] sm:$0xf] %v1674
        %1691 = vst [vmem:[#allocation3 + $0x38] sm:$0xf] %v1675
        %1692 = vst [vmem:[#allocation3 + $0x80] sm:$0xf] %v1676
        %1693 = vst [vmem:[#allocation3 + $0x88] sm:$0xf] %v1677
        %1694 = vst [vmem:[#allocation3 + $0xd0] sm:$0xf] %v1678
        %1695 = vst [vmem:[#allocation3 + $0xd8] sm:$0xf] %v1679
        %1696 = vst [vmem:[#allocation3 + $0x120] sm:$0xf] %v1680
        %1697 = vst [vmem:[#allocation3 + $0x128] sm:$0xf] %v1681
        %1698 = vst [vmem:[#allocation3 + $0x170] sm:$0xf] %v1682
        %1699 = vst [vmem:[#allocation3 + $0x178] sm:$0xf] %v1683
        %1700 = vst [vmem:[#allocation3 + $0x1c0] sm:$0xf] %v1684
        %1701 = vst [vmem:[#allocation3 + $0x1c8] sm:$0xf] %v1685
        %1702 = vst [vmem:[#allocation3 + $0x210] sm:$0xf] %v1686
        %1703 = vst [vmem:[#allocation3 + $0x218] sm:$0xf] %v1687
        %1704 = vst [vmem:[#allocation3 + $0x260] sm:$0xf] %v1688
        %1705 = vst [vmem:[#allocation3 + $0x268] sm:$0xf] %v1689
        %v1706 = vld [vmem:[#allocation2 + $0x4] sm:$0xff]
        %v1707 = vld [vmem:[#allocation2 + $0xc] sm:$0xf]
        %v1708 = vld [vmem:[#allocation2 + $0x14] sm:$0xff]
        %v1709 = vld [vmem:[#allocation2 + $0x1c] sm:$0xf]
        %v1710 = vld [vmem:[#allocation2 + $0x24] sm:$0xff]
        %v1711 = vld [vmem:[#allocation2 + $0x2c] sm:$0xf]
        %v1712 = vld [vmem:[#allocation2 + $0x34] sm:$0xff]
        %v1713 = vld [vmem:[#allocation2 + $0x3c] sm:$0xf]
        %v1714 = vld [vmem:[#allocation2 + $0x44] sm:$0xff]
        %v1715 = vld [vmem:[#allocation2 + $0x4c] sm:$0xf]
        %v1716 = vld [vmem:[#allocation2 + $0x54] sm:$0xff]
        %v1717 = vld [vmem:[#allocation2 + $0x5c] sm:$0xf]
        %v1718 = vld [vmem:[#allocation2 + $0x64] sm:$0xff]
        %v1719 = vld [vmem:[#allocation2 + $0x6c] sm:$0xf]
        %v1720 = vld [vmem:[#allocation2 + $0x74] sm:$0xff]
        %v1721 = vld [vmem:[#allocation2 + $0x7c] sm:$0xf]
        %s1738 = scalar_lea.vmem [#allocation1], 1
        %1739 = vst [vmem:[%s1738] ss:$2 sm:$0xff] %v1706
        %s1740 = scalar_lea.vmem [#allocation1], 17
        %1741 = vst [vmem:[%s1740] ss:$2 sm:$0xff] %v1707
        %v1742 = vld.sshfl [vmem:[#allocation1] sm:$0xff pattern:$0x75316420]
        %v1743 = vld.sshfl [vmem:[#allocation1 + $0x8] sm:$0xff pattern:$0x75316420]
        %v1744 = vld.sshfl [vmem:[#allocation1 + $0x10] sm:$0xff pattern:$0x75316420]
        %s1745 = scalar_lea.vmem [#allocation1], 33
        %1746 = vst [vmem:[%s1745] ss:$2 sm:$0xff] %v1708
        %s1747 = scalar_lea.vmem [#allocation1], 49
        %1748 = vst [vmem:[%s1747] ss:$2 sm:$0xff] %v1709
        %v1749 = vld.sshfl [vmem:[#allocation1 + $0x20] sm:$0xff pattern:$0x75316420]
        %v1750 = vld.sshfl [vmem:[#allocation1 + $0x28] sm:$0xff pattern:$0x75316420]
        %v1751 = vld.sshfl [vmem:[#allocation1 + $0x30] sm:$0xff pattern:$0x75316420]
        %1752 = vst [vmem:[%s1738] ss:$2 sm:$0xff] %v1710
        %1753 = vst [vmem:[%s1740] ss:$2 sm:$0xff] %v1711
        %v1754 = vld.sshfl [vmem:[#allocation1] sm:$0xff pattern:$0x75316420]
        %v1755 = vld.sshfl [vmem:[#allocation1 + $0x8] sm:$0xff pattern:$0x75316420]
        %v1756 = vld.sshfl [vmem:[#allocation1 + $0x10] sm:$0xff pattern:$0x75316420]
        %1757 = vst [vmem:[%s1745] ss:$2 sm:$0xff] %v1712
        %1758 = vst [vmem:[%s1747] ss:$2 sm:$0xff] %v1713
        %v1759 = vld.sshfl [vmem:[#allocation1 + $0x20] sm:$0xff pattern:$0x75316420]
        %v1760 = vld.sshfl [vmem:[#allocation1 + $0x28] sm:$0xff pattern:$0x75316420]
        %v1761 = vld.sshfl [vmem:[#allocation1 + $0x30] sm:$0xff pattern:$0x75316420]
        %1762 = vst [vmem:[%s1738] ss:$2 sm:$0xff] %v1714
        %1763 = vst [vmem:[%s1740] ss:$2 sm:$0xff] %v1715
        %v1764 = vld.sshfl [vmem:[#allocation1] sm:$0xff pattern:$0x75316420]
        %v1765 = vld.sshfl [vmem:[#allocation1 + $0x8] sm:$0xff pattern:$0x75316420]
        %v1766 = vld.sshfl [vmem:[#allocation1 + $0x10] sm:$0xff pattern:$0x75316420]
        %1767 = vst [vmem:[%s1745] ss:$2 sm:$0xff] %v1716
        %1768 = vst [vmem:[%s1747] ss:$2 sm:$0xff] %v1717
        %v1769 = vld.sshfl [vmem:[#allocation1 + $0x20] sm:$0xff pattern:$0x75316420]
        %v1770 = vld.sshfl [vmem:[#allocation1 + $0x28] sm:$0xff pattern:$0x75316420]
        %v1771 = vld.sshfl [vmem:[#allocation1 + $0x30] sm:$0xff pattern:$0x75316420]
        %1772 = vst [vmem:[%s1738] ss:$2 sm:$0xff] %v1718
        %1773 = vst [vmem:[%s1740] ss:$2 sm:$0xff] %v1719
        %v1774 = vld.sshfl [vmem:[#allocation1] sm:$0xff pattern:$0x75316420]
        %v1775 = vld.sshfl [vmem:[#allocation1 + $0x8] sm:$0xff pattern:$0x75316420]
        %v1776 = vld.sshfl [vmem:[#allocation1 + $0x10] sm:$0xff pattern:$0x75316420]
        %1777 = vst [vmem:[%s1745] ss:$2 sm:$0xff] %v1720
        %1778 = vst [vmem:[%s1747] ss:$2 sm:$0xff] %v1721
        %v1779 = vld.sshfl [vmem:[#allocation1 + $0x20] sm:$0xff pattern:$0x75316420]
        %v1780 = vld.sshfl [vmem:[#allocation1 + $0x28] sm:$0xff pattern:$0x75316420]
        %v1781 = vld.sshfl [vmem:[#allocation1 + $0x30] sm:$0xff pattern:$0x75316420]
        %1782 = vrot.lane.b32.xlu0 %v1742, 112
        %v1783 = vpop.permute.xlu0 %1782
        %1784 = vrot.lane.b32.xlu0 %v1743, 112
        %v1785 = vpop.permute.xlu0 %1784
        %1786 = vrot.lane.b32.xlu0 %v1744, 112
        %v1787 = vpop.permute.xlu0 %1786
        %1788 = vrot.lane.b32.xlu0 %v1749, 112
        %v1789 = vpop.permute.xlu0 %1788
        %1790 = vrot.lane.b32.xlu0 %v1750, 112
        %v1791 = vpop.permute.xlu0 %1790
        %1792 = vrot.lane.b32.xlu0 %v1751, 112
        %v1793 = vpop.permute.xlu0 %1792
        %1794 = vrot.lane.b32.xlu0 %v1754, 112
        %v1795 = vpop.permute.xlu0 %1794
        %1796 = vrot.lane.b32.xlu0 %v1755, 112
        %v1797 = vpop.permute.xlu0 %1796
        %1798 = vrot.lane.b32.xlu0 %v1756, 112
        %v1799 = vpop.permute.xlu0 %1798
        %1800 = vrot.lane.b32.xlu0 %v1759, 112
        %v1801 = vpop.permute.xlu0 %1800
        %1802 = vrot.lane.b32.xlu0 %v1760, 112
        %v1803 = vpop.permute.xlu0 %1802
        %1804 = vrot.lane.b32.xlu0 %v1761, 112
        %v1805 = vpop.permute.xlu0 %1804
        %1806 = vrot.lane.b32.xlu0 %v1764, 112
        %v1807 = vpop.permute.xlu0 %1806
        %1808 = vrot.lane.b32.xlu0 %v1765, 112
        %v1809 = vpop.permute.xlu0 %1808
        %1810 = vrot.lane.b32.xlu0 %v1766, 112
        %v1811 = vpop.permute.xlu0 %1810
        %1812 = vrot.lane.b32.xlu0 %v1769, 112
        %v1813 = vpop.permute.xlu0 %1812
        %1814 = vrot.lane.b32.xlu0 %v1770, 112
        %v1815 = vpop.permute.xlu0 %1814
        %1816 = vrot.lane.b32.xlu0 %v1771, 112
        %v1817 = vpop.permute.xlu0 %1816
        %1818 = vrot.lane.b32.xlu0 %v1774, 112
        %v1819 = vpop.permute.xlu0 %1818
        %1820 = vrot.lane.b32.xlu0 %v1775, 112
        %v1821 = vpop.permute.xlu0 %1820
        %1822 = vrot.lane.b32.xlu0 %v1776, 112
        %v1823 = vpop.permute.xlu0 %1822
        %1824 = vrot.lane.b32.xlu0 %v1779, 112
        %v1825 = vpop.permute.xlu0 %1824
        %1826 = vrot.lane.b32.xlu0 %v1780, 112
        %v1827 = vpop.permute.xlu0 %1826
        %1828 = vrot.lane.b32.xlu0 %v1781, 112
        %v1829 = vpop.permute.xlu0 %1828
        %vm1830 = vcmask 916480
        %v1831 = vsel %vm1830, %v1783, %v1785
        %v1832 = vsel %vm1830, %v1785, %v1787
        %v1833 = vsel %vm1830, %v1789, %v1791
        %v1834 = vsel %vm1830, %v1791, %v1793
        %v1835 = vsel %vm1830, %v1795, %v1797
        %v1836 = vsel %vm1830, %v1797, %v1799
        %v1837 = vsel %vm1830, %v1801, %v1803
        %v1838 = vsel %vm1830, %v1803, %v1805
        %v1839 = vsel %vm1830, %v1807, %v1809
        %v1840 = vsel %vm1830, %v1809, %v1811
        %v1841 = vsel %vm1830, %v1813, %v1815
        %v1842 = vsel %vm1830, %v1815, %v1817
        %v1843 = vsel %vm1830, %v1819, %v1821
        %v1844 = vsel %vm1830, %v1821, %v1823
        %v1845 = vsel %vm1830, %v1825, %v1827
        %v1846 = vsel %vm1830, %v1827, %v1829
        %1863 = vst [vmem:[#allocation3 + $0x30] sm:$0xf0] %v1831
        %1864 = vst [vmem:[#allocation3 + $0x38] sm:$0xf0] %v1832
        %1865 = vst [vmem:[#allocation3 + $0x80] sm:$0xf0] %v1833
        %1866 = vst [vmem:[#allocation3 + $0x88] sm:$0xf0] %v1834
        %1867 = vst [vmem:[#allocation3 + $0xd0] sm:$0xf0] %v1835
        %1868 = vst [vmem:[#allocation3 + $0xd8] sm:$0xf0] %v1836
        %1869 = vst [vmem:[#allocation3 + $0x120] sm:$0xf0] %v1837
        %1870 = vst [vmem:[#allocation3 + $0x128] sm:$0xf0] %v1838
        %1871 = vst [vmem:[#allocation3 + $0x170] sm:$0xf0] %v1839
        %1872 = vst [vmem:[#allocation3 + $0x178] sm:$0xf0] %v1840
        %1873 = vst [vmem:[#allocation3 + $0x1c0] sm:$0xf0] %v1841
        %1874 = vst [vmem:[#allocation3 + $0x1c8] sm:$0xf0] %v1842
        %1875 = vst [vmem:[#allocation3 + $0x210] sm:$0xf0] %v1843
        %1876 = vst [vmem:[#allocation3 + $0x218] sm:$0xf0] %v1844
        %1877 = vst [vmem:[#allocation3 + $0x260] sm:$0xf0] %v1845
        %1878 = vst [vmem:[#allocation3 + $0x268] sm:$0xf0] %v1846
        %v1879 = vld [vmem:[#allocation2 + $0x4] sm:$0xff]
        %v1880 = vld [vmem:[#allocation2 + $0xc] sm:$0xf]
        %v1881 = vld [vmem:[#allocation2 + $0x14] sm:$0xff]
        %v1882 = vld [vmem:[#allocation2 + $0x1c] sm:$0xf]
        %v1883 = vld [vmem:[#allocation2 + $0x24] sm:$0xff]
        %v1884 = vld [vmem:[#allocation2 + $0x2c] sm:$0xf]
        %v1885 = vld [vmem:[#allocation2 + $0x34] sm:$0xff]
        %v1886 = vld [vmem:[#allocation2 + $0x3c] sm:$0xf]
        %v1887 = vld [vmem:[#allocation2 + $0x44] sm:$0xff]
        %v1888 = vld [vmem:[#allocation2 + $0x4c] sm:$0xf]
        %v1889 = vld [vmem:[#allocation2 + $0x54] sm:$0xff]
        %v1890 = vld [vmem:[#allocation2 + $0x5c] sm:$0xf]
        %v1891 = vld [vmem:[#allocation2 + $0x64] sm:$0xff]
        %v1892 = vld [vmem:[#allocation2 + $0x6c] sm:$0xf]
        %v1893 = vld [vmem:[#allocation2 + $0x74] sm:$0xff]
        %v1894 = vld [vmem:[#allocation2 + $0x7c] sm:$0xf]
        %1911 = vst [vmem:[#allocation1] ss:$2 sm:$0xff] %v1879
        %s1912 = scalar_lea.vmem [#allocation1], 16
        %1913 = vst [vmem:[%s1912] ss:$2 sm:$0xff] %v1880
        %v1914 = vld.sshfl [vmem:[#allocation1] sm:$0xff pattern:$0x75316420]
        %v1915 = vld.sshfl [vmem:[#allocation1 + $0x8] sm:$0xff pattern:$0x75316420]
        %v1916 = vld.sshfl [vmem:[#allocation1 + $0x10] sm:$0xff pattern:$0x75316420]
        %s1917 = scalar_lea.vmem [#allocation1], 32
        %1918 = vst [vmem:[%s1917] ss:$2 sm:$0xff] %v1881
        %s1919 = scalar_lea.vmem [#allocation1], 48
        %1920 = vst [vmem:[%s1919] ss:$2 sm:$0xff] %v1882
        %v1921 = vld.sshfl [vmem:[#allocation1 + $0x20] sm:$0xff pattern:$0x75316420]
        %v1922 = vld.sshfl [vmem:[#allocation1 + $0x28] sm:$0xff pattern:$0x75316420]
        %v1923 = vld.sshfl [vmem:[#allocation1 + $0x30] sm:$0xff pattern:$0x75316420]
        %1924 = vst [vmem:[#allocation1] ss:$2 sm:$0xff] %v1883
        %1925 = vst [vmem:[%s1912] ss:$2 sm:$0xff] %v1884
        %v1926 = vld.sshfl [vmem:[#allocation1] sm:$0xff pattern:$0x75316420]
        %v1927 = vld.sshfl [vmem:[#allocation1 + $0x8] sm:$0xff pattern:$0x75316420]
        %v1928 = vld.sshfl [vmem:[#allocation1 + $0x10] sm:$0xff pattern:$0x75316420]
        %1929 = vst [vmem:[%s1917] ss:$2 sm:$0xff] %v1885
        %1930 = vst [vmem:[%s1919] ss:$2 sm:$0xff] %v1886
        %v1931 = vld.sshfl [vmem:[#allocation1 + $0x20] sm:$0xff pattern:$0x75316420]
        %v1932 = vld.sshfl [vmem:[#allocation1 + $0x28] sm:$0xff pattern:$0x75316420]
        %v1933 = vld.sshfl [vmem:[#allocation1 + $0x30] sm:$0xff pattern:$0x75316420]
        %1934 = vst [vmem:[#allocation1] ss:$2 sm:$0xff] %v1887
        %1935 = vst [vmem:[%s1912] ss:$2 sm:$0xff] %v1888
        %v1936 = vld.sshfl [vmem:[#allocation1] sm:$0xff pattern:$0x75316420]
        %v1937 = vld.sshfl [vmem:[#allocation1 + $0x8] sm:$0xff pattern:$0x75316420]
        %v1938 = vld.sshfl [vmem:[#allocation1 + $0x10] sm:$0xff pattern:$0x75316420]
        %1939 = vst [vmem:[%s1917] ss:$2 sm:$0xff] %v1889
        %1940 = vst [vmem:[%s1919] ss:$2 sm:$0xff] %v1890
        %v1941 = vld.sshfl [vmem:[#allocation1 + $0x20] sm:$0xff pattern:$0x75316420]
        %v1942 = vld.sshfl [vmem:[#allocation1 + $0x28] sm:$0xff pattern:$0x75316420]
        %v1943 = vld.sshfl [vmem:[#allocation1 + $0x30] sm:$0xff pattern:$0x75316420]
        %1944 = vst [vmem:[#allocation1] ss:$2 sm:$0xff] %v1891
        %1945 = vst [vmem:[%s1912] ss:$2 sm:$0xff] %v1892
        %v1946 = vld.sshfl [vmem:[#allocation1] sm:$0xff pattern:$0x75316420]
        %v1947 = vld.sshfl [vmem:[#allocation1 + $0x8] sm:$0xff pattern:$0x75316420]
        %v1948 = vld.sshfl [vmem:[#allocation1 + $0x10] sm:$0xff pattern:$0x75316420]
        %1949 = vst [vmem:[%s1917] ss:$2 sm:$0xff] %v1893
        %1950 = vst [vmem:[%s1919] ss:$2 sm:$0xff] %v1894
        %v1951 = vld.sshfl [vmem:[#allocation1 + $0x20] sm:$0xff pattern:$0x75316420]
        %v1952 = vld.sshfl [vmem:[#allocation1 + $0x28] sm:$0xff pattern:$0x75316420]
        %v1953 = vld.sshfl [vmem:[#allocation1 + $0x30] sm:$0xff pattern:$0x75316420]
        %1954 = vrot.lane.b32.xlu0 %v1914, 111
        %v1955 = vpop.permute.xlu0 %1954
        %1956 = vrot.lane.b32.xlu0 %v1915, 111
        %v1957 = vpop.permute.xlu0 %1956
        %1958 = vrot.lane.b32.xlu0 %v1916, 111
        %v1959 = vpop.permute.xlu0 %1958
        %1960 = vrot.lane.b32.xlu0 %v1921, 111
        %v1961 = vpop.permute.xlu0 %1960
        %1962 = vrot.lane.b32.xlu0 %v1922, 111
        %v1963 = vpop.permute.xlu0 %1962
        %1964 = vrot.lane.b32.xlu0 %v1923, 111
        %v1965 = vpop.permute.xlu0 %1964
        %1966 = vrot.lane.b32.xlu0 %v1926, 111
        %v1967 = vpop.permute.xlu0 %1966
        %1968 = vrot.lane.b32.xlu0 %v1927, 111
        %v1969 = vpop.permute.xlu0 %1968
        %1970 = vrot.lane.b32.xlu0 %v1928, 111
        %v1971 = vpop.permute.xlu0 %1970
        %1972 = vrot.lane.b32.xlu0 %v1931, 111
        %v1973 = vpop.permute.xlu0 %1972
        %1974 = vrot.lane.b32.xlu0 %v1932, 111
        %v1975 = vpop.permute.xlu0 %1974
        %1976 = vrot.lane.b32.xlu0 %v1933, 111
        %v1977 = vpop.permute.xlu0 %1976
        %1978 = vrot.lane.b32.xlu0 %v1936, 111
        %v1979 = vpop.permute.xlu0 %1978
        %1980 = vrot.lane.b32.xlu0 %v1937, 111
        %v1981 = vpop.permute.xlu0 %1980
        %1982 = vrot.lane.b32.xlu0 %v1938, 111
        %v1983 = vpop.permute.xlu0 %1982
        %1984 = vrot.lane.b32.xlu0 %v1941, 111
        %v1985 = vpop.permute.xlu0 %1984
        %1986 = vrot.lane.b32.xlu0 %v1942, 111
        %v1987 = vpop.permute.xlu0 %1986
        %1988 = vrot.lane.b32.xlu0 %v1943, 111
        %v1989 = vpop.permute.xlu0 %1988
        %1990 = vrot.lane.b32.xlu0 %v1946, 111
        %v1991 = vpop.permute.xlu0 %1990
        %1992 = vrot.lane.b32.xlu0 %v1947, 111
        %v1993 = vpop.permute.xlu0 %1992
        %1994 = vrot.lane.b32.xlu0 %v1948, 111
        %v1995 = vpop.permute.xlu0 %1994
        %1996 = vrot.lane.b32.xlu0 %v1951, 111
        %v1997 = vpop.permute.xlu0 %1996
        %1998 = vrot.lane.b32.xlu0 %v1952, 111
        %v1999 = vpop.permute.xlu0 %1998
        %2000 = vrot.lane.b32.xlu0 %v1953, 111
        %v2001 = vpop.permute.xlu0 %2000
        %vm2002 = vcmask 908288
        %v2003 = vsel %vm2002, %v1955, %v1957
        %v2004 = vsel %vm2002, %v1957, %v1959
        %v2005 = vsel %vm2002, %v1961, %v1963
        %v2006 = vsel %vm2002, %v1963, %v1965
        %v2007 = vsel %vm2002, %v1967, %v1969
        %v2008 = vsel %vm2002, %v1969, %v1971
        %v2009 = vsel %vm2002, %v1973, %v1975
        %v2010 = vsel %vm2002, %v1975, %v1977
        %v2011 = vsel %vm2002, %v1979, %v1981
        %v2012 = vsel %vm2002, %v1981, %v1983
        %v2013 = vsel %vm2002, %v1985, %v1987
        %v2014 = vsel %vm2002, %v1987, %v1989
        %v2015 = vsel %vm2002, %v1991, %v1993
        %v2016 = vsel %vm2002, %v1993, %v1995
        %v2017 = vsel %vm2002, %v1997, %v1999
        %v2018 = vsel %vm2002, %v1999, %v2001
        %v2035 = vsel %vm797, %v2003, 0.0
        %v2036 = vsel %vm798, %v2004, 0.0
        %v2037 = vsel %vm797, %v2005, 0.0
        %v2038 = vsel %vm798, %v2006, 0.0
        %v2039 = vsel %vm797, %v2007, 0.0
        %v2040 = vsel %vm798, %v2008, 0.0
        %v2041 = vsel %vm797, %v2009, 0.0
        %v2042 = vsel %vm798, %v2010, 0.0
        %v2043 = vsel %vm797, %v2011, 0.0
        %v2044 = vsel %vm798, %v2012, 0.0
        %v2045 = vsel %vm797, %v2013, 0.0
        %v2046 = vsel %vm798, %v2014, 0.0
        %v2047 = vsel %vm797, %v2015, 0.0
        %v2048 = vsel %vm798, %v2016, 0.0
        %v2049 = vsel %vm797, %v2017, 0.0
        %v2050 = vsel %vm798, %v2018, 0.0
        %2051 = vst [vmem:[#allocation3 + $0x40] sm:$0xf] %v2035
        %2052 = vst [vmem:[#allocation3 + $0x48] sm:$0xf] %v2036
        %2053 = vst [vmem:[#allocation3 + $0x90] sm:$0xf] %v2037
        %2054 = vst [vmem:[#allocation3 + $0x98] sm:$0xf] %v2038
        %2055 = vst [vmem:[#allocation3 + $0xe0] sm:$0xf] %v2039
        %2056 = vst [vmem:[#allocation3 + $0xe8] sm:$0xf] %v2040
        %2057 = vst [vmem:[#allocation3 + $0x130] sm:$0xf] %v2041
        %2058 = vst [vmem:[#allocation3 + $0x138] sm:$0xf] %v2042
        %2059 = vst [vmem:[#allocation3 + $0x180] sm:$0xf] %v2043
        %2060 = vst [vmem:[#allocation3 + $0x188] sm:$0xf] %v2044
        %2061 = vst [vmem:[#allocation3 + $0x1d0] sm:$0xf] %v2045
        %2062 = vst [vmem:[#allocation3 + $0x1d8] sm:$0xf] %v2046
        %2063 = vst [vmem:[#allocation3 + $0x220] sm:$0xf] %v2047
        %2064 = vst [vmem:[#allocation3 + $0x228] sm:$0xf] %v2048
        %2065 = vst [vmem:[#allocation3 + $0x270] sm:$0xf] %v2049
        %2066 = vst [vmem:[#allocation3 + $0x278] sm:$0xf] %v2050
        %v2067 = vld [vmem:[%s1] sm:$0xff]
        %v2068 = vld [vmem:[%s1 + $0x8] sm:$0xff]
        %v2069 = vld [vmem:[%s1 + $0x10] sm:$0xff]
        %v2070 = vld [vmem:[%s1 + $0x18] sm:$0xff]
        %v2071 = vld [vmem:[%s1 + $0x20] sm:$0xff]
        %v2072 = vld [vmem:[%s1 + $0x28] sm:$0xff]
        %v2073 = vld [vmem:[%s1 + $0x30] sm:$0xff]
        %v2074 = vld [vmem:[%s1 + $0x38] sm:$0xff]
        %v2075 = vld [vmem:[#allocation3] sm:$0xff]
        %v2076 = vld [vmem:[#allocation3 + $0x8] sm:$0xff]
        %v2077 = vld [vmem:[#allocation3 + $0x10] sm:$0xff]
        %v2078 = vld [vmem:[#allocation3 + $0x18] sm:$0xff]
        %v2079 = vld [vmem:[#allocation3 + $0x20] sm:$0xff]
        %v2080 = vld [vmem:[#allocation3 + $0x28] sm:$0xff]
        %v2081 = vld [vmem:[#allocation3 + $0x30] sm:$0xff]
        %v2082 = vld [vmem:[#allocation3 + $0x38] sm:$0xff]
        %v2083 = vld [vmem:[#allocation3 + $0x40] sm:$0xf]
        %v2084 = vld [vmem:[#allocation3 + $0x48] sm:$0xf]
        %vm2085 = vcmask 293888
        %v2087 = vsel %vm2085, %v2067, 0
        %v2090 = vsel %vm2085, %v2068, 0
        %v2093 = vsel %vm2085, %v2069, 0
        %v2096 = vsel %vm2085, %v2070, 0
        %v2099 = vsel %vm2085, %v2071, 0
        %v2102 = vsel %vm2085, %v2072, 0
        %v2105 = vsel %vm2085, %v2073, 0
        %v2108 = vsel %vm2085, %v2074, 0
        %vm2110 = vcmask 1043456
        %v2112 = vsel %vm2110, %v2083, 0
        %v2115 = vsel %vm2110, %v2084, 0
        %2117 = vmatpush.msra.mxu0 0.0
        %2118 = vmatpush.msra.mxu0 0.0
        %2119 = vmatpush.msra.mxu0 0.0
        %2120 = vmatpush.msra.mxu0 0.0
        %2121 = vmatpush.msra.mxu0 0.0
        %2122 = vmatpush.msra.mxu0 0.0
        %2123 = vmatpush.msra.mxu0 0.0
        %2124 = vmatpush.msra.mxu0 0.0
        %2125 = vmatpush.msra.mxu0 0.0
        %2126 = vmatpush.msra.mxu0 0.0
        %2127 = vmatpush.msra.mxu0 0.0
        %2128 = vmatpush.msra.mxu0 %v2112
        %2129 = vmatpush.msra.mxu0 %v2081
        %2130 = vmatpush.msra.mxu0 %v2079
        %2131 = vmatpush.msra.mxu0 %v2077
        %2132 = vmatpush.msra.mxu0 %v2075
        %2133 = vmatmul.f32.gmra.mxu0 %v2087
        %v2134 = vpop.f32.mrf.mxu0
        %v2135 = vadd.f32 0.0, %v2134
        %2136 = vmatmul.f32.gmra.mxu0 %v2090
        %v2137 = vpop.f32.mrf.mxu0
        %v2138 = vadd.f32 0.0, %v2137
        %2139 = vmatmul.f32.gmra.mxu0 %v2093
        %v2140 = vpop.f32.mrf.mxu0
        %v2141 = vadd.f32 0.0, %v2140
        %2142 = vmatmul.f32.gmra.mxu0 %v2096
        %v2143 = vpop.f32.mrf.mxu0
        %v2144 = vadd.f32 0.0, %v2143
        %2145 = vmatmul.f32.gmra.mxu0 %v2099
        %v2146 = vpop.f32.mrf.mxu0
        %v2147 = vadd.f32 0.0, %v2146
        %2148 = vmatmul.f32.gmra.mxu0 %v2102
        %v2149 = vpop.f32.mrf.mxu0
        %v2150 = vadd.f32 0.0, %v2149
        %2151 = vmatmul.f32.gmra.mxu0 %v2105
        %v2152 = vpop.f32.mrf.mxu0
        %v2153 = vadd.f32 0.0, %v2152
        %2154 = vmatmul.f32.gmra.mxu0 %v2108
        %v2155 = vpop.f32.mrf.mxu0
        %v2156 = vadd.f32 0.0, %v2155
        %2157 = vdwg.mxu0
        %2158 = vmatpush.msra.mxu0 0.0
        %2159 = vmatpush.msra.mxu0 0.0
        %2160 = vmatpush.msra.mxu0 0.0
        %2161 = vmatpush.msra.mxu0 0.0
        %2162 = vmatpush.msra.mxu0 0.0
        %2163 = vmatpush.msra.mxu0 0.0
        %2164 = vmatpush.msra.mxu0 0.0
        %2165 = vmatpush.msra.mxu0 0.0
        %2166 = vmatpush.msra.mxu0 0.0
        %2167 = vmatpush.msra.mxu0 0.0
        %2168 = vmatpush.msra.mxu0 0.0
        %2169 = vmatpush.msra.mxu0 %v2115
        %2170 = vmatpush.msra.mxu0 %v2082
        %2171 = vmatpush.msra.mxu0 %v2080
        %2172 = vmatpush.msra.mxu0 %v2078
        %2173 = vmatpush.msra.mxu0 %v2076
        %2174 = vmatmul.f32.gmra.mxu0 %v2087
        %v2175 = vpop.f32.mrf.mxu0
        %v2176 = vadd.f32 0.0, %v2175
        %2177 = vmatmul.f32.gmra.mxu0 %v2090
        %v2178 = vpop.f32.mrf.mxu0
        %v2179 = vadd.f32 0.0, %v2178
        %2180 = vmatmul.f32.gmra.mxu0 %v2093
        %v2181 = vpop.f32.mrf.mxu0
        %v2182 = vadd.f32 0.0, %v2181
        %2183 = vmatmul.f32.gmra.mxu0 %v2096
        %v2184 = vpop.f32.mrf.mxu0
        %v2185 = vadd.f32 0.0, %v2184
        %2186 = vmatmul.f32.gmra.mxu0 %v2099
        %v2187 = vpop.f32.mrf.mxu0
        %v2188 = vadd.f32 0.0, %v2187
        %2189 = vmatmul.f32.gmra.mxu0 %v2102
        %v2190 = vpop.f32.mrf.mxu0
        %v2191 = vadd.f32 0.0, %v2190
        %2192 = vmatmul.f32.gmra.mxu0 %v2105
        %v2193 = vpop.f32.mrf.mxu0
        %v2194 = vadd.f32 0.0, %v2193
        %2195 = vmatmul.f32.gmra.mxu0 %v2108
        %v2196 = vpop.f32.mrf.mxu0
        %v2197 = vadd.f32 0.0, %v2196
        %2198 = vdwg.mxu0
        %2199 = vst [vmem:[%s181] sm:$0xff] %v2135
        %2200 = vst [vmem:[%s181 + $0x8] sm:$0xff] %v2176
        %2201 = vst [vmem:[%s181 + $0x10] sm:$0xff] %v2138
        %2202 = vst [vmem:[%s181 + $0x18] sm:$0xff] %v2179
        %2203 = vst [vmem:[%s181 + $0x20] sm:$0xff] %v2141
        %2204 = vst [vmem:[%s181 + $0x28] sm:$0xff] %v2182
        %2205 = vst [vmem:[%s181 + $0x30] sm:$0xff] %v2144
        %2206 = vst [vmem:[%s181 + $0x38] sm:$0xff] %v2185
        %2207 = vst [vmem:[%s181 + $0x40] sm:$0xff] %v2147
        %2208 = vst [vmem:[%s181 + $0x48] sm:$0xff] %v2188
        %2209 = vst [vmem:[%s181 + $0x50] sm:$0xff] %v2150
        %2210 = vst [vmem:[%s181 + $0x58] sm:$0xff] %v2191
        %2211 = vst [vmem:[%s181 + $0x60] sm:$0xff] %v2153
        %2212 = vst [vmem:[%s181 + $0x68] sm:$0xff] %v2194
        %2213 = vst [vmem:[%s181 + $0x70] sm:$0xff] %v2156
        %2214 = vst [vmem:[%s181 + $0x78] sm:$0xff] %v2197
        %s2215 = scalar_lea.vmem [#allocation3], 80
        %v2216 = vld [vmem:[%s2215] sm:$0xff]
        %v2217 = vld [vmem:[%s2215 + $0x8] sm:$0xff]
        %v2218 = vld [vmem:[%s2215 + $0x10] sm:$0xff]
        %v2219 = vld [vmem:[%s2215 + $0x18] sm:$0xff]
        %v2220 = vld [vmem:[%s2215 + $0x20] sm:$0xff]
        %v2221 = vld [vmem:[%s2215 + $0x28] sm:$0xff]
        %v2222 = vld [vmem:[%s2215 + $0x30] sm:$0xff]
        %v2223 = vld [vmem:[%s2215 + $0x38] sm:$0xff]
        %v2224 = vld [vmem:[%s2215 + $0x40] sm:$0xf]
        %v2225 = vld [vmem:[%s2215 + $0x48] sm:$0xf]
        %v2227 = vsel %vm2110, %v2224, 0
        %v2230 = vsel %vm2110, %v2225, 0
        %2232 = vmatpush.msra.mxu0 0.0
        %2233 = vmatpush.msra.mxu0 0.0
        %2234 = vmatpush.msra.mxu0 0.0
        %2235 = vmatpush.msra.mxu0 0.0
        %2236 = vmatpush.msra.mxu0 0.0
        %2237 = vmatpush.msra.mxu0 0.0
        %2238 = vmatpush.msra.mxu0 0.0
        %2239 = vmatpush.msra.mxu0 0.0
        %2240 = vmatpush.msra.mxu0 0.0
        %2241 = vmatpush.msra.mxu0 0.0
        %2242 = vmatpush.msra.mxu0 0.0
        %2243 = vmatpush.msra.mxu0 %v2227
        %2244 = vmatpush.msra.mxu0 %v2222
        %2245 = vmatpush.msra.mxu0 %v2220
        %2246 = vmatpush.msra.mxu0 %v2218
        %2247 = vmatpush.msra.mxu0 %v2216
        %2248 = vmatmul.f32.gmra.mxu0 %v2087
        %v2249 = vpop.f32.mrf.mxu0
        %v2250 = vadd.f32 0.0, %v2249
        %2251 = vmatmul.f32.gmra.mxu0 %v2090
        %v2252 = vpop.f32.mrf.mxu0
        %v2253 = vadd.f32 0.0, %v2252
        %2254 = vmatmul.f32.gmra.mxu0 %v2093
        %v2255 = vpop.f32.mrf.mxu0
        %v2256 = vadd.f32 0.0, %v2255
        %2257 = vmatmul.f32.gmra.mxu0 %v2096
        %v2258 = vpop.f32.mrf.mxu0
        %v2259 = vadd.f32 0.0, %v2258
        %2260 = vmatmul.f32.gmra.mxu0 %v2099
        %v2261 = vpop.f32.mrf.mxu0
        %v2262 = vadd.f32 0.0, %v2261
        %2263 = vmatmul.f32.gmra.mxu0 %v2102
        %v2264 = vpop.f32.mrf.mxu0
        %v2265 = vadd.f32 0.0, %v2264
        %2266 = vmatmul.f32.gmra.mxu0 %v2105
        %v2267 = vpop.f32.mrf.mxu0
        %v2268 = vadd.f32 0.0, %v2267
        %2269 = vmatmul.f32.gmra.mxu0 %v2108
        %v2270 = vpop.f32.mrf.mxu0
        %v2271 = vadd.f32 0.0, %v2270
        %2272 = vdwg.mxu0
        %2273 = vmatpush.msra.mxu0 0.0
        %2274 = vmatpush.msra.mxu0 0.0
        %2275 = vmatpush.msra.mxu0 0.0
        %2276 = vmatpush.msra.mxu0 0.0
        %2277 = vmatpush.msra.mxu0 0.0
        %2278 = vmatpush.msra.mxu0 0.0
        %2279 = vmatpush.msra.mxu0 0.0
        %2280 = vmatpush.msra.mxu0 0.0
        %2281 = vmatpush.msra.mxu0 0.0
        %2282 = vmatpush.msra.mxu0 0.0
        %2283 = vmatpush.msra.mxu0 0.0
        %2284 = vmatpush.msra.mxu0 %v2230
        %2285 = vmatpush.msra.mxu0 %v2223
        %2286 = vmatpush.msra.mxu0 %v2221
        %2287 = vmatpush.msra.mxu0 %v2219
        %2288 = vmatpush.msra.mxu0 %v2217
        %2289 = vmatmul.f32.gmra.mxu0 %v2087
        %v2290 = vpop.f32.mrf.mxu0
        %v2291 = vadd.f32 0.0, %v2290
        %2292 = vmatmul.f32.gmra.mxu0 %v2090
        %v2293 = vpop.f32.mrf.mxu0
        %v2294 = vadd.f32 0.0, %v2293
        %2295 = vmatmul.f32.gmra.mxu0 %v2093
        %v2296 = vpop.f32.mrf.mxu0
        %v2297 = vadd.f32 0.0, %v2296
        %2298 = vmatmul.f32.gmra.mxu0 %v2096
        %v2299 = vpop.f32.mrf.mxu0
        %v2300 = vadd.f32 0.0, %v2299
        %2301 = vmatmul.f32.gmra.mxu0 %v2099
        %v2302 = vpop.f32.mrf.mxu0
        %v2303 = vadd.f32 0.0, %v2302
        %2304 = vmatmul.f32.gmra.mxu0 %v2102
        %v2305 = vpop.f32.mrf.mxu0
        %v2306 = vadd.f32 0.0, %v2305
        %2307 = vmatmul.f32.gmra.mxu0 %v2105
        %v2308 = vpop.f32.mrf.mxu0
        %v2309 = vadd.f32 0.0, %v2308
        %2310 = vmatmul.f32.gmra.mxu0 %v2108
        %v2311 = vpop.f32.mrf.mxu0
        %v2312 = vadd.f32 0.0, %v2311
        %2313 = vdwg.mxu0
        %s2314 = scalar_lea.vmem %s181, 128 [#allocation7]
        %2315 = vst [vmem:[%s2314] sm:$0xff] %v2250
        %2316 = vst [vmem:[%s2314 + $0x8] sm:$0xff] %v2291
        %2317 = vst [vmem:[%s2314 + $0x10] sm:$0xff] %v2253
        %2318 = vst [vmem:[%s2314 + $0x18] sm:$0xff] %v2294
        %2319 = vst [vmem:[%s2314 + $0x20] sm:$0xff] %v2256
        %2320 = vst [vmem:[%s2314 + $0x28] sm:$0xff] %v2297
        %2321 = vst [vmem:[%s2314 + $0x30] sm:$0xff] %v2259
        %2322 = vst [vmem:[%s2314 + $0x38] sm:$0xff] %v2300
        %2323 = vst [vmem:[%s2314 + $0x40] sm:$0xff] %v2262
        %2324 = vst [vmem:[%s2314 + $0x48] sm:$0xff] %v2303
        %2325 = vst [vmem:[%s2314 + $0x50] sm:$0xff] %v2265
        %2326 = vst [vmem:[%s2314 + $0x58] sm:$0xff] %v2306
        %2327 = vst [vmem:[%s2314 + $0x60] sm:$0xff] %v2268
        %2328 = vst [vmem:[%s2314 + $0x68] sm:$0xff] %v2309
        %2329 = vst [vmem:[%s2314 + $0x70] sm:$0xff] %v2271
        %2330 = vst [vmem:[%s2314 + $0x78] sm:$0xff] %v2312
        %s2331 = scalar_lea.vmem [#allocation3], 160
        %v2332 = vld [vmem:[%s2331] sm:$0xff]
        %v2333 = vld [vmem:[%s2331 + $0x8] sm:$0xff]
        %v2334 = vld [vmem:[%s2331 + $0x10] sm:$0xff]
        %v2335 = vld [vmem:[%s2331 + $0x18] sm:$0xff]
        %v2336 = vld [vmem:[%s2331 + $0x20] sm:$0xff]
        %v2337 = vld [vmem:[%s2331 + $0x28] sm:$0xff]
        %v2338 = vld [vmem:[%s2331 + $0x30] sm:$0xff]
        %v2339 = vld [vmem:[%s2331 + $0x38] sm:$0xff]
        %v2340 = vld [vmem:[%s2331 + $0x40] sm:$0xf]
        %v2341 = vld [vmem:[%s2331 + $0x48] sm:$0xf]
        %v2343 = vsel %vm2110, %v2340, 0
        %v2346 = vsel %vm2110, %v2341, 0
        %2348 = vmatpush.msra.mxu0 0.0
        %2349 = vmatpush.msra.mxu0 0.0
        %2350 = vmatpush.msra.mxu0 0.0
        %2351 = vmatpush.msra.mxu0 0.0
        %2352 = vmatpush.msra.mxu0 0.0
        %2353 = vmatpush.msra.mxu0 0.0
        %2354 = vmatpush.msra.mxu0 0.0
        %2355 = vmatpush.msra.mxu0 0.0
        %2356 = vmatpush.msra.mxu0 0.0
        %2357 = vmatpush.msra.mxu0 0.0
        %2358 = vmatpush.msra.mxu0 0.0
        %2359 = vmatpush.msra.mxu0 %v2343
        %2360 = vmatpush.msra.mxu0 %v2338
        %2361 = vmatpush.msra.mxu0 %v2336
        %2362 = vmatpush.msra.mxu0 %v2334
        %2363 = vmatpush.msra.mxu0 %v2332
        %2364 = vmatmul.f32.gmra.mxu0 %v2087
        %v2365 = vpop.f32.mrf.mxu0
        %v2366 = vadd.f32 0.0, %v2365
        %2367 = vmatmul.f32.gmra.mxu0 %v2090
        %v2368 = vpop.f32.mrf.mxu0
        %v2369 = vadd.f32 0.0, %v2368
        %2370 = vmatmul.f32.gmra.mxu0 %v2093
        %v2371 = vpop.f32.mrf.mxu0
        %v2372 = vadd.f32 0.0, %v2371
        %2373 = vmatmul.f32.gmra.mxu0 %v2096
        %v2374 = vpop.f32.mrf.mxu0
        %v2375 = vadd.f32 0.0, %v2374
        %2376 = vmatmul.f32.gmra.mxu0 %v2099
        %v2377 = vpop.f32.mrf.mxu0
        %v2378 = vadd.f32 0.0, %v2377
        %2379 = vmatmul.f32.gmra.mxu0 %v2102
        %v2380 = vpop.f32.mrf.mxu0
        %v2381 = vadd.f32 0.0, %v2380
        %2382 = vmatmul.f32.gmra.mxu0 %v2105
        %v2383 = vpop.f32.mrf.mxu0
        %v2384 = vadd.f32 0.0, %v2383
        %2385 = vmatmul.f32.gmra.mxu0 %v2108
        %v2386 = vpop.f32.mrf.mxu0
        %v2387 = vadd.f32 0.0, %v2386
        %2388 = vdwg.mxu0
        %2389 = vmatpush.msra.mxu0 0.0
        %2390 = vmatpush.msra.mxu0 0.0
        %2391 = vmatpush.msra.mxu0 0.0
        %2392 = vmatpush.msra.mxu0 0.0
        %2393 = vmatpush.msra.mxu0 0.0
        %2394 = vmatpush.msra.mxu0 0.0
        %2395 = vmatpush.msra.mxu0 0.0
        %2396 = vmatpush.msra.mxu0 0.0
        %2397 = vmatpush.msra.mxu0 0.0
        %2398 = vmatpush.msra.mxu0 0.0
        %2399 = vmatpush.msra.mxu0 0.0
        %2400 = vmatpush.msra.mxu0 %v2346
        %2401 = vmatpush.msra.mxu0 %v2339
        %2402 = vmatpush.msra.mxu0 %v2337
        %2403 = vmatpush.msra.mxu0 %v2335
        %2404 = vmatpush.msra.mxu0 %v2333
        %2405 = vmatmul.f32.gmra.mxu0 %v2087
        %v2406 = vpop.f32.mrf.mxu0
        %v2407 = vadd.f32 0.0, %v2406
        %2408 = vmatmul.f32.gmra.mxu0 %v2090
        %v2409 = vpop.f32.mrf.mxu0
        %v2410 = vadd.f32 0.0, %v2409
        %2411 = vmatmul.f32.gmra.mxu0 %v2093
        %v2412 = vpop.f32.mrf.mxu0
        %v2413 = vadd.f32 0.0, %v2412
        %2414 = vmatmul.f32.gmra.mxu0 %v2096
        %v2415 = vpop.f32.mrf.mxu0
        %v2416 = vadd.f32 0.0, %v2415
        %2417 = vmatmul.f32.gmra.mxu0 %v2099
        %v2418 = vpop.f32.mrf.mxu0
        %v2419 = vadd.f32 0.0, %v2418
        %2420 = vmatmul.f32.gmra.mxu0 %v2102
        %v2421 = vpop.f32.mrf.mxu0
        %v2422 = vadd.f32 0.0, %v2421
        %2423 = vmatmul.f32.gmra.mxu0 %v2105
        %v2424 = vpop.f32.mrf.mxu0
        %v2425 = vadd.f32 0.0, %v2424
        %2426 = vmatmul.f32.gmra.mxu0 %v2108
        %v2427 = vpop.f32.mrf.mxu0
        %v2428 = vadd.f32 0.0, %v2427
        %2429 = vdwg.mxu0
        %s2430 = scalar_lea.vmem %s181, 256 [#allocation7]
        %2431 = vst [vmem:[%s2430] sm:$0xff] %v2366
        %2432 = vst [vmem:[%s2430 + $0x8] sm:$0xff] %v2407
        %2433 = vst [vmem:[%s2430 + $0x10] sm:$0xff] %v2369
        %2434 = vst [vmem:[%s2430 + $0x18] sm:$0xff] %v2410
        %2435 = vst [vmem:[%s2430 + $0x20] sm:$0xff] %v2372
        %2436 = vst [vmem:[%s2430 + $0x28] sm:$0xff] %v2413
        %2437 = vst [vmem:[%s2430 + $0x30] sm:$0xff] %v2375
        %2438 = vst [vmem:[%s2430 + $0x38] sm:$0xff] %v2416
        %2439 = vst [vmem:[%s2430 + $0x40] sm:$0xff] %v2378
        %2440 = vst [vmem:[%s2430 + $0x48] sm:$0xff] %v2419
        %2441 = vst [vmem:[%s2430 + $0x50] sm:$0xff] %v2381
        %2442 = vst [vmem:[%s2430 + $0x58] sm:$0xff] %v2422
        %2443 = vst [vmem:[%s2430 + $0x60] sm:$0xff] %v2384
        %2444 = vst [vmem:[%s2430 + $0x68] sm:$0xff] %v2425
        %2445 = vst [vmem:[%s2430 + $0x70] sm:$0xff] %v2387
        %2446 = vst [vmem:[%s2430 + $0x78] sm:$0xff] %v2428
        %s2447 = scalar_lea.vmem [#allocation3], 240
        %v2448 = vld [vmem:[%s2447] sm:$0xff]
        %v2449 = vld [vmem:[%s2447 + $0x8] sm:$0xff]
        %v2450 = vld [vmem:[%s2447 + $0x10] sm:$0xff]
        %v2451 = vld [vmem:[%s2447 + $0x18] sm:$0xff]
        %v2452 = vld [vmem:[%s2447 + $0x20] sm:$0xff]
        %v2453 = vld [vmem:[%s2447 + $0x28] sm:$0xff]
        %v2454 = vld [vmem:[%s2447 + $0x30] sm:$0xff]
        %v2455 = vld [vmem:[%s2447 + $0x38] sm:$0xff]
        %v2456 = vld [vmem:[%s2447 + $0x40] sm:$0xf]
        %v2457 = vld [vmem:[%s2447 + $0x48] sm:$0xf]
        %v2459 = vsel %vm2110, %v2456, 0
        %v2462 = vsel %vm2110, %v2457, 0
        %2464 = vmatpush.msra.mxu0 0.0
        %2465 = vmatpush.msra.mxu0 0.0
        %2466 = vmatpush.msra.mxu0 0.0
        %2467 = vmatpush.msra.mxu0 0.0
        %2468 = vmatpush.msra.mxu0 0.0
        %2469 = vmatpush.msra.mxu0 0.0
        %2470 = vmatpush.msra.mxu0 0.0
        %2471 = vmatpush.msra.mxu0 0.0
        %2472 = vmatpush.msra.mxu0 0.0
        %2473 = vmatpush.msra.mxu0 0.0
        %2474 = vmatpush.msra.mxu0 0.0
        %2475 = vmatpush.msra.mxu0 %v2459
        %2476 = vmatpush.msra.mxu0 %v2454
        %2477 = vmatpush.msra.mxu0 %v2452
        %2478 = vmatpush.msra.mxu0 %v2450
        %2479 = vmatpush.msra.mxu0 %v2448
        %2480 = vmatmul.f32.gmra.mxu0 %v2087
        %v2481 = vpop.f32.mrf.mxu0
        %v2482 = vadd.f32 0.0, %v2481
        %2483 = vmatmul.f32.gmra.mxu0 %v2090
        %v2484 = vpop.f32.mrf.mxu0
        %v2485 = vadd.f32 0.0, %v2484
        %2486 = vmatmul.f32.gmra.mxu0 %v2093
        %v2487 = vpop.f32.mrf.mxu0
        %v2488 = vadd.f32 0.0, %v2487
        %2489 = vmatmul.f32.gmra.mxu0 %v2096
        %v2490 = vpop.f32.mrf.mxu0
        %v2491 = vadd.f32 0.0, %v2490
        %2492 = vmatmul.f32.gmra.mxu0 %v2099
        %v2493 = vpop.f32.mrf.mxu0
        %v2494 = vadd.f32 0.0, %v2493
        %2495 = vmatmul.f32.gmra.mxu0 %v2102
        %v2496 = vpop.f32.mrf.mxu0
        %v2497 = vadd.f32 0.0, %v2496
        %2498 = vmatmul.f32.gmra.mxu0 %v2105
        %v2499 = vpop.f32.mrf.mxu0
        %v2500 = vadd.f32 0.0, %v2499
        %2501 = vmatmul.f32.gmra.mxu0 %v2108
        %v2502 = vpop.f32.mrf.mxu0
        %v2503 = vadd.f32 0.0, %v2502
        %2504 = vdwg.mxu0
        %2505 = vmatpush.msra.mxu0 0.0
        %2506 = vmatpush.msra.mxu0 0.0
        %2507 = vmatpush.msra.mxu0 0.0
        %2508 = vmatpush.msra.mxu0 0.0
        %2509 = vmatpush.msra.mxu0 0.0
        %2510 = vmatpush.msra.mxu0 0.0
        %2511 = vmatpush.msra.mxu0 0.0
        %2512 = vmatpush.msra.mxu0 0.0
        %2513 = vmatpush.msra.mxu0 0.0
        %2514 = vmatpush.msra.mxu0 0.0
        %2515 = vmatpush.msra.mxu0 0.0
        %2516 = vmatpush.msra.mxu0 %v2462
        %2517 = vmatpush.msra.mxu0 %v2455
        %2518 = vmatpush.msra.mxu0 %v2453
        %2519 = vmatpush.msra.mxu0 %v2451
        %2520 = vmatpush.msra.mxu0 %v2449
        %2521 = vmatmul.f32.gmra.mxu0 %v2087
        %v2522 = vpop.f32.mrf.mxu0
        %v2523 = vadd.f32 0.0, %v2522
        %2524 = vmatmul.f32.gmra.mxu0 %v2090
        %v2525 = vpop.f32.mrf.mxu0
        %v2526 = vadd.f32 0.0, %v2525
        %2527 = vmatmul.f32.gmra.mxu0 %v2093
        %v2528 = vpop.f32.mrf.mxu0
        %v2529 = vadd.f32 0.0, %v2528
        %2530 = vmatmul.f32.gmra.mxu0 %v2096
        %v2531 = vpop.f32.mrf.mxu0
        %v2532 = vadd.f32 0.0, %v2531
        %2533 = vmatmul.f32.gmra.mxu0 %v2099
        %v2534 = vpop.f32.mrf.mxu0
        %v2535 = vadd.f32 0.0, %v2534
        %2536 = vmatmul.f32.gmra.mxu0 %v2102
        %v2537 = vpop.f32.mrf.mxu0
        %v2538 = vadd.f32 0.0, %v2537
        %2539 = vmatmul.f32.gmra.mxu0 %v2105
        %v2540 = vpop.f32.mrf.mxu0
        %v2541 = vadd.f32 0.0, %v2540
        %2542 = vmatmul.f32.gmra.mxu0 %v2108
        %v2543 = vpop.f32.mrf.mxu0
        %v2544 = vadd.f32 0.0, %v2543
        %2545 = vdwg.mxu0
        %s2546 = scalar_lea.vmem %s181, 384 [#allocation7]
        %2547 = vst [vmem:[%s2546] sm:$0xff] %v2482
        %2548 = vst [vmem:[%s2546 + $0x8] sm:$0xff] %v2523
        %2549 = vst [vmem:[%s2546 + $0x10] sm:$0xff] %v2485
        %2550 = vst [vmem:[%s2546 + $0x18] sm:$0xff] %v2526
        %2551 = vst [vmem:[%s2546 + $0x20] sm:$0xff] %v2488
        %2552 = vst [vmem:[%s2546 + $0x28] sm:$0xff] %v2529
        %2553 = vst [vmem:[%s2546 + $0x30] sm:$0xff] %v2491
        %2554 = vst [vmem:[%s2546 + $0x38] sm:$0xff] %v2532
        %2555 = vst [vmem:[%s2546 + $0x40] sm:$0xff] %v2494
        %2556 = vst [vmem:[%s2546 + $0x48] sm:$0xff] %v2535
        %2557 = vst [vmem:[%s2546 + $0x50] sm:$0xff] %v2497
        %2558 = vst [vmem:[%s2546 + $0x58] sm:$0xff] %v2538
        %2559 = vst [vmem:[%s2546 + $0x60] sm:$0xff] %v2500
        %2560 = vst [vmem:[%s2546 + $0x68] sm:$0xff] %v2541
        %2561 = vst [vmem:[%s2546 + $0x70] sm:$0xff] %v2503
        %2562 = vst [vmem:[%s2546 + $0x78] sm:$0xff] %v2544
        %s2563 = scalar_lea.vmem [#allocation3], 320
        %v2564 = vld [vmem:[%s2563] sm:$0xff]
        %v2565 = vld [vmem:[%s2563 + $0x8] sm:$0xff]
        %v2566 = vld [vmem:[%s2563 + $0x10] sm:$0xff]
        %v2567 = vld [vmem:[%s2563 + $0x18] sm:$0xff]
        %v2568 = vld [vmem:[%s2563 + $0x20] sm:$0xff]
        %v2569 = vld [vmem:[%s2563 + $0x28] sm:$0xff]
        %v2570 = vld [vmem:[%s2563 + $0x30] sm:$0xff]
        %v2571 = vld [vmem:[%s2563 + $0x38] sm:$0xff]
        %v2572 = vld [vmem:[%s2563 + $0x40] sm:$0xf]
        %v2573 = vld [vmem:[%s2563 + $0x48] sm:$0xf]
        %v2575 = vsel %vm2110, %v2572, 0
        %v2578 = vsel %vm2110, %v2573, 0
        %2580 = vmatpush.msra.mxu0 0.0
        %2581 = vmatpush.msra.mxu0 0.0
        %2582 = vmatpush.msra.mxu0 0.0
        %2583 = vmatpush.msra.mxu0 0.0
        %2584 = vmatpush.msra.mxu0 0.0
        %2585 = vmatpush.msra.mxu0 0.0
        %2586 = vmatpush.msra.mxu0 0.0
        %2587 = vmatpush.msra.mxu0 0.0
        %2588 = vmatpush.msra.mxu0 0.0
        %2589 = vmatpush.msra.mxu0 0.0
        %2590 = vmatpush.msra.mxu0 0.0
        %2591 = vmatpush.msra.mxu0 %v2575
        %2592 = vmatpush.msra.mxu0 %v2570
        %2593 = vmatpush.msra.mxu0 %v2568
        %2594 = vmatpush.msra.mxu0 %v2566
        %2595 = vmatpush.msra.mxu0 %v2564
        %2596 = vmatmul.f32.gmra.mxu0 %v2087
        %v2597 = vpop.f32.mrf.mxu0
        %v2598 = vadd.f32 0.0, %v2597
        %2599 = vmatmul.f32.gmra.mxu0 %v2090
        %v2600 = vpop.f32.mrf.mxu0
        %v2601 = vadd.f32 0.0, %v2600
        %2602 = vmatmul.f32.gmra.mxu0 %v2093
        %v2603 = vpop.f32.mrf.mxu0
        %v2604 = vadd.f32 0.0, %v2603
        %2605 = vmatmul.f32.gmra.mxu0 %v2096
        %v2606 = vpop.f32.mrf.mxu0
        %v2607 = vadd.f32 0.0, %v2606
        %2608 = vmatmul.f32.gmra.mxu0 %v2099
        %v2609 = vpop.f32.mrf.mxu0
        %v2610 = vadd.f32 0.0, %v2609
        %2611 = vmatmul.f32.gmra.mxu0 %v2102
        %v2612 = vpop.f32.mrf.mxu0
        %v2613 = vadd.f32 0.0, %v2612
        %2614 = vmatmul.f32.gmra.mxu0 %v2105
        %v2615 = vpop.f32.mrf.mxu0
        %v2616 = vadd.f32 0.0, %v2615
        %2617 = vmatmul.f32.gmra.mxu0 %v2108
        %v2618 = vpop.f32.mrf.mxu0
        %v2619 = vadd.f32 0.0, %v2618
        %2620 = vdwg.mxu0
        %2621 = vmatpush.msra.mxu0 0.0
        %2622 = vmatpush.msra.mxu0 0.0
        %2623 = vmatpush.msra.mxu0 0.0
        %2624 = vmatpush.msra.mxu0 0.0
        %2625 = vmatpush.msra.mxu0 0.0
        %2626 = vmatpush.msra.mxu0 0.0
        %2627 = vmatpush.msra.mxu0 0.0
        %2628 = vmatpush.msra.mxu0 0.0
        %2629 = vmatpush.msra.mxu0 0.0
        %2630 = vmatpush.msra.mxu0 0.0
        %2631 = vmatpush.msra.mxu0 0.0
        %2632 = vmatpush.msra.mxu0 %v2578
        %2633 = vmatpush.msra.mxu0 %v2571
        %2634 = vmatpush.msra.mxu0 %v2569
        %2635 = vmatpush.msra.mxu0 %v2567
        %2636 = vmatpush.msra.mxu0 %v2565
        %2637 = vmatmul.f32.gmra.mxu0 %v2087
        %v2638 = vpop.f32.mrf.mxu0
        %v2639 = vadd.f32 0.0, %v2638
        %2640 = vmatmul.f32.gmra.mxu0 %v2090
        %v2641 = vpop.f32.mrf.mxu0
        %v2642 = vadd.f32 0.0, %v2641
        %2643 = vmatmul.f32.gmra.mxu0 %v2093
        %v2644 = vpop.f32.mrf.mxu0
        %v2645 = vadd.f32 0.0, %v2644
        %2646 = vmatmul.f32.gmra.mxu0 %v2096
        %v2647 = vpop.f32.mrf.mxu0
        %v2648 = vadd.f32 0.0, %v2647
        %2649 = vmatmul.f32.gmra.mxu0 %v2099
        %v2650 = vpop.f32.mrf.mxu0
        %v2651 = vadd.f32 0.0, %v2650
        %2652 = vmatmul.f32.gmra.mxu0 %v2102
        %v2653 = vpop.f32.mrf.mxu0
        %v2654 = vadd.f32 0.0, %v2653
        %2655 = vmatmul.f32.gmra.mxu0 %v2105
        %v2656 = vpop.f32.mrf.mxu0
        %v2657 = vadd.f32 0.0, %v2656
        %2658 = vmatmul.f32.gmra.mxu0 %v2108
        %v2659 = vpop.f32.mrf.mxu0
        %v2660 = vadd.f32 0.0, %v2659
        %2661 = vdwg.mxu0
        %s2662 = scalar_lea.vmem %s181, 512 [#allocation7]
        %2663 = vst [vmem:[%s2662] sm:$0xff] %v2598
        %2664 = vst [vmem:[%s2662 + $0x8] sm:$0xff] %v2639
        %2665 = vst [vmem:[%s2662 + $0x10] sm:$0xff] %v2601
        %2666 = vst [vmem:[%s2662 + $0x18] sm:$0xff] %v2642
        %2667 = vst [vmem:[%s2662 + $0x20] sm:$0xff] %v2604
        %2668 = vst [vmem:[%s2662 + $0x28] sm:$0xff] %v2645
        %2669 = vst [vmem:[%s2662 + $0x30] sm:$0xff] %v2607
        %2670 = vst [vmem:[%s2662 + $0x38] sm:$0xff] %v2648
        %2671 = vst [vmem:[%s2662 + $0x40] sm:$0xff] %v2610
        %2672 = vst [vmem:[%s2662 + $0x48] sm:$0xff] %v2651
        %2673 = vst [vmem:[%s2662 + $0x50] sm:$0xff] %v2613
        %2674 = vst [vmem:[%s2662 + $0x58] sm:$0xff] %v2654
        %2675 = vst [vmem:[%s2662 + $0x60] sm:$0xff] %v2616
        %2676 = vst [vmem:[%s2662 + $0x68] sm:$0xff] %v2657
        %2677 = vst [vmem:[%s2662 + $0x70] sm:$0xff] %v2619
        %2678 = vst [vmem:[%s2662 + $0x78] sm:$0xff] %v2660
        %s2679 = scalar_lea.vmem [#allocation3], 400
        %v2680 = vld [vmem:[%s2679] sm:$0xff]
        %v2681 = vld [vmem:[%s2679 + $0x8] sm:$0xff]
        %v2682 = vld [vmem:[%s2679 + $0x10] sm:$0xff]
        %v2683 = vld [vmem:[%s2679 + $0x18] sm:$0xff]
        %v2684 = vld [vmem:[%s2679 + $0x20] sm:$0xff]
        %v2685 = vld [vmem:[%s2679 + $0x28] sm:$0xff]
        %v2686 = vld [vmem:[%s2679 + $0x30] sm:$0xff]
        %v2687 = vld [vmem:[%s2679 + $0x38] sm:$0xff]
        %v2688 = vld [vmem:[%s2679 + $0x40] sm:$0xf]
        %v2689 = vld [vmem:[%s2679 + $0x48] sm:$0xf]
        %v2691 = vsel %vm2110, %v2688, 0
        %v2694 = vsel %vm2110, %v2689, 0
        %2696 = vmatpush.msra.mxu0 0.0
        %2697 = vmatpush.msra.mxu0 0.0
        %2698 = vmatpush.msra.mxu0 0.0
        %2699 = vmatpush.msra.mxu0 0.0
        %2700 = vmatpush.msra.mxu0 0.0
        %2701 = vmatpush.msra.mxu0 0.0
        %2702 = vmatpush.msra.mxu0 0.0
        %2703 = vmatpush.msra.mxu0 0.0
        %2704 = vmatpush.msra.mxu0 0.0
        %2705 = vmatpush.msra.mxu0 0.0
        %2706 = vmatpush.msra.mxu0 0.0
        %2707 = vmatpush.msra.mxu0 %v2691
        %2708 = vmatpush.msra.mxu0 %v2686
        %2709 = vmatpush.msra.mxu0 %v2684
        %2710 = vmatpush.msra.mxu0 %v2682
        %2711 = vmatpush.msra.mxu0 %v2680
        %2712 = vmatmul.f32.gmra.mxu0 %v2087
        %v2713 = vpop.f32.mrf.mxu0
        %v2714 = vadd.f32 0.0, %v2713
        %2715 = vmatmul.f32.gmra.mxu0 %v2090
        %v2716 = vpop.f32.mrf.mxu0
        %v2717 = vadd.f32 0.0, %v2716
        %2718 = vmatmul.f32.gmra.mxu0 %v2093
        %v2719 = vpop.f32.mrf.mxu0
        %v2720 = vadd.f32 0.0, %v2719
        %2721 = vmatmul.f32.gmra.mxu0 %v2096
        %v2722 = vpop.f32.mrf.mxu0
        %v2723 = vadd.f32 0.0, %v2722
        %2724 = vmatmul.f32.gmra.mxu0 %v2099
        %v2725 = vpop.f32.mrf.mxu0
        %v2726 = vadd.f32 0.0, %v2725
        %2727 = vmatmul.f32.gmra.mxu0 %v2102
        %v2728 = vpop.f32.mrf.mxu0
        %v2729 = vadd.f32 0.0, %v2728
        %2730 = vmatmul.f32.gmra.mxu0 %v2105
        %v2731 = vpop.f32.mrf.mxu0
        %v2732 = vadd.f32 0.0, %v2731
        %2733 = vmatmul.f32.gmra.mxu0 %v2108
        %v2734 = vpop.f32.mrf.mxu0
        %v2735 = vadd.f32 0.0, %v2734
        %2736 = vdwg.mxu0
        %2737 = vmatpush.msra.mxu0 0.0
        %2738 = vmatpush.msra.mxu0 0.0
        %2739 = vmatpush.msra.mxu0 0.0
        %2740 = vmatpush.msra.mxu0 0.0
        %2741 = vmatpush.msra.mxu0 0.0
        %2742 = vmatpush.msra.mxu0 0.0
        %2743 = vmatpush.msra.mxu0 0.0
        %2744 = vmatpush.msra.mxu0 0.0
        %2745 = vmatpush.msra.mxu0 0.0
        %2746 = vmatpush.msra.mxu0 0.0
        %2747 = vmatpush.msra.mxu0 0.0
        %2748 = vmatpush.msra.mxu0 %v2694
        %2749 = vmatpush.msra.mxu0 %v2687
        %2750 = vmatpush.msra.mxu0 %v2685
        %2751 = vmatpush.msra.mxu0 %v2683
        %2752 = vmatpush.msra.mxu0 %v2681
        %2753 = vmatmul.f32.gmra.mxu0 %v2087
        %v2754 = vpop.f32.mrf.mxu0
        %v2755 = vadd.f32 0.0, %v2754
        %2756 = vmatmul.f32.gmra.mxu0 %v2090
        %v2757 = vpop.f32.mrf.mxu0
        %v2758 = vadd.f32 0.0, %v2757
        %2759 = vmatmul.f32.gmra.mxu0 %v2093
        %v2760 = vpop.f32.mrf.mxu0
        %v2761 = vadd.f32 0.0, %v2760
        %2762 = vmatmul.f32.gmra.mxu0 %v2096
        %v2763 = vpop.f32.mrf.mxu0
        %v2764 = vadd.f32 0.0, %v2763
        %2765 = vmatmul.f32.gmra.mxu0 %v2099
        %v2766 = vpop.f32.mrf.mxu0
        %v2767 = vadd.f32 0.0, %v2766
        %2768 = vmatmul.f32.gmra.mxu0 %v2102
        %v2769 = vpop.f32.mrf.mxu0
        %v2770 = vadd.f32 0.0, %v2769
        %2771 = vmatmul.f32.gmra.mxu0 %v2105
        %v2772 = vpop.f32.mrf.mxu0
        %v2773 = vadd.f32 0.0, %v2772
        %2774 = vmatmul.f32.gmra.mxu0 %v2108
        %v2775 = vpop.f32.mrf.mxu0
        %v2776 = vadd.f32 0.0, %v2775
        %2777 = vdwg.mxu0
        %s2778 = scalar_lea.vmem %s181, 640 [#allocation7]
        %2779 = vst [vmem:[%s2778] sm:$0xff] %v2714
        %2780 = vst [vmem:[%s2778 + $0x8] sm:$0xff] %v2755
        %2781 = vst [vmem:[%s2778 + $0x10] sm:$0xff] %v2717
        %2782 = vst [vmem:[%s2778 + $0x18] sm:$0xff] %v2758
        %2783 = vst [vmem:[%s2778 + $0x20] sm:$0xff] %v2720
        %2784 = vst [vmem:[%s2778 + $0x28] sm:$0xff] %v2761
        %2785 = vst [vmem:[%s2778 + $0x30] sm:$0xff] %v2723
        %2786 = vst [vmem:[%s2778 + $0x38] sm:$0xff] %v2764
        %2787 = vst [vmem:[%s2778 + $0x40] sm:$0xff] %v2726
        %2788 = vst [vmem:[%s2778 + $0x48] sm:$0xff] %v2767
        %2789 = vst [vmem:[%s2778 + $0x50] sm:$0xff] %v2729
        %2790 = vst [vmem:[%s2778 + $0x58] sm:$0xff] %v2770
        %2791 = vst [vmem:[%s2778 + $0x60] sm:$0xff] %v2732
        %2792 = vst [vmem:[%s2778 + $0x68] sm:$0xff] %v2773
        %2793 = vst [vmem:[%s2778 + $0x70] sm:$0xff] %v2735
        %2794 = vst [vmem:[%s2778 + $0x78] sm:$0xff] %v2776
        %s2795 = scalar_lea.vmem [#allocation3], 480
        %v2796 = vld [vmem:[%s2795] sm:$0xff]
        %v2797 = vld [vmem:[%s2795 + $0x8] sm:$0xff]
        %v2798 = vld [vmem:[%s2795 + $0x10] sm:$0xff]
        %v2799 = vld [vmem:[%s2795 + $0x18] sm:$0xff]
        %v2800 = vld [vmem:[%s2795 + $0x20] sm:$0xff]
        %v2801 = vld [vmem:[%s2795 + $0x28] sm:$0xff]
        %v2802 = vld [vmem:[%s2795 + $0x30] sm:$0xff]
        %v2803 = vld [vmem:[%s2795 + $0x38] sm:$0xff]
        %v2804 = vld [vmem:[%s2795 + $0x40] sm:$0xf]
        %v2805 = vld [vmem:[%s2795 + $0x48] sm:$0xf]
        %v2807 = vsel %vm2110, %v2804, 0
        %v2810 = vsel %vm2110, %v2805, 0
        %2812 = vmatpush.msra.mxu0 0.0
        %2813 = vmatpush.msra.mxu0 0.0
        %2814 = vmatpush.msra.mxu0 0.0
        %2815 = vmatpush.msra.mxu0 0.0
        %2816 = vmatpush.msra.mxu0 0.0
        %2817 = vmatpush.msra.mxu0 0.0
        %2818 = vmatpush.msra.mxu0 0.0
        %2819 = vmatpush.msra.mxu0 0.0
        %2820 = vmatpush.msra.mxu0 0.0
        %2821 = vmatpush.msra.mxu0 0.0
        %2822 = vmatpush.msra.mxu0 0.0
        %2823 = vmatpush.msra.mxu0 %v2807
        %2824 = vmatpush.msra.mxu0 %v2802
        %2825 = vmatpush.msra.mxu0 %v2800
        %2826 = vmatpush.msra.mxu0 %v2798
        %2827 = vmatpush.msra.mxu0 %v2796
        %2828 = vmatmul.f32.gmra.mxu0 %v2087
        %v2829 = vpop.f32.mrf.mxu0
        %v2830 = vadd.f32 0.0, %v2829
        %2831 = vmatmul.f32.gmra.mxu0 %v2090
        %v2832 = vpop.f32.mrf.mxu0
        %v2833 = vadd.f32 0.0, %v2832
        %2834 = vmatmul.f32.gmra.mxu0 %v2093
        %v2835 = vpop.f32.mrf.mxu0
        %v2836 = vadd.f32 0.0, %v2835
        %2837 = vmatmul.f32.gmra.mxu0 %v2096
        %v2838 = vpop.f32.mrf.mxu0
        %v2839 = vadd.f32 0.0, %v2838
        %2840 = vmatmul.f32.gmra.mxu0 %v2099
        %v2841 = vpop.f32.mrf.mxu0
        %v2842 = vadd.f32 0.0, %v2841
        %2843 = vmatmul.f32.gmra.mxu0 %v2102
        %v2844 = vpop.f32.mrf.mxu0
        %v2845 = vadd.f32 0.0, %v2844
        %2846 = vmatmul.f32.gmra.mxu0 %v2105
        %v2847 = vpop.f32.mrf.mxu0
        %v2848 = vadd.f32 0.0, %v2847
        %2849 = vmatmul.f32.gmra.mxu0 %v2108
        %v2850 = vpop.f32.mrf.mxu0
        %v2851 = vadd.f32 0.0, %v2850
        %2852 = vdwg.mxu0
        %2853 = vmatpush.msra.mxu0 0.0
        %2854 = vmatpush.msra.mxu0 0.0
        %2855 = vmatpush.msra.mxu0 0.0
        %2856 = vmatpush.msra.mxu0 0.0
        %2857 = vmatpush.msra.mxu0 0.0
        %2858 = vmatpush.msra.mxu0 0.0
        %2859 = vmatpush.msra.mxu0 0.0
        %2860 = vmatpush.msra.mxu0 0.0
        %2861 = vmatpush.msra.mxu0 0.0
        %2862 = vmatpush.msra.mxu0 0.0
        %2863 = vmatpush.msra.mxu0 0.0
        %2864 = vmatpush.msra.mxu0 %v2810
        %2865 = vmatpush.msra.mxu0 %v2803
        %2866 = vmatpush.msra.mxu0 %v2801
        %2867 = vmatpush.msra.mxu0 %v2799
        %2868 = vmatpush.msra.mxu0 %v2797
        %2869 = vmatmul.f32.gmra.mxu0 %v2087
        %v2870 = vpop.f32.mrf.mxu0
        %v2871 = vadd.f32 0.0, %v2870
        %2872 = vmatmul.f32.gmra.mxu0 %v2090
        %v2873 = vpop.f32.mrf.mxu0
        %v2874 = vadd.f32 0.0, %v2873
        %2875 = vmatmul.f32.gmra.mxu0 %v2093
        %v2876 = vpop.f32.mrf.mxu0
        %v2877 = vadd.f32 0.0, %v2876
        %2878 = vmatmul.f32.gmra.mxu0 %v2096
        %v2879 = vpop.f32.mrf.mxu0
        %v2880 = vadd.f32 0.0, %v2879
        %2881 = vmatmul.f32.gmra.mxu0 %v2099
        %v2882 = vpop.f32.mrf.mxu0
        %v2883 = vadd.f32 0.0, %v2882
        %2884 = vmatmul.f32.gmra.mxu0 %v2102
        %v2885 = vpop.f32.mrf.mxu0
        %v2886 = vadd.f32 0.0, %v2885
        %2887 = vmatmul.f32.gmra.mxu0 %v2105
        %v2888 = vpop.f32.mrf.mxu0
        %v2889 = vadd.f32 0.0, %v2888
        %2890 = vmatmul.f32.gmra.mxu0 %v2108
        %v2891 = vpop.f32.mrf.mxu0
        %v2892 = vadd.f32 0.0, %v2891
        %2893 = vdwg.mxu0
        %s2894 = scalar_lea.vmem %s181, 768 [#allocation7]
        %2895 = vst [vmem:[%s2894] sm:$0xff] %v2830
        %2896 = vst [vmem:[%s2894 + $0x8] sm:$0xff] %v2871
        %2897 = vst [vmem:[%s2894 + $0x10] sm:$0xff] %v2833
        %2898 = vst [vmem:[%s2894 + $0x18] sm:$0xff] %v2874
        %2899 = vst [vmem:[%s2894 + $0x20] sm:$0xff] %v2836
        %2900 = vst [vmem:[%s2894 + $0x28] sm:$0xff] %v2877
        %2901 = vst [vmem:[%s2894 + $0x30] sm:$0xff] %v2839
        %2902 = vst [vmem:[%s2894 + $0x38] sm:$0xff] %v2880
        %2903 = vst [vmem:[%s2894 + $0x40] sm:$0xff] %v2842
        %2904 = vst [vmem:[%s2894 + $0x48] sm:$0xff] %v2883
        %2905 = vst [vmem:[%s2894 + $0x50] sm:$0xff] %v2845
        %2906 = vst [vmem:[%s2894 + $0x58] sm:$0xff] %v2886
        %2907 = vst [vmem:[%s2894 + $0x60] sm:$0xff] %v2848
        %2908 = vst [vmem:[%s2894 + $0x68] sm:$0xff] %v2889
        %2909 = vst [vmem:[%s2894 + $0x70] sm:$0xff] %v2851
        %2910 = vst [vmem:[%s2894 + $0x78] sm:$0xff] %v2892
        %s2911 = scalar_lea.vmem [#allocation3], 560
        %v2912 = vld [vmem:[%s2911] sm:$0xff]
        %v2913 = vld [vmem:[%s2911 + $0x8] sm:$0xff]
        %v2914 = vld [vmem:[%s2911 + $0x10] sm:$0xff]
        %v2915 = vld [vmem:[%s2911 + $0x18] sm:$0xff]
        %v2916 = vld [vmem:[%s2911 + $0x20] sm:$0xff]
        %v2917 = vld [vmem:[%s2911 + $0x28] sm:$0xff]
        %v2918 = vld [vmem:[%s2911 + $0x30] sm:$0xff]
        %v2919 = vld [vmem:[%s2911 + $0x38] sm:$0xff]
        %v2920 = vld [vmem:[%s2911 + $0x40] sm:$0xf]
        %v2921 = vld [vmem:[%s2911 + $0x48] sm:$0xf]
        %v2923 = vsel %vm2110, %v2920, 0
        %v2926 = vsel %vm2110, %v2921, 0
        %2928 = vmatpush.msra.mxu0 0.0
        %2929 = vmatpush.msra.mxu0 0.0
        %2930 = vmatpush.msra.mxu0 0.0
        %2931 = vmatpush.msra.mxu0 0.0
        %2932 = vmatpush.msra.mxu0 0.0
        %2933 = vmatpush.msra.mxu0 0.0
        %2934 = vmatpush.msra.mxu0 0.0
        %2935 = vmatpush.msra.mxu0 0.0
        %2936 = vmatpush.msra.mxu0 0.0
        %2937 = vmatpush.msra.mxu0 0.0
        %2938 = vmatpush.msra.mxu0 0.0
        %2939 = vmatpush.msra.mxu0 %v2923
        %2940 = vmatpush.msra.mxu0 %v2918
        %2941 = vmatpush.msra.mxu0 %v2916
        %2942 = vmatpush.msra.mxu0 %v2914
        %2943 = vmatpush.msra.mxu0 %v2912
        %2944 = vmatmul.f32.gmra.mxu0 %v2087
        %v2945 = vpop.f32.mrf.mxu0
        %v2946 = vadd.f32 0.0, %v2945
        %2947 = vmatmul.f32.gmra.mxu0 %v2090
        %v2948 = vpop.f32.mrf.mxu0
        %v2949 = vadd.f32 0.0, %v2948
        %2950 = vmatmul.f32.gmra.mxu0 %v2093
        %v2951 = vpop.f32.mrf.mxu0
        %v2952 = vadd.f32 0.0, %v2951
        %2953 = vmatmul.f32.gmra.mxu0 %v2096
        %v2954 = vpop.f32.mrf.mxu0
        %v2955 = vadd.f32 0.0, %v2954
        %2956 = vmatmul.f32.gmra.mxu0 %v2099
        %v2957 = vpop.f32.mrf.mxu0
        %v2958 = vadd.f32 0.0, %v2957
        %2959 = vmatmul.f32.gmra.mxu0 %v2102
        %v2960 = vpop.f32.mrf.mxu0
        %v2961 = vadd.f32 0.0, %v2960
        %2962 = vmatmul.f32.gmra.mxu0 %v2105
        %v2963 = vpop.f32.mrf.mxu0
        %v2964 = vadd.f32 0.0, %v2963
        %2965 = vmatmul.f32.gmra.mxu0 %v2108
        %v2966 = vpop.f32.mrf.mxu0
        %v2967 = vadd.f32 0.0, %v2966
        %2968 = vdwg.mxu0
        %2969 = vmatpush.msra.mxu0 0.0
        %2970 = vmatpush.msra.mxu0 0.0
        %2971 = vmatpush.msra.mxu0 0.0
        %2972 = vmatpush.msra.mxu0 0.0
        %2973 = vmatpush.msra.mxu0 0.0
        %2974 = vmatpush.msra.mxu0 0.0
        %2975 = vmatpush.msra.mxu0 0.0
        %2976 = vmatpush.msra.mxu0 0.0
        %2977 = vmatpush.msra.mxu0 0.0
        %2978 = vmatpush.msra.mxu0 0.0
        %2979 = vmatpush.msra.mxu0 0.0
        %2980 = vmatpush.msra.mxu0 %v2926
        %2981 = vmatpush.msra.mxu0 %v2919
        %2982 = vmatpush.msra.mxu0 %v2917
        %2983 = vmatpush.msra.mxu0 %v2915
        %2984 = vmatpush.msra.mxu0 %v2913
        %2985 = vmatmul.f32.gmra.mxu0 %v2087
        %v2986 = vpop.f32.mrf.mxu0
        %v2987 = vadd.f32 0.0, %v2986
        %2988 = vmatmul.f32.gmra.mxu0 %v2090
        %v2989 = vpop.f32.mrf.mxu0
        %v2990 = vadd.f32 0.0, %v2989
        %2991 = vmatmul.f32.gmra.mxu0 %v2093
        %v2992 = vpop.f32.mrf.mxu0
        %v2993 = vadd.f32 0.0, %v2992
        %2994 = vmatmul.f32.gmra.mxu0 %v2096
        %v2995 = vpop.f32.mrf.mxu0
        %v2996 = vadd.f32 0.0, %v2995
        %2997 = vmatmul.f32.gmra.mxu0 %v2099
        %v2998 = vpop.f32.mrf.mxu0
        %v2999 = vadd.f32 0.0, %v2998
        %3000 = vmatmul.f32.gmra.mxu0 %v2102
        %v3001 = vpop.f32.mrf.mxu0
        %v3002 = vadd.f32 0.0, %v3001
        %3003 = vmatmul.f32.gmra.mxu0 %v2105
        %v3004 = vpop.f32.mrf.mxu0
        %v3005 = vadd.f32 0.0, %v3004
        %3006 = vmatmul.f32.gmra.mxu0 %v2108
        %v3007 = vpop.f32.mrf.mxu0
        %v3008 = vadd.f32 0.0, %v3007
        %3009 = vdwg.mxu0
        %s3010 = scalar_lea.vmem %s181, 896 [#allocation7]
        %3011 = vst [vmem:[%s3010] sm:$0xff] %v2946
        %3012 = vst [vmem:[%s3010 + $0x8] sm:$0xff] %v2987
        %3013 = vst [vmem:[%s3010 + $0x10] sm:$0xff] %v2949
        %3014 = vst [vmem:[%s3010 + $0x18] sm:$0xff] %v2990
        %3015 = vst [vmem:[%s3010 + $0x20] sm:$0xff] %v2952
        %3016 = vst [vmem:[%s3010 + $0x28] sm:$0xff] %v2993
        %3017 = vst [vmem:[%s3010 + $0x30] sm:$0xff] %v2955
        %3018 = vst [vmem:[%s3010 + $0x38] sm:$0xff] %v2996
        %3019 = vst [vmem:[%s3010 + $0x40] sm:$0xff] %v2958
        %3020 = vst [vmem:[%s3010 + $0x48] sm:$0xff] %v2999
        %3021 = vst [vmem:[%s3010 + $0x50] sm:$0xff] %v2961
        %3022 = vst [vmem:[%s3010 + $0x58] sm:$0xff] %v3002
        %3023 = vst [vmem:[%s3010 + $0x60] sm:$0xff] %v2964
        %3024 = vst [vmem:[%s3010 + $0x68] sm:$0xff] %v3005
        %3025 = vst [vmem:[%s3010 + $0x70] sm:$0xff] %v2967
        %3026 = vst [vmem:[%s3010 + $0x78] sm:$0xff] %v3008
        %s3027 = sand.u32 %s90, 1
        %s3028 = scalar_lea.sflag [#allocation6], %s3027
        %s3029 = sand.u32 %s90, 1
        %s3030 = smul.addr %s3029, 1024
        %s3031 = scalar_lea.vmem [#allocation7], %s3030
        // Predicated region
        $region33: #{tpu_custom_call.1} parent=27 // pred_check
          %p3032 = pneg %p100
        $region34: #{tpu_custom_call.1} parent=27 // pred_check_branch
          %3034 = sbr.rel (%p3032) target = $region36
        $region35: #{tpu_custom_call.1} parent=27 // pred_region
          %s3035 = smul.u32 8, %s24
          %3037 = vsyncadd %s3028, 0
          %s3038 = smul.addr %s3035, 16
          %s3039 = smul.addr %s23, 128
          %s3040 = sadd.s32 %s3038, %s3039
          %s3041 = smul.addr %s3040, 8
          %s3042 = scalar_lea.hbm %s2, %s3041
          %s3043 = sshll.u32 %s3031, 4
          %s3044 = int_to_ptr.vmem [resolvable:$true] %s3043
          %s3045 = sshll.u32 %s3042, 4
          %s3046 = int_to_ptr.hbm [resolvable:$true] %s3045
          %3051 = dma.vmem_to_hbm [thread:$0]  %s3044, 16384, %s3046, %s3028, 256, 256, 16
        $region36: #{tpu_custom_call.1} parent=27 // pred_fallthru
          _
      $region28: #{tpu_custom_call.1} parent=5 // pred_fallthru
        _
      %p3052 = scmp.le.s32.totalorder 2, %s14
      // Predicated region
      $region37: #{tpu_custom_call.1} parent=5 // pred_check
        %p3053 = pneg %p3052
      $region38: #{tpu_custom_call.1} parent=5 // pred_check_branch
        %3055 = sbr.rel (%p3053) target = $region40
      $region39: #{tpu_custom_call.1} parent=5 // pred_region
        %s3056 = ssub.s32 %s14, 2
        // Predicated region
        $region41: #{tpu_custom_call.1} parent=39 // pred_check
          %p3057 = pneg %p106
        $region42: #{tpu_custom_call.1} parent=39 // pred_check_branch
          %3059 = sbr.rel (%p3057) target = $region44
        $region43: #{tpu_custom_call.1} parent=39 // pred_region
          %s3060 = sand.u32 %s91, 1
          %s3061 = scalar_lea.sflag [#allocation6], %s3060
          %s3062 = sand.u32 %s91, 1
          %s3063 = smul.addr %s3062, 1024
          %s3064 = scalar_lea.vmem [#allocation7], %s3063
          %3066 = dma.done %s3061, 16384
        $region44: #{tpu_custom_call.1} parent=39 // pred_fallthru
          _
      $region40: #{tpu_custom_call.1} parent=5 // pred_fallthru
        _
    $region6: #{tpu_custom_call.1} parent=1 // loop_footer
      %s18 = sadd.s32 1, %s14
    $region7: #{tpu_custom_call.1} parent=1 // loop_footer_branch
      %13 = sbr.rel target = $region3
    $region8: #{tpu_custom_call.1} parent=1 // loop_exit
      _
    %3067 = vsyncpa [#allocation5], 1
    %s3068 = scalar_lea.sflag [#allocation5], 1
    %3069 = vsyncpa %s3068, 1
    %3070 = vsyncpa [#allocation6], 1
    %s3071 = scalar_lea.sflag [#allocation6], 1
    %3072 = vsyncpa %s3071, 1

</llo_original>
